<compile_context>
chip_gen: v6e
topology: v6e:2x2x1
jax: 0.10.0
libtpu: 0.0.40
codegen_flags: <defaults>
</compile_context>

<pallas_src>
import functools
import math

import jax
import jax.numpy as jnp
from jax import lax
from jax.experimental import pallas as pl
from jax.experimental.pallas import tpu as pltpu


def _pick_kv_block(seq_len):
    """Largest convenient KV chunk that divides S (flash-style tiling)."""
    if seq_len <= 512:
        return seq_len
    for blk in (512, 256, 128):
        if seq_len % blk == 0:
            return blk
    return seq_len  # TODO(synk): pad/mask ragged sequence lengths.


# ----------------------------------------------------------------------------
# Pallas kernel: per-batch fused QKV -> RoPE -> flash attention -> projection
# ----------------------------------------------------------------------------
def _attn_kernel(x_ref, wqkv_ref, bqkv_ref, wproj_ref, bproj_ref,
                 cos_ref, sin_ref, o_ref, *,
                 n_heads, head_dim, hidden_dim, kv_block):
    H = hidden_dim
    dh = head_dim
    dh2 = dh // 2
    S = x_ref.shape[0]
    n_kv = S // kv_block

    # Fused QKV projection: bf16 operands on the MXU, f32 accumulation.
    # (The 1/sqrt(Dh) softmax scale is pre-folded into the Q columns/bias.)
    qkv = jnp.dot(x_ref[...], wqkv_ref[...],
                  preferred_element_type=jnp.float32) + bqkv_ref[...]      # (S, 3H) f32

    cos = cos_ref[...]                                                     # (S, Dh/2) f32
    sin = sin_ref[...]
    dn = (((1,), (1,)), ((), ()))        # contract last dims (no transpose/XLU)

    head_outs = []
    # Static head loop: n_heads is small, so this ~= lax.fori_loop(unroll=True).
    # TODO(synk): for large n_heads move heads onto a fori_loop / grid axis to
    # bound live ranges and code size.
    for h in range(n_heads):
        q_h = qkv[:, h * dh:(h + 1) * dh]          # per-head [even|odd] layout
        k_h = qkv[:, H + h * dh:H + (h + 1) * dh]
        v_h = qkv[:, 2 * H + h * dh:2 * H + (h + 1) * dh].astype(jnp.bfloat16)

        # Per-head RoPE in f32 (cheap VPU work, hides under the MXU). Because
        # the head columns are [even|odd], the rotated head comes out in its
        # natural [first-half | second-half] order -> one K=Dh contraction.
        qe, qo = q_h[:, :dh2], q_h[:, dh2:]
        ke, ko = k_h[:, :dh2], k_h[:, dh2:]
        q_rot = jnp.concatenate([qe * cos - qo * sin, qe * sin + qo * cos],
                                axis=-1).astype(jnp.bfloat16)              # (S, Dh)
        k_rot = jnp.concatenate([ke * cos - ko * sin, ke * sin + ko * cos],
                                axis=-1).astype(jnp.bfloat16)

        # Flash-style online softmax over KV row chunks: the (S, S) scores /
        # probabilities never fully materialize, only (S, kv_block) tiles.
        m_i = jnp.full((S, 1), -jnp.inf, dtype=jnp.float32)
        l_i = jnp.zeros((S, 1), dtype=jnp.float32)
        acc = jnp.zeros((S, dh), dtype=jnp.float32)
        for c in range(n_kv):
            rows = slice(c * kv_block, (c + 1) * kv_block)
            s = lax.dot_general(q_rot, k_rot[rows], dn,
                                preferred_element_type=jnp.float32)        # (S, kv_blk)
            m_new = jnp.maximum(m_i, jnp.max(s, axis=-1, keepdims=True))
            alpha = jnp.exp(m_i - m_new)
            p = jnp.exp(s - m_new)           # f32 softmax math
            # TODO(synk): on v6e/v7x, bf16 exp relieves the EUP if it saturates.
            l_i = alpha * l_i + jnp.sum(p, axis=-1, keepdims=True)
            acc = alpha * acc + jnp.dot(p.astype(jnp.bfloat16), v_h[rows],
                                        preferred_element_type=jnp.float32)
            m_i = m_new

        # Deferred normalization via the EUP reciprocal (free slot).
        head_outs.append(acc * pl.reciprocal(l_i, approx=True))            # (S, Dh) f32

    # Lane-dense deposit: one concat (no masked per-head column stores), then a
    # single K=H output-projection matmul with bf16 operands.
    attn = jnp.concatenate(head_outs, axis=-1).astype(jnp.bfloat16)        # (S, H)
    out = jnp.dot(attn, wproj_ref[...],
                  preferred_element_type=jnp.float32) + bproj_ref[...]
    o_ref[...] = out.astype(o_ref.dtype)


# ----------------------------------------------------------------------------
# Wrapper
# ----------------------------------------------------------------------------
def attention_forward(x, pos_emb, w_qkv, b_qkv, w_proj, b_proj, n_heads):
    """x: (B, S, H), pos_emb: (S, 1, Dh). Weights in (in, out) layout."""
    B, S, H = x.shape
    assert H % n_heads == 0
    dh = H // n_heads
    assert dh % 2 == 0
    dh2 = dh // 2

    # --- one-time parameter glue (outside the kernel) -----------------------
    # Per-head [even | odd] column permutation for Q and K: after RoPE each
    # rotated head is contiguous -> single K=Dh score contraction in-kernel.
    head_base = jnp.arange(n_heads)[:, None] * dh
    even_idx = head_base + jnp.arange(0, dh, 2)[None, :]                   # (h, Dh/2)
    odd_idx = head_base + jnp.arange(1, dh, 2)[None, :]
    qk_perm = jnp.concatenate([even_idx, odd_idx], axis=1).reshape(-1)     # (H,)
    full_perm = jnp.concatenate([qk_perm, H + qk_perm, 2 * H + jnp.arange(H)])

    # Fold the 1/sqrt(Dh) attention scale into the Q weight/bias columns.
    scale = 1.0 / math.sqrt(dh)
    q_scale = jnp.concatenate([jnp.full((H,), scale, dtype=jnp.float32),
                               jnp.ones((2 * H,), dtype=jnp.float32)])

    # bf16 MXU operands (halves weight VMEM/HBM traffic); biases stay f32.
    w_qkv_p = (w_qkv[:, full_perm] * q_scale[None, :]).astype(jnp.bfloat16)
    b_qkv_p = (b_qkv[full_perm] * q_scale)[None, :].astype(jnp.float32)    # (1, 3H)
    w_proj_b = w_proj.astype(jnp.bfloat16)
    b_proj_2d = b_proj[None, :].astype(jnp.float32)                        # (1, H)

    # cos/sin passed at head width (S, Dh/2) — no n_heads-fold tiling in VMEM.
    cos = pos_emb[:, 0, :dh2].astype(jnp.float32)
    sin = pos_emb[:, 0, dh2:].astype(jnp.float32)

    x_bf = x.astype(jnp.bfloat16)
    kv_block = _pick_kv_block(S)

    kernel = functools.partial(_attn_kernel, n_heads=n_heads, head_dim=dh,
                               hidden_dim=H, kv_block=kv_block)

    # --- generation-aware VMEM budget ---------------------------------------
    try:
        vmem_cap = pltpu.get_tpu_info().vmem_capacity_bytes
    except Exception:
        vmem_cap = 64 * 1024 * 1024          # conservative (v7x-sized) fallback
    vmem_clamp = int(vmem_cap * 0.85)        # leave Mosaic internal-scratch headroom

    def run(single_buffer_params):
        def const_spec(shape):
            idx = lambda b, _s=shape: (0,) * len(_s)
            if single_buffer_params:
                # Grid-invariant operands never need double buffering.
                return pl.BlockSpec(shape, idx, pipeline_mode=pl.Buffered(1))
            return pl.BlockSpec(shape, idx)

        param_mult = 1 if single_buffer_params else 2
        param_bytes = ((H * 3 * H + H * H) * 2 + (3 * H + H) * 4
                       + 2 * S * dh2 * 4) * param_mult
        block_bytes = 2 * (S * H * 2 + S * H * 4)          # dbl-buffered x/out blocks
        live_bytes = (S * 3 * H * 4                         # qkv (f32)
                      + 2 * S * dh * 6                      # rotated q/k (f32+bf16)
                      + 2 * S * kv_block * 4                # score/p tile
                      + S * dh * 4                          # acc
                      + 2 * S * H * 4 + S * H * 2)          # head outs + concat + proj
        needed = param_bytes + block_bytes + live_bytes
        vmem_limit = int(min(max(2 * needed, 32 * 1024 * 1024), vmem_clamp))

        # TODO(synk): add a "parallel" query-block grid axis (keeps both v7x
        # TensorCores busy for small/odd B) and query tiling for very long S.
        return pl.pallas_call(
            kernel,
            out_shape=jax.ShapeDtypeStruct((B, S, H), x.dtype),
            grid_spec=pltpu.PrefetchScalarGridSpec(
                num_scalar_prefetch=0,
                grid=(B,),
                in_specs=[
                    pl.BlockSpec((None, S, H), lambda b: (b, 0, 0)),   # x (batch squeezed)
                    const_spec((H, 3 * H)),                            # w_qkv (perm+scaled)
                    const_spec((1, 3 * H)),                            # b_qkv
                    const_spec((H, H)),                                # w_proj
                    const_spec((1, H)),                                # b_proj
                    const_spec((S, dh2)),                              # cos
                    const_spec((S, dh2)),                              # sin
                ],
                out_specs=pl.BlockSpec((None, S, H), lambda b: (b, 0, 0)),
            ),
            compiler_params=pltpu.CompilerParams(
                dimension_semantics=("parallel",),
                vmem_limit_bytes=vmem_limit),
        )(x_bf, w_qkv_p, b_qkv_p, w_proj_b, b_proj_2d, cos, sin)

    try:
        return run(True)
    except Exception:
        # pipeline_mode=pl.Buffered(1) unsupported in this JAX build -> fall
        # back to default double buffering for the grid-invariant params.
        return run(False)


# ----------------------------------------------------------------------------
# Pure-JAX reference (mirrors the PyTorch forward exactly, incl. even/odd rope)
# ----------------------------------------------------------------------------
def _apply_rope_ref(x, pos_emb):
    xe, xo = x[..., 0::2], x[..., 1::2]
    d2 = xe.shape[-1]
    cos_e, sin_e = pos_emb[..., :d2], pos_emb[..., d2:]
    return jnp.concatenate((xe * cos_e - xo * sin_e, xe * sin_e + xo * cos_e), axis=-1)


def attention_ref(x, pos_emb, w_qkv, b_qkv, w_proj, b_proj, n_heads):
    B, S, H = x.shape
    dh = H // n_heads
    qkv = x @ w_qkv + b_qkv
    q, k, v = jnp.split(qkv, 3, axis=-1)
    q = q.reshape(B, S, n_heads, dh)
    k = k.reshape(B, S, n_heads, dh)
    v = v.reshape(B, S, n_heads, dh)
    q = _apply_rope_ref(q, pos_emb)
    k = _apply_rope_ref(k, pos_emb)
    q = q.transpose(0, 2, 1, 3)
    k = k.transpose(0, 2, 1, 3)
    v = v.transpose(0, 2, 1, 3)
    scores = jnp.einsum("bhsd,bhtd->bhst", q, k) / math.sqrt(dh)
    p = jax.nn.softmax(scores, axis=-1)
    o = jnp.einsum("bhst,bhtd->bhsd", p, v)
    o = o.transpose(0, 2, 1, 3).reshape(B, S, H)
    return o @ w_proj + b_proj


# ----------------------------------------------------------------------------
if __name__ == "__main__":
    B, S, H, N_HEADS = 2, 8, 32, 4
    DH = H // N_HEADS

    key = jax.random.PRNGKey(0)
    kx, kw1, kb1, kw2, kb2 = jax.random.split(key, 5)

    x = jax.random.normal(kx, (B, S, H), dtype=jnp.float32)

    # Deterministic parameter init (synthetic; (in, out) layout).
    w_qkv = jax.random.normal(kw1, (H, 3 * H), dtype=jnp.float32) * 0.05
    b_qkv = jax.random.normal(kb1, (3 * H,), dtype=jnp.float32) * 0.05
    w_proj = jax.random.normal(kw2, (H, H), dtype=jnp.float32) * 0.05
    b_proj = jax.random.normal(kb2, (H,), dtype=jnp.float32) * 0.05

    # Rotary position embedding: (S, 1, DH) = [cos | sin] halves.
    pos = jnp.arange(S, dtype=jnp.float32)[:, None]                        # (S, 1)
    freqs = 1.0 / (10000.0 ** (jnp.arange(DH // 2, dtype=jnp.float32) / (DH // 2)))
    ang = pos * freqs[None, :]                                             # (S, DH/2)
    pos_emb = jnp.concatenate([jnp.cos(ang), jnp.sin(ang)], axis=-1)[:, None, :]

    out = attention_forward(x, pos_emb, w_qkv, b_qkv, w_proj, b_proj, N_HEADS)
    out = jax.block_until_ready(out)

    ref = attention_ref(x, pos_emb, w_qkv, b_qkv, w_proj, b_proj, N_HEADS)
    assert out.shape == (B, S, H)
    # Tolerance accounts for bf16 MXU operands and the approximate reciprocal
    # used for the deferred softmax normalization (reference stays f32).
    # NOTE: these toy shapes are far below the (8,128) tile; they verify
    # correctness only, not performance.
    max_err = jnp.max(jnp.abs(out - ref))
    assert jnp.allclose(out, ref, atol=2e-2, rtol=2e-2), f"max abs err {max_err}"

    print("KERNEL_OK")
</pallas_src>

<mosaic_0001>
module attributes {stable_mosaic.version = 11 : i64} {
  func.func @_attn_kernel(%arg0: i32, %arg1: memref<1x8x32xbf16, #tpu.memory_space<vmem>>, %arg2: memref<32x96xbf16, #tpu.memory_space<vmem>>, %arg3: memref<1x96xf32, #tpu.memory_space<vmem>>, %arg4: memref<32x32xbf16, #tpu.memory_space<vmem>>, %arg5: memref<1x32xf32, #tpu.memory_space<vmem>>, %arg6: memref<8x4xf32, #tpu.memory_space<vmem>>, %arg7: memref<8x4xf32, #tpu.memory_space<vmem>>, %arg8: memref<1x8x32xf32, #tpu.memory_space<vmem>>) attributes {dimension_semantics = [#tpu.dimension_semantics<parallel>], iteration_bounds = array<i64: 2>, scalar_prefetch = 0 : i64, scratch_operands = 0 : i64, tpu.core_type = #tpu.core_type<tc>, window_params = [{transform_indices = @transform_0, window_bounds = array<i64: 1, 8, 32>}, {pipeline_mode = #tpu.pipeline_mode<synchronous>, transform_indices = @transform_1, window_bounds = array<i64: 32, 96>}, {pipeline_mode = #tpu.pipeline_mode<synchronous>, transform_indices = @transform_2, window_bounds = array<i64: 1, 96>}, {pipeline_mode = #tpu.pipeline_mode<synchronous>, transform_indices = @transform_3, window_bounds = array<i64: 32, 32>}, {pipeline_mode = #tpu.pipeline_mode<synchronous>, transform_indices = @transform_4, window_bounds = array<i64: 1, 32>}, {pipeline_mode = #tpu.pipeline_mode<synchronous>, transform_indices = @transform_5, window_bounds = array<i64: 8, 4>}, {pipeline_mode = #tpu.pipeline_mode<synchronous>, transform_indices = @transform_6, window_bounds = array<i64: 8, 4>}, {transform_indices = @transform_7, window_bounds = array<i64: 1, 8, 32>}]} {
    %c0 = arith.constant 0 : index
    %c0_0 = arith.constant 0 : index
    %c0_1 = arith.constant 0 : index
    %0 = vector.load %arg1[%c0, %c0_0, %c0_1] : memref<1x8x32xbf16, #tpu.memory_space<vmem>>, vector<1x8x32xbf16>
    %1 = vector.shape_cast %0 : vector<1x8x32xbf16> to vector<8x32xbf16>
    %c0_2 = arith.constant 0 : index
    %c0_3 = arith.constant 0 : index
    %2 = vector.load %arg2[%c0_2, %c0_3] : memref<32x96xbf16, #tpu.memory_space<vmem>>, vector<32x96xbf16>
    %cst = arith.constant dense<0.000000e+00> : vector<8x96xf32>
    %3 = tpu.matmul %1, %2, %cst {dimension_numbers = #tpu.dot_dimension_numbers<[1], [0], [0], [1], [0, 0, 1, 1], [], []>} : vector<8x32xbf16>, vector<32x96xbf16>, vector<8x96xf32> -> vector<8x96xf32>
    %c0_4 = arith.constant 0 : index
    %c0_5 = arith.constant 0 : index
    %4 = vector.load %arg3[%c0_4, %c0_5] : memref<1x96xf32, #tpu.memory_space<vmem>>, vector<1x96xf32>
    %5 = vector.broadcast %4 : vector<1x96xf32> to vector<8x96xf32>
    %6 = arith.addf %3, %5 : vector<8x96xf32>
    %c0_6 = arith.constant 0 : index
    %c0_7 = arith.constant 0 : index
    %7 = vector.load %arg6[%c0_6, %c0_7] : memref<8x4xf32, #tpu.memory_space<vmem>>, vector<8x4xf32>
    %c0_8 = arith.constant 0 : index
    %c0_9 = arith.constant 0 : index
    %8 = vector.load %arg7[%c0_8, %c0_9] : memref<8x4xf32, #tpu.memory_space<vmem>>, vector<8x4xf32>
    %9 = vector.extract_strided_slice %6 {offsets = [0, 0], sizes = [8, 8], strides = [1, 1]} : vector<8x96xf32> to vector<8x8xf32>
    %10 = vector.extract_strided_slice %6 {offsets = [0, 32], sizes = [8, 8], strides = [1, 1]} : vector<8x96xf32> to vector<8x8xf32>
    %11 = vector.extract_strided_slice %6 {offsets = [0, 64], sizes = [8, 8], strides = [1, 1]} : vector<8x96xf32> to vector<8x8xf32>
    %12 = arith.truncf %11 : vector<8x8xf32> to vector<8x8xbf16>
    %13 = vector.extract_strided_slice %9 {offsets = [0, 0], sizes = [8, 4], strides = [1, 1]} : vector<8x8xf32> to vector<8x4xf32>
    %14 = vector.extract_strided_slice %9 {offsets = [0, 4], sizes = [8, 4], strides = [1, 1]} : vector<8x8xf32> to vector<8x4xf32>
    %15 = vector.extract_strided_slice %10 {offsets = [0, 0], sizes = [8, 4], strides = [1, 1]} : vector<8x8xf32> to vector<8x4xf32>
    %16 = vector.extract_strided_slice %10 {offsets = [0, 4], sizes = [8, 4], strides = [1, 1]} : vector<8x8xf32> to vector<8x4xf32>
    %17 = arith.mulf %13, %7 : vector<8x4xf32>
    %18 = arith.mulf %14, %8 : vector<8x4xf32>
    %19 = arith.subf %17, %18 : vector<8x4xf32>
    %20 = arith.mulf %13, %8 : vector<8x4xf32>
    %21 = arith.mulf %14, %7 : vector<8x4xf32>
    %22 = arith.addf %20, %21 : vector<8x4xf32>
    %23 = tpu.concatenate %19, %22 in 1 : vector<8x4xf32>, vector<8x4xf32> -> vector<8x8xf32>
    %24 = arith.truncf %23 : vector<8x8xf32> to vector<8x8xbf16>
    %25 = arith.mulf %15, %7 : vector<8x4xf32>
    %26 = arith.mulf %16, %8 : vector<8x4xf32>
    %27 = arith.subf %25, %26 : vector<8x4xf32>
    %28 = arith.mulf %15, %8 : vector<8x4xf32>
    %29 = arith.mulf %16, %7 : vector<8x4xf32>
    %30 = arith.addf %28, %29 : vector<8x4xf32>
    %31 = tpu.concatenate %27, %30 in 1 : vector<8x4xf32>, vector<8x4xf32> -> vector<8x8xf32>
    %32 = arith.truncf %31 : vector<8x8xf32> to vector<8x8xbf16>
    %cst_10 = arith.constant 0xFF800000 : f32
    %33 = vector.broadcast %cst_10 : f32 to vector<8x1xf32>
    %cst_11 = arith.constant 0.000000e+00 : f32
    %34 = vector.broadcast %cst_11 : f32 to vector<8x1xf32>
    %cst_12 = arith.constant 0.000000e+00 : f32
    %35 = vector.broadcast %cst_12 : f32 to vector<8x8xf32>
    %cst_13 = arith.constant dense<0.000000e+00> : vector<8x8xf32>
    %36 = tpu.matmul %24, %32, %cst_13 {dimension_numbers = #tpu.dot_dimension_numbers<[1], [1], [0], [0], [0, 0, 1, 0], [], []>} : vector<8x8xbf16>, vector<8x8xbf16>, vector<8x8xf32> -> vector<8x8xf32>
    %cst_14 = arith.constant dense<0xFF800000> : vector<8xf32>
    %37 = vector.multi_reduction <maximumf>, %36, %cst_14 [1] : vector<8x8xf32> to vector<8xf32>
    %38 = vector.shape_cast %37 : vector<8xf32> to vector<8x1xf32>
    %39 = arith.maximumf %33, %38 : vector<8x1xf32>
    %40 = arith.subf %33, %39 : vector<8x1xf32>
    %41 = math.exp %40 : vector<8x1xf32>
    %42 = vector.broadcast %39 : vector<8x1xf32> to vector<8x8xf32>
    %43 = arith.subf %36, %42 : vector<8x8xf32>
    %44 = math.exp %43 : vector<8x8xf32>
    %45 = arith.mulf %41, %34 : vector<8x1xf32>
    %cst_15 = arith.constant dense<0.000000e+00> : vector<8xf32>
    %46 = vector.multi_reduction <add>, %44, %cst_15 [1] : vector<8x8xf32> to vector<8xf32>
    %47 = vector.shape_cast %46 : vector<8xf32> to vector<8x1xf32>
    %48 = arith.addf %45, %47 : vector<8x1xf32>
    %49 = vector.broadcast %41 : vector<8x1xf32> to vector<8x8xf32>
    %50 = arith.mulf %49, %35 : vector<8x8xf32>
    %51 = arith.truncf %44 : vector<8x8xf32> to vector<8x8xbf16>
    %cst_16 = arith.constant dense<0.000000e+00> : vector<8x8xf32>
    %52 = tpu.matmul %51, %12, %cst_16 {dimension_numbers = #tpu.dot_dimension_numbers<[1], [0], [0], [1], [0, 0, 1, 1], [], []>} : vector<8x8xbf16>, vector<8x8xbf16>, vector<8x8xf32> -> vector<8x8xf32>
    %53 = arith.addf %50, %52 : vector<8x8xf32>
    %54 = tpu.reciprocal %48 {approx = true} : vector<8x1xf32> -> vector<8x1xf32>
    %55 = vector.broadcast %54 : vector<8x1xf32> to vector<8x8xf32>
    %56 = arith.mulf %53, %55 : vector<8x8xf32>
    %57 = vector.extract_strided_slice %6 {offsets = [0, 8], sizes = [8, 8], strides = [1, 1]} : vector<8x96xf32> to vector<8x8xf32>
    %58 = vector.extract_strided_slice %6 {offsets = [0, 40], sizes = [8, 8], strides = [1, 1]} : vector<8x96xf32> to vector<8x8xf32>
    %59 = vector.extract_strided_slice %6 {offsets = [0, 72], sizes = [8, 8], strides = [1, 1]} : vector<8x96xf32> to vector<8x8xf32>
    %60 = arith.truncf %59 : vector<8x8xf32> to vector<8x8xbf16>
    %61 = vector.extract_strided_slice %57 {offsets = [0, 0], sizes = [8, 4], strides = [1, 1]} : vector<8x8xf32> to vector<8x4xf32>
    %62 = vector.extract_strided_slice %57 {offsets = [0, 4], sizes = [8, 4], strides = [1, 1]} : vector<8x8xf32> to vector<8x4xf32>
    %63 = vector.extract_strided_slice %58 {offsets = [0, 0], sizes = [8, 4], strides = [1, 1]} : vector<8x8xf32> to vector<8x4xf32>
    %64 = vector.extract_strided_slice %58 {offsets = [0, 4], sizes = [8, 4], strides = [1, 1]} : vector<8x8xf32> to vector<8x4xf32>
    %65 = arith.mulf %61, %7 : vector<8x4xf32>
    %66 = arith.mulf %62, %8 : vector<8x4xf32>
    %67 = arith.subf %65, %66 : vector<8x4xf32>
    %68 = arith.mulf %61, %8 : vector<8x4xf32>
    %69 = arith.mulf %62, %7 : vector<8x4xf32>
    %70 = arith.addf %68, %69 : vector<8x4xf32>
    %71 = tpu.concatenate %67, %70 in 1 : vector<8x4xf32>, vector<8x4xf32> -> vector<8x8xf32>
    %72 = arith.truncf %71 : vector<8x8xf32> to vector<8x8xbf16>
    %73 = arith.mulf %63, %7 : vector<8x4xf32>
    %74 = arith.mulf %64, %8 : vector<8x4xf32>
    %75 = arith.subf %73, %74 : vector<8x4xf32>
    %76 = arith.mulf %63, %8 : vector<8x4xf32>
    %77 = arith.mulf %64, %7 : vector<8x4xf32>
    %78 = arith.addf %76, %77 : vector<8x4xf32>
    %79 = tpu.concatenate %75, %78 in 1 : vector<8x4xf32>, vector<8x4xf32> -> vector<8x8xf32>
    %80 = arith.truncf %79 : vector<8x8xf32> to vector<8x8xbf16>
    %cst_17 = arith.constant 0xFF800000 : f32
    %81 = vector.broadcast %cst_17 : f32 to vector<8x1xf32>
    %cst_18 = arith.constant 0.000000e+00 : f32
    %82 = vector.broadcast %cst_18 : f32 to vector<8x1xf32>
    %cst_19 = arith.constant 0.000000e+00 : f32
    %83 = vector.broadcast %cst_19 : f32 to vector<8x8xf32>
    %cst_20 = arith.constant dense<0.000000e+00> : vector<8x8xf32>
    %84 = tpu.matmul %72, %80, %cst_20 {dimension_numbers = #tpu.dot_dimension_numbers<[1], [1], [0], [0], [0, 0, 1, 0], [], []>} : vector<8x8xbf16>, vector<8x8xbf16>, vector<8x8xf32> -> vector<8x8xf32>
    %cst_21 = arith.constant dense<0xFF800000> : vector<8xf32>
    %85 = vector.multi_reduction <maximumf>, %84, %cst_21 [1] : vector<8x8xf32> to vector<8xf32>
    %86 = vector.shape_cast %85 : vector<8xf32> to vector<8x1xf32>
    %87 = arith.maximumf %81, %86 : vector<8x1xf32>
    %88 = arith.subf %81, %87 : vector<8x1xf32>
    %89 = math.exp %88 : vector<8x1xf32>
    %90 = vector.broadcast %87 : vector<8x1xf32> to vector<8x8xf32>
    %91 = arith.subf %84, %90 : vector<8x8xf32>
    %92 = math.exp %91 : vector<8x8xf32>
    %93 = arith.mulf %89, %82 : vector<8x1xf32>
    %cst_22 = arith.constant dense<0.000000e+00> : vector<8xf32>
    %94 = vector.multi_reduction <add>, %92, %cst_22 [1] : vector<8x8xf32> to vector<8xf32>
    %95 = vector.shape_cast %94 : vector<8xf32> to vector<8x1xf32>
    %96 = arith.addf %93, %95 : vector<8x1xf32>
    %97 = vector.broadcast %89 : vector<8x1xf32> to vector<8x8xf32>
    %98 = arith.mulf %97, %83 : vector<8x8xf32>
    %99 = arith.truncf %92 : vector<8x8xf32> to vector<8x8xbf16>
    %cst_23 = arith.constant dense<0.000000e+00> : vector<8x8xf32>
    %100 = tpu.matmul %99, %60, %cst_23 {dimension_numbers = #tpu.dot_dimension_numbers<[1], [0], [0], [1], [0, 0, 1, 1], [], []>} : vector<8x8xbf16>, vector<8x8xbf16>, vector<8x8xf32> -> vector<8x8xf32>
    %101 = arith.addf %98, %100 : vector<8x8xf32>
    %102 = tpu.reciprocal %96 {approx = true} : vector<8x1xf32> -> vector<8x1xf32>
    %103 = vector.broadcast %102 : vector<8x1xf32> to vector<8x8xf32>
    %104 = arith.mulf %101, %103 : vector<8x8xf32>
    %105 = vector.extract_strided_slice %6 {offsets = [0, 16], sizes = [8, 8], strides = [1, 1]} : vector<8x96xf32> to vector<8x8xf32>
    %106 = vector.extract_strided_slice %6 {offsets = [0, 48], sizes = [8, 8], strides = [1, 1]} : vector<8x96xf32> to vector<8x8xf32>
    %107 = vector.extract_strided_slice %6 {offsets = [0, 80], sizes = [8, 8], strides = [1, 1]} : vector<8x96xf32> to vector<8x8xf32>
    %108 = arith.truncf %107 : vector<8x8xf32> to vector<8x8xbf16>
    %109 = vector.extract_strided_slice %105 {offsets = [0, 0], sizes = [8, 4], strides = [1, 1]} : vector<8x8xf32> to vector<8x4xf32>
    %110 = vector.extract_strided_slice %105 {offsets = [0, 4], sizes = [8, 4], strides = [1, 1]} : vector<8x8xf32> to vector<8x4xf32>
    %111 = vector.extract_strided_slice %106 {offsets = [0, 0], sizes = [8, 4], strides = [1, 1]} : vector<8x8xf32> to vector<8x4xf32>
    %112 = vector.extract_strided_slice %106 {offsets = [0, 4], sizes = [8, 4], strides = [1, 1]} : vector<8x8xf32> to vector<8x4xf32>
    %113 = arith.mulf %109, %7 : vector<8x4xf32>
    %114 = arith.mulf %110, %8 : vector<8x4xf32>
    %115 = arith.subf %113, %114 : vector<8x4xf32>
    %116 = arith.mulf %109, %8 : vector<8x4xf32>
    %117 = arith.mulf %110, %7 : vector<8x4xf32>
    %118 = arith.addf %116, %117 : vector<8x4xf32>
    %119 = tpu.concatenate %115, %118 in 1 : vector<8x4xf32>, vector<8x4xf32> -> vector<8x8xf32>
    %120 = arith.truncf %119 : vector<8x8xf32> to vector<8x8xbf16>
    %121 = arith.mulf %111, %7 : vector<8x4xf32>
    %122 = arith.mulf %112, %8 : vector<8x4xf32>
    %123 = arith.subf %121, %122 : vector<8x4xf32>
    %124 = arith.mulf %111, %8 : vector<8x4xf32>
    %125 = arith.mulf %112, %7 : vector<8x4xf32>
    %126 = arith.addf %124, %125 : vector<8x4xf32>
    %127 = tpu.concatenate %123, %126 in 1 : vector<8x4xf32>, vector<8x4xf32> -> vector<8x8xf32>
    %128 = arith.truncf %127 : vector<8x8xf32> to vector<8x8xbf16>
    %cst_24 = arith.constant 0xFF800000 : f32
    %129 = vector.broadcast %cst_24 : f32 to vector<8x1xf32>
    %cst_25 = arith.constant 0.000000e+00 : f32
    %130 = vector.broadcast %cst_25 : f32 to vector<8x1xf32>
    %cst_26 = arith.constant 0.000000e+00 : f32
    %131 = vector.broadcast %cst_26 : f32 to vector<8x8xf32>
    %cst_27 = arith.constant dense<0.000000e+00> : vector<8x8xf32>
    %132 = tpu.matmul %120, %128, %cst_27 {dimension_numbers = #tpu.dot_dimension_numbers<[1], [1], [0], [0], [0, 0, 1, 0], [], []>} : vector<8x8xbf16>, vector<8x8xbf16>, vector<8x8xf32> -> vector<8x8xf32>
    %cst_28 = arith.constant dense<0xFF800000> : vector<8xf32>
    %133 = vector.multi_reduction <maximumf>, %132, %cst_28 [1] : vector<8x8xf32> to vector<8xf32>
    %134 = vector.shape_cast %133 : vector<8xf32> to vector<8x1xf32>
    %135 = arith.maximumf %129, %134 : vector<8x1xf32>
    %136 = arith.subf %129, %135 : vector<8x1xf32>
    %137 = math.exp %136 : vector<8x1xf32>
    %138 = vector.broadcast %135 : vector<8x1xf32> to vector<8x8xf32>
    %139 = arith.subf %132, %138 : vector<8x8xf32>
    %140 = math.exp %139 : vector<8x8xf32>
    %141 = arith.mulf %137, %130 : vector<8x1xf32>
    %cst_29 = arith.constant dense<0.000000e+00> : vector<8xf32>
    %142 = vector.multi_reduction <add>, %140, %cst_29 [1] : vector<8x8xf32> to vector<8xf32>
    %143 = vector.shape_cast %142 : vector<8xf32> to vector<8x1xf32>
    %144 = arith.addf %141, %143 : vector<8x1xf32>
    %145 = vector.broadcast %137 : vector<8x1xf32> to vector<8x8xf32>
    %146 = arith.mulf %145, %131 : vector<8x8xf32>
    %147 = arith.truncf %140 : vector<8x8xf32> to vector<8x8xbf16>
    %cst_30 = arith.constant dense<0.000000e+00> : vector<8x8xf32>
    %148 = tpu.matmul %147, %108, %cst_30 {dimension_numbers = #tpu.dot_dimension_numbers<[1], [0], [0], [1], [0, 0, 1, 1], [], []>} : vector<8x8xbf16>, vector<8x8xbf16>, vector<8x8xf32> -> vector<8x8xf32>
    %149 = arith.addf %146, %148 : vector<8x8xf32>
    %150 = tpu.reciprocal %144 {approx = true} : vector<8x1xf32> -> vector<8x1xf32>
    %151 = vector.broadcast %150 : vector<8x1xf32> to vector<8x8xf32>
    %152 = arith.mulf %149, %151 : vector<8x8xf32>
    %153 = vector.extract_strided_slice %6 {offsets = [0, 24], sizes = [8, 8], strides = [1, 1]} : vector<8x96xf32> to vector<8x8xf32>
    %154 = vector.extract_strided_slice %6 {offsets = [0, 56], sizes = [8, 8], strides = [1, 1]} : vector<8x96xf32> to vector<8x8xf32>
    %155 = vector.extract_strided_slice %6 {offsets = [0, 88], sizes = [8, 8], strides = [1, 1]} : vector<8x96xf32> to vector<8x8xf32>
    %156 = arith.truncf %155 : vector<8x8xf32> to vector<8x8xbf16>
    %157 = vector.extract_strided_slice %153 {offsets = [0, 0], sizes = [8, 4], strides = [1, 1]} : vector<8x8xf32> to vector<8x4xf32>
    %158 = vector.extract_strided_slice %153 {offsets = [0, 4], sizes = [8, 4], strides = [1, 1]} : vector<8x8xf32> to vector<8x4xf32>
    %159 = vector.extract_strided_slice %154 {offsets = [0, 0], sizes = [8, 4], strides = [1, 1]} : vector<8x8xf32> to vector<8x4xf32>
    %160 = vector.extract_strided_slice %154 {offsets = [0, 4], sizes = [8, 4], strides = [1, 1]} : vector<8x8xf32> to vector<8x4xf32>
    %161 = arith.mulf %157, %7 : vector<8x4xf32>
    %162 = arith.mulf %158, %8 : vector<8x4xf32>
    %163 = arith.subf %161, %162 : vector<8x4xf32>
    %164 = arith.mulf %157, %8 : vector<8x4xf32>
    %165 = arith.mulf %158, %7 : vector<8x4xf32>
    %166 = arith.addf %164, %165 : vector<8x4xf32>
    %167 = tpu.concatenate %163, %166 in 1 : vector<8x4xf32>, vector<8x4xf32> -> vector<8x8xf32>
    %168 = arith.truncf %167 : vector<8x8xf32> to vector<8x8xbf16>
    %169 = arith.mulf %159, %7 : vector<8x4xf32>
    %170 = arith.mulf %160, %8 : vector<8x4xf32>
    %171 = arith.subf %169, %170 : vector<8x4xf32>
    %172 = arith.mulf %159, %8 : vector<8x4xf32>
    %173 = arith.mulf %160, %7 : vector<8x4xf32>
    %174 = arith.addf %172, %173 : vector<8x4xf32>
    %175 = tpu.concatenate %171, %174 in 1 : vector<8x4xf32>, vector<8x4xf32> -> vector<8x8xf32>
    %176 = arith.truncf %175 : vector<8x8xf32> to vector<8x8xbf16>
    %cst_31 = arith.constant 0xFF800000 : f32
    %177 = vector.broadcast %cst_31 : f32 to vector<8x1xf32>
    %cst_32 = arith.constant 0.000000e+00 : f32
    %178 = vector.broadcast %cst_32 : f32 to vector<8x1xf32>
    %cst_33 = arith.constant 0.000000e+00 : f32
    %179 = vector.broadcast %cst_33 : f32 to vector<8x8xf32>
    %cst_34 = arith.constant dense<0.000000e+00> : vector<8x8xf32>
    %180 = tpu.matmul %168, %176, %cst_34 {dimension_numbers = #tpu.dot_dimension_numbers<[1], [1], [0], [0], [0, 0, 1, 0], [], []>} : vector<8x8xbf16>, vector<8x8xbf16>, vector<8x8xf32> -> vector<8x8xf32>
    %cst_35 = arith.constant dense<0xFF800000> : vector<8xf32>
    %181 = vector.multi_reduction <maximumf>, %180, %cst_35 [1] : vector<8x8xf32> to vector<8xf32>
    %182 = vector.shape_cast %181 : vector<8xf32> to vector<8x1xf32>
    %183 = arith.maximumf %177, %182 : vector<8x1xf32>
    %184 = arith.subf %177, %183 : vector<8x1xf32>
    %185 = math.exp %184 : vector<8x1xf32>
    %186 = vector.broadcast %183 : vector<8x1xf32> to vector<8x8xf32>
    %187 = arith.subf %180, %186 : vector<8x8xf32>
    %188 = math.exp %187 : vector<8x8xf32>
    %189 = arith.mulf %185, %178 : vector<8x1xf32>
    %cst_36 = arith.constant dense<0.000000e+00> : vector<8xf32>
    %190 = vector.multi_reduction <add>, %188, %cst_36 [1] : vector<8x8xf32> to vector<8xf32>
    %191 = vector.shape_cast %190 : vector<8xf32> to vector<8x1xf32>
    %192 = arith.addf %189, %191 : vector<8x1xf32>
    %193 = vector.broadcast %185 : vector<8x1xf32> to vector<8x8xf32>
    %194 = arith.mulf %193, %179 : vector<8x8xf32>
    %195 = arith.truncf %188 : vector<8x8xf32> to vector<8x8xbf16>
    %cst_37 = arith.constant dense<0.000000e+00> : vector<8x8xf32>
    %196 = tpu.matmul %195, %156, %cst_37 {dimension_numbers = #tpu.dot_dimension_numbers<[1], [0], [0], [1], [0, 0, 1, 1], [], []>} : vector<8x8xbf16>, vector<8x8xbf16>, vector<8x8xf32> -> vector<8x8xf32>
    %197 = arith.addf %194, %196 : vector<8x8xf32>
    %198 = tpu.reciprocal %192 {approx = true} : vector<8x1xf32> -> vector<8x1xf32>
    %199 = vector.broadcast %198 : vector<8x1xf32> to vector<8x8xf32>
    %200 = arith.mulf %197, %199 : vector<8x8xf32>
    %201 = tpu.concatenate %56, %104, %152, %200 in 1 : vector<8x8xf32>, vector<8x8xf32>, vector<8x8xf32>, vector<8x8xf32> -> vector<8x32xf32>
    %202 = arith.truncf %201 : vector<8x32xf32> to vector<8x32xbf16>
    %c0_38 = arith.constant 0 : index
    %c0_39 = arith.constant 0 : index
    %203 = vector.load %arg4[%c0_38, %c0_39] : memref<32x32xbf16, #tpu.memory_space<vmem>>, vector<32x32xbf16>
    %cst_40 = arith.constant dense<0.000000e+00> : vector<8x32xf32>
    %204 = tpu.matmul %202, %203, %cst_40 {dimension_numbers = #tpu.dot_dimension_numbers<[1], [0], [0], [1], [0, 0, 1, 1], [], []>} : vector<8x32xbf16>, vector<32x32xbf16>, vector<8x32xf32> -> vector<8x32xf32>
    %c0_41 = arith.constant 0 : index
    %c0_42 = arith.constant 0 : index
    %205 = vector.load %arg5[%c0_41, %c0_42] : memref<1x32xf32, #tpu.memory_space<vmem>>, vector<1x32xf32>
    %206 = vector.broadcast %205 : vector<1x32xf32> to vector<8x32xf32>
    %207 = arith.addf %204, %206 : vector<8x32xf32>
    %c0_43 = arith.constant 0 : index
    %c0_44 = arith.constant 0 : index
    %c0_45 = arith.constant 0 : index
    %208 = vector.load %arg8[%c0_43, %c0_44, %c0_45] : memref<1x8x32xf32, #tpu.memory_space<vmem>>, vector<1x8x32xf32>
    %209 = vector.shape_cast %208 : vector<1x8x32xf32> to vector<8x32xf32>
    %210 = vector.shape_cast %207 : vector<8x32xf32> to vector<1x8x32xf32>
    tpu.vector_store %arg8[%c0_43, %c0_44, %c0_45], %210 {strides = array<i32>} : memref<1x8x32xf32, #tpu.memory_space<vmem>>, vector<1x8x32xf32>,
    return
  }
  func.func @transform_0(%arg0: i32) -> (i32, i32, i32) {
    %c0_i32 = arith.constant 0 : i32
    %c0_i32_0 = arith.constant 0 : i32
    %c0_i32_1 = arith.constant 0 : i32
    return %arg0, %c0_i32, %c0_i32_0 : i32, i32, i32
  }
  func.func @transform_1(%arg0: i32) -> (i32, i32) {
    %c0_i32 = arith.constant 0 : i32
    %c0_i32_0 = arith.constant 0 : i32
    %c0_i32_1 = arith.constant 0 : i32
    return %c0_i32, %c0_i32_0 : i32, i32
  }
  func.func @transform_2(%arg0: i32) -> (i32, i32) {
    %c0_i32 = arith.constant 0 : i32
    %c0_i32_0 = arith.constant 0 : i32
    %c0_i32_1 = arith.constant 0 : i32
    return %c0_i32, %c0_i32_0 : i32, i32
  }
  func.func @transform_3(%arg0: i32) -> (i32, i32) {
    %c0_i32 = arith.constant 0 : i32
    %c0_i32_0 = arith.constant 0 : i32
    %c0_i32_1 = arith.constant 0 : i32
    return %c0_i32, %c0_i32_0 : i32, i32
  }
  func.func @transform_4(%arg0: i32) -> (i32, i32) {
    %c0_i32 = arith.constant 0 : i32
    %c0_i32_0 = arith.constant 0 : i32
    %c0_i32_1 = arith.constant 0 : i32
    return %c0_i32, %c0_i32_0 : i32, i32
  }
  func.func @transform_5(%arg0: i32) -> (i32, i32) {
    %c0_i32 = arith.constant 0 : i32
    %c0_i32_0 = arith.constant 0 : i32
    %c0_i32_1 = arith.constant 0 : i32
    return %c0_i32, %c0_i32_0 : i32, i32
  }
  func.func @transform_6(%arg0: i32) -> (i32, i32) {
    %c0_i32 = arith.constant 0 : i32
    %c0_i32_0 = arith.constant 0 : i32
    %c0_i32_1 = arith.constant 0 : i32
    return %c0_i32, %c0_i32_0 : i32, i32
  }
  func.func @transform_7(%arg0: i32) -> (i32, i32, i32) {
    %c0_i32 = arith.constant 0 : i32
    %c0_i32_0 = arith.constant 0 : i32
    %c0_i32_1 = arith.constant 0 : i32
    return %arg0, %c0_i32, %c0_i32_0 : i32, i32, i32
  }
}

module attributes {stable_mosaic.version = 11 : i64} {
  func.func @_attn_kernel(%arg0: i32, %arg1: memref<1x8x32xbf16, #tpu.memory_space<vmem>>, %arg2: memref<32x96xbf16, #tpu.memory_space<vmem>>, %arg3: memref<1x96xf32, #tpu.memory_space<vmem>>, %arg4: memref<32x32xbf16, #tpu.memory_space<vmem>>, %arg5: memref<1x32xf32, #tpu.memory_space<vmem>>, %arg6: memref<8x4xf32, #tpu.memory_space<vmem>>, %arg7: memref<8x4xf32, #tpu.memory_space<vmem>>, %arg8: memref<1x8x32xf32, #tpu.memory_space<vmem>>) attributes {dimension_semantics = [#tpu.dimension_semantics<parallel>], iteration_bounds = array<i64: 2>, scalar_prefetch = 0 : i64, scratch_operands = 0 : i64, tpu.core_type = #tpu.core_type<tc>, window_params = [{transform_indices = @transform_0, window_bounds = array<i64: 1, 8, 32>}, {pipeline_mode = #tpu.pipeline_mode<synchronous>, transform_indices = @transform_1, window_bounds = array<i64: 32, 96>}, {pipeline_mode = #tpu.pipeline_mode<synchronous>, transform_indices = @transform_2, window_bounds = array<i64: 1, 96>}, {pipeline_mode = #tpu.pipeline_mode<synchronous>, transform_indices = @transform_3, window_bounds = array<i64: 32, 32>}, {pipeline_mode = #tpu.pipeline_mode<synchronous>, transform_indices = @transform_4, window_bounds = array<i64: 1, 32>}, {pipeline_mode = #tpu.pipeline_mode<synchronous>, transform_indices = @transform_5, window_bounds = array<i64: 8, 4>}, {pipeline_mode = #tpu.pipeline_mode<synchronous>, transform_indices = @transform_6, window_bounds = array<i64: 8, 4>}, {transform_indices = @transform_7, window_bounds = array<i64: 1, 8, 32>}]} {
    %c0 = arith.constant 0 : index
    %c0_0 = arith.constant 0 : index
    %c0_1 = arith.constant 0 : index
    %0 = vector.load %arg1[%c0, %c0_0, %c0_1] : memref<1x8x32xbf16, #tpu.memory_space<vmem>>, vector<1x8x32xbf16>
    %1 = vector.shape_cast %0 : vector<1x8x32xbf16> to vector<8x32xbf16>
    %c0_2 = arith.constant 0 : index
    %c0_3 = arith.constant 0 : index
    %2 = vector.load %arg2[%c0_2, %c0_3] : memref<32x96xbf16, #tpu.memory_space<vmem>>, vector<32x96xbf16>
    %cst = arith.constant dense<0.000000e+00> : vector<8x96xf32>
    %3 = tpu.matmul %1, %2, %cst {dimension_numbers = #tpu.dot_dimension_numbers<[1], [0], [0], [1], [0, 0, 1, 1], [], []>} : vector<8x32xbf16>, vector<32x96xbf16>, vector<8x96xf32> -> vector<8x96xf32>
    %c0_4 = arith.constant 0 : index
    %c0_5 = arith.constant 0 : index
    %4 = vector.load %arg3[%c0_4, %c0_5] : memref<1x96xf32, #tpu.memory_space<vmem>>, vector<1x96xf32>
    %5 = vector.broadcast %4 : vector<1x96xf32> to vector<8x96xf32>
    %6 = arith.addf %3, %5 : vector<8x96xf32>
    %c0_6 = arith.constant 0 : index
    %c0_7 = arith.constant 0 : index
    %7 = vector.load %arg6[%c0_6, %c0_7] : memref<8x4xf32, #tpu.memory_space<vmem>>, vector<8x4xf32>
    %c0_8 = arith.constant 0 : index
    %c0_9 = arith.constant 0 : index
    %8 = vector.load %arg7[%c0_8, %c0_9] : memref<8x4xf32, #tpu.memory_space<vmem>>, vector<8x4xf32>
    %9 = vector.extract_strided_slice %6 {offsets = [0, 0], sizes = [8, 8], strides = [1, 1]} : vector<8x96xf32> to vector<8x8xf32>
    %10 = vector.extract_strided_slice %6 {offsets = [0, 32], sizes = [8, 8], strides = [1, 1]} : vector<8x96xf32> to vector<8x8xf32>
    %11 = vector.extract_strided_slice %6 {offsets = [0, 64], sizes = [8, 8], strides = [1, 1]} : vector<8x96xf32> to vector<8x8xf32>
    %12 = arith.truncf %11 : vector<8x8xf32> to vector<8x8xbf16>
    %13 = vector.extract_strided_slice %9 {offsets = [0, 0], sizes = [8, 4], strides = [1, 1]} : vector<8x8xf32> to vector<8x4xf32>
    %14 = vector.extract_strided_slice %9 {offsets = [0, 4], sizes = [8, 4], strides = [1, 1]} : vector<8x8xf32> to vector<8x4xf32>
    %15 = vector.extract_strided_slice %10 {offsets = [0, 0], sizes = [8, 4], strides = [1, 1]} : vector<8x8xf32> to vector<8x4xf32>
    %16 = vector.extract_strided_slice %10 {offsets = [0, 4], sizes = [8, 4], strides = [1, 1]} : vector<8x8xf32> to vector<8x4xf32>
    %17 = arith.mulf %13, %7 : vector<8x4xf32>
    %18 = arith.mulf %14, %8 : vector<8x4xf32>
    %19 = arith.subf %17, %18 : vector<8x4xf32>
    %20 = arith.mulf %13, %8 : vector<8x4xf32>
    %21 = arith.mulf %14, %7 : vector<8x4xf32>
    %22 = arith.addf %20, %21 : vector<8x4xf32>
    %23 = tpu.concatenate %19, %22 in 1 : vector<8x4xf32>, vector<8x4xf32> -> vector<8x8xf32>
    %24 = arith.truncf %23 : vector<8x8xf32> to vector<8x8xbf16>
    %25 = arith.mulf %15, %7 : vector<8x4xf32>
    %26 = arith.mulf %16, %8 : vector<8x4xf32>
    %27 = arith.subf %25, %26 : vector<8x4xf32>
    %28 = arith.mulf %15, %8 : vector<8x4xf32>
    %29 = arith.mulf %16, %7 : vector<8x4xf32>
    %30 = arith.addf %28, %29 : vector<8x4xf32>
    %31 = tpu.concatenate %27, %30 in 1 : vector<8x4xf32>, vector<8x4xf32> -> vector<8x8xf32>
    %32 = arith.truncf %31 : vector<8x8xf32> to vector<8x8xbf16>
    %cst_10 = arith.constant 0xFF800000 : f32
    %33 = vector.broadcast %cst_10 : f32 to vector<8x1xf32>
    %cst_11 = arith.constant 0.000000e+00 : f32
    %34 = vector.broadcast %cst_11 : f32 to vector<8x1xf32>
    %cst_12 = arith.constant 0.000000e+00 : f32
    %35 = vector.broadcast %cst_12 : f32 to vector<8x8xf32>
    %cst_13 = arith.constant dense<0.000000e+00> : vector<8x8xf32>
    %36 = tpu.matmul %24, %32, %cst_13 {dimension_numbers = #tpu.dot_dimension_numbers<[1], [1], [0], [0], [0, 0, 1, 0], [], []>} : vector<8x8xbf16>, vector<8x8xbf16>, vector<8x8xf32> -> vector<8x8xf32>
    %cst_14 = arith.constant dense<0xFF800000> : vector<8xf32>
    %37 = vector.multi_reduction <maximumf>, %36, %cst_14 [1] : vector<8x8xf32> to vector<8xf32>
    %38 = vector.shape_cast %37 : vector<8xf32> to vector<8x1xf32>
    %39 = arith.maximumf %33, %38 : vector<8x1xf32>
    %40 = arith.subf %33, %39 : vector<8x1xf32>
    %41 = math.exp %40 : vector<8x1xf32>
    %42 = vector.broadcast %39 : vector<8x1xf32> to vector<8x8xf32>
    %43 = arith.subf %36, %42 : vector<8x8xf32>
    %44 = math.exp %43 : vector<8x8xf32>
    %45 = arith.mulf %41, %34 : vector<8x1xf32>
    %cst_15 = arith.constant dense<0.000000e+00> : vector<8xf32>
    %46 = vector.multi_reduction <add>, %44, %cst_15 [1] : vector<8x8xf32> to vector<8xf32>
    %47 = vector.shape_cast %46 : vector<8xf32> to vector<8x1xf32>
    %48 = arith.addf %45, %47 : vector<8x1xf32>
    %49 = vector.broadcast %41 : vector<8x1xf32> to vector<8x8xf32>
    %50 = arith.mulf %49, %35 : vector<8x8xf32>
    %51 = arith.truncf %44 : vector<8x8xf32> to vector<8x8xbf16>
    %cst_16 = arith.constant dense<0.000000e+00> : vector<8x8xf32>
    %52 = tpu.matmul %51, %12, %cst_16 {dimension_numbers = #tpu.dot_dimension_numbers<[1], [0], [0], [1], [0, 0, 1, 1], [], []>} : vector<8x8xbf16>, vector<8x8xbf16>, vector<8x8xf32> -> vector<8x8xf32>
    %53 = arith.addf %50, %52 : vector<8x8xf32>
    %54 = tpu.reciprocal %48 {approx = true} : vector<8x1xf32> -> vector<8x1xf32>
    %55 = vector.broadcast %54 : vector<8x1xf32> to vector<8x8xf32>
    %56 = arith.mulf %53, %55 : vector<8x8xf32>
    %57 = vector.extract_strided_slice %6 {offsets = [0, 8], sizes = [8, 8], strides = [1, 1]} : vector<8x96xf32> to vector<8x8xf32>
    %58 = vector.extract_strided_slice %6 {offsets = [0, 40], sizes = [8, 8], strides = [1, 1]} : vector<8x96xf32> to vector<8x8xf32>
    %59 = vector.extract_strided_slice %6 {offsets = [0, 72], sizes = [8, 8], strides = [1, 1]} : vector<8x96xf32> to vector<8x8xf32>
    %60 = arith.truncf %59 : vector<8x8xf32> to vector<8x8xbf16>
    %61 = vector.extract_strided_slice %57 {offsets = [0, 0], sizes = [8, 4], strides = [1, 1]} : vector<8x8xf32> to vector<8x4xf32>
    %62 = vector.extract_strided_slice %57 {offsets = [0, 4], sizes = [8, 4], strides = [1, 1]} : vector<8x8xf32> to vector<8x4xf32>
    %63 = vector.extract_strided_slice %58 {offsets = [0, 0], sizes = [8, 4], strides = [1, 1]} : vector<8x8xf32> to vector<8x4xf32>
    %64 = vector.extract_strided_slice %58 {offsets = [0, 4], sizes = [8, 4], strides = [1, 1]} : vector<8x8xf32> to vector<8x4xf32>
    %65 = arith.mulf %61, %7 : vector<8x4xf32>
    %66 = arith.mulf %62, %8 : vector<8x4xf32>
    %67 = arith.subf %65, %66 : vector<8x4xf32>
    %68 = arith.mulf %61, %8 : vector<8x4xf32>
    %69 = arith.mulf %62, %7 : vector<8x4xf32>
    %70 = arith.addf %68, %69 : vector<8x4xf32>
    %71 = tpu.concatenate %67, %70 in 1 : vector<8x4xf32>, vector<8x4xf32> -> vector<8x8xf32>
    %72 = arith.truncf %71 : vector<8x8xf32> to vector<8x8xbf16>
    %73 = arith.mulf %63, %7 : vector<8x4xf32>
    %74 = arith.mulf %64, %8 : vector<8x4xf32>
    %75 = arith.subf %73, %74 : vector<8x4xf32>
    %76 = arith.mulf %63, %8 : vector<8x4xf32>
    %77 = arith.mulf %64, %7 : vector<8x4xf32>
    %78 = arith.addf %76, %77 : vector<8x4xf32>
    %79 = tpu.concatenate %75, %78 in 1 : vector<8x4xf32>, vector<8x4xf32> -> vector<8x8xf32>
    %80 = arith.truncf %79 : vector<8x8xf32> to vector<8x8xbf16>
    %cst_17 = arith.constant 0xFF800000 : f32
    %81 = vector.broadcast %cst_17 : f32 to vector<8x1xf32>
    %cst_18 = arith.constant 0.000000e+00 : f32
    %82 = vector.broadcast %cst_18 : f32 to vector<8x1xf32>
    %cst_19 = arith.constant 0.000000e+00 : f32
    %83 = vector.broadcast %cst_19 : f32 to vector<8x8xf32>
    %cst_20 = arith.constant dense<0.000000e+00> : vector<8x8xf32>
    %84 = tpu.matmul %72, %80, %cst_20 {dimension_numbers = #tpu.dot_dimension_numbers<[1], [1], [0], [0], [0, 0, 1, 0], [], []>} : vector<8x8xbf16>, vector<8x8xbf16>, vector<8x8xf32> -> vector<8x8xf32>
    %cst_21 = arith.constant dense<0xFF800000> : vector<8xf32>
    %85 = vector.multi_reduction <maximumf>, %84, %cst_21 [1] : vector<8x8xf32> to vector<8xf32>
    %86 = vector.shape_cast %85 : vector<8xf32> to vector<8x1xf32>
    %87 = arith.maximumf %81, %86 : vector<8x1xf32>
    %88 = arith.subf %81, %87 : vector<8x1xf32>
    %89 = math.exp %88 : vector<8x1xf32>
    %90 = vector.broadcast %87 : vector<8x1xf32> to vector<8x8xf32>
    %91 = arith.subf %84, %90 : vector<8x8xf32>
    %92 = math.exp %91 : vector<8x8xf32>
    %93 = arith.mulf %89, %82 : vector<8x1xf32>
    %cst_22 = arith.constant dense<0.000000e+00> : vector<8xf32>
    %94 = vector.multi_reduction <add>, %92, %cst_22 [1] : vector<8x8xf32> to vector<8xf32>
    %95 = vector.shape_cast %94 : vector<8xf32> to vector<8x1xf32>
    %96 = arith.addf %93, %95 : vector<8x1xf32>
    %97 = vector.broadcast %89 : vector<8x1xf32> to vector<8x8xf32>
    %98 = arith.mulf %97, %83 : vector<8x8xf32>
    %99 = arith.truncf %92 : vector<8x8xf32> to vector<8x8xbf16>
    %cst_23 = arith.constant dense<0.000000e+00> : vector<8x8xf32>
    %100 = tpu.matmul %99, %60, %cst_23 {dimension_numbers = #tpu.dot_dimension_numbers<[1], [0], [0], [1], [0, 0, 1, 1], [], []>} : vector<8x8xbf16>, vector<8x8xbf16>, vector<8x8xf32> -> vector<8x8xf32>
    %101 = arith.addf %98, %100 : vector<8x8xf32>
    %102 = tpu.reciprocal %96 {approx = true} : vector<8x1xf32> -> vector<8x1xf32>
    %103 = vector.broadcast %102 : vector<8x1xf32> to vector<8x8xf32>
    %104 = arith.mulf %101, %103 : vector<8x8xf32>
    %105 = vector.extract_strided_slice %6 {offsets = [0, 16], sizes = [8, 8], strides = [1, 1]} : vector<8x96xf32> to vector<8x8xf32>
    %106 = vector.extract_strided_slice %6 {offsets = [0, 48], sizes = [8, 8], strides = [1, 1]} : vector<8x96xf32> to vector<8x8xf32>
    %107 = vector.extract_strided_slice %6 {offsets = [0, 80], sizes = [8, 8], strides = [1, 1]} : vector<8x96xf32> to vector<8x8xf32>
    %108 = arith.truncf %107 : vector<8x8xf32> to vector<8x8xbf16>
    %109 = vector.extract_strided_slice %105 {offsets = [0, 0], sizes = [8, 4], strides = [1, 1]} : vector<8x8xf32> to vector<8x4xf32>
    %110 = vector.extract_strided_slice %105 {offsets = [0, 4], sizes = [8, 4], strides = [1, 1]} : vector<8x8xf32> to vector<8x4xf32>
    %111 = vector.extract_strided_slice %106 {offsets = [0, 0], sizes = [8, 4], strides = [1, 1]} : vector<8x8xf32> to vector<8x4xf32>
    %112 = vector.extract_strided_slice %106 {offsets = [0, 4], sizes = [8, 4], strides = [1, 1]} : vector<8x8xf32> to vector<8x4xf32>
    %113 = arith.mulf %109, %7 : vector<8x4xf32>
    %114 = arith.mulf %110, %8 : vector<8x4xf32>
    %115 = arith.subf %113, %114 : vector<8x4xf32>
    %116 = arith.mulf %109, %8 : vector<8x4xf32>
    %117 = arith.mulf %110, %7 : vector<8x4xf32>
    %118 = arith.addf %116, %117 : vector<8x4xf32>
    %119 = tpu.concatenate %115, %118 in 1 : vector<8x4xf32>, vector<8x4xf32> -> vector<8x8xf32>
    %120 = arith.truncf %119 : vector<8x8xf32> to vector<8x8xbf16>
    %121 = arith.mulf %111, %7 : vector<8x4xf32>
    %122 = arith.mulf %112, %8 : vector<8x4xf32>
    %123 = arith.subf %121, %122 : vector<8x4xf32>
    %124 = arith.mulf %111, %8 : vector<8x4xf32>
    %125 = arith.mulf %112, %7 : vector<8x4xf32>
    %126 = arith.addf %124, %125 : vector<8x4xf32>
    %127 = tpu.concatenate %123, %126 in 1 : vector<8x4xf32>, vector<8x4xf32> -> vector<8x8xf32>
    %128 = arith.truncf %127 : vector<8x8xf32> to vector<8x8xbf16>
    %cst_24 = arith.constant 0xFF800000 : f32
    %129 = vector.broadcast %cst_24 : f32 to vector<8x1xf32>
    %cst_25 = arith.constant 0.000000e+00 : f32
    %130 = vector.broadcast %cst_25 : f32 to vector<8x1xf32>
    %cst_26 = arith.constant 0.000000e+00 : f32
    %131 = vector.broadcast %cst_26 : f32 to vector<8x8xf32>
    %cst_27 = arith.constant dense<0.000000e+00> : vector<8x8xf32>
    %132 = tpu.matmul %120, %128, %cst_27 {dimension_numbers = #tpu.dot_dimension_numbers<[1], [1], [0], [0], [0, 0, 1, 0], [], []>} : vector<8x8xbf16>, vector<8x8xbf16>, vector<8x8xf32> -> vector<8x8xf32>
    %cst_28 = arith.constant dense<0xFF800000> : vector<8xf32>
    %133 = vector.multi_reduction <maximumf>, %132, %cst_28 [1] : vector<8x8xf32> to vector<8xf32>
    %134 = vector.shape_cast %133 : vector<8xf32> to vector<8x1xf32>
    %135 = arith.maximumf %129, %134 : vector<8x1xf32>
    %136 = arith.subf %129, %135 : vector<8x1xf32>
    %137 = math.exp %136 : vector<8x1xf32>
    %138 = vector.broadcast %135 : vector<8x1xf32> to vector<8x8xf32>
    %139 = arith.subf %132, %138 : vector<8x8xf32>
    %140 = math.exp %139 : vector<8x8xf32>
    %141 = arith.mulf %137, %130 : vector<8x1xf32>
    %cst_29 = arith.constant dense<0.000000e+00> : vector<8xf32>
    %142 = vector.multi_reduction <add>, %140, %cst_29 [1] : vector<8x8xf32> to vector<8xf32>
    %143 = vector.shape_cast %142 : vector<8xf32> to vector<8x1xf32>
    %144 = arith.addf %141, %143 : vector<8x1xf32>
    %145 = vector.broadcast %137 : vector<8x1xf32> to vector<8x8xf32>
    %146 = arith.mulf %145, %131 : vector<8x8xf32>
    %147 = arith.truncf %140 : vector<8x8xf32> to vector<8x8xbf16>
    %cst_30 = arith.constant dense<0.000000e+00> : vector<8x8xf32>
    %148 = tpu.matmul %147, %108, %cst_30 {dimension_numbers = #tpu.dot_dimension_numbers<[1], [0], [0], [1], [0, 0, 1, 1], [], []>} : vector<8x8xbf16>, vector<8x8xbf16>, vector<8x8xf32> -> vector<8x8xf32>
    %149 = arith.addf %146, %148 : vector<8x8xf32>
    %150 = tpu.reciprocal %144 {approx = true} : vector<8x1xf32> -> vector<8x1xf32>
    %151 = vector.broadcast %150 : vector<8x1xf32> to vector<8x8xf32>
    %152 = arith.mulf %149, %151 : vector<8x8xf32>
    %153 = vector.extract_strided_slice %6 {offsets = [0, 24], sizes = [8, 8], strides = [1, 1]} : vector<8x96xf32> to vector<8x8xf32>
    %154 = vector.extract_strided_slice %6 {offsets = [0, 56], sizes = [8, 8], strides = [1, 1]} : vector<8x96xf32> to vector<8x8xf32>
    %155 = vector.extract_strided_slice %6 {offsets = [0, 88], sizes = [8, 8], strides = [1, 1]} : vector<8x96xf32> to vector<8x8xf32>
    %156 = arith.truncf %155 : vector<8x8xf32> to vector<8x8xbf16>
    %157 = vector.extract_strided_slice %153 {offsets = [0, 0], sizes = [8, 4], strides = [1, 1]} : vector<8x8xf32> to vector<8x4xf32>
    %158 = vector.extract_strided_slice %153 {offsets = [0, 4], sizes = [8, 4], strides = [1, 1]} : vector<8x8xf32> to vector<8x4xf32>
    %159 = vector.extract_strided_slice %154 {offsets = [0, 0], sizes = [8, 4], strides = [1, 1]} : vector<8x8xf32> to vector<8x4xf32>
    %160 = vector.extract_strided_slice %154 {offsets = [0, 4], sizes = [8, 4], strides = [1, 1]} : vector<8x8xf32> to vector<8x4xf32>
    %161 = arith.mulf %157, %7 : vector<8x4xf32>
    %162 = arith.mulf %158, %8 : vector<8x4xf32>
    %163 = arith.subf %161, %162 : vector<8x4xf32>
    %164 = arith.mulf %157, %8 : vector<8x4xf32>
    %165 = arith.mulf %158, %7 : vector<8x4xf32>
    %166 = arith.addf %164, %165 : vector<8x4xf32>
    %167 = tpu.concatenate %163, %166 in 1 : vector<8x4xf32>, vector<8x4xf32> -> vector<8x8xf32>
    %168 = arith.truncf %167 : vector<8x8xf32> to vector<8x8xbf16>
    %169 = arith.mulf %159, %7 : vector<8x4xf32>
    %170 = arith.mulf %160, %8 : vector<8x4xf32>
    %171 = arith.subf %169, %170 : vector<8x4xf32>
    %172 = arith.mulf %159, %8 : vector<8x4xf32>
    %173 = arith.mulf %160, %7 : vector<8x4xf32>
    %174 = arith.addf %172, %173 : vector<8x4xf32>
    %175 = tpu.concatenate %171, %174 in 1 : vector<8x4xf32>, vector<8x4xf32> -> vector<8x8xf32>
    %176 = arith.truncf %175 : vector<8x8xf32> to vector<8x8xbf16>
    %cst_31 = arith.constant 0xFF800000 : f32
    %177 = vector.broadcast %cst_31 : f32 to vector<8x1xf32>
    %cst_32 = arith.constant 0.000000e+00 : f32
    %178 = vector.broadcast %cst_32 : f32 to vector<8x1xf32>
    %cst_33 = arith.constant 0.000000e+00 : f32
    %179 = vector.broadcast %cst_33 : f32 to vector<8x8xf32>
    %cst_34 = arith.constant dense<0.000000e+00> : vector<8x8xf32>
    %180 = tpu.matmul %168, %176, %cst_34 {dimension_numbers = #tpu.dot_dimension_numbers<[1], [1], [0], [0], [0, 0, 1, 0], [], []>} : vector<8x8xbf16>, vector<8x8xbf16>, vector<8x8xf32> -> vector<8x8xf32>
    %cst_35 = arith.constant dense<0xFF800000> : vector<8xf32>
    %181 = vector.multi_reduction <maximumf>, %180, %cst_35 [1] : vector<8x8xf32> to vector<8xf32>
    %182 = vector.shape_cast %181 : vector<8xf32> to vector<8x1xf32>
    %183 = arith.maximumf %177, %182 : vector<8x1xf32>
    %184 = arith.subf %177, %183 : vector<8x1xf32>
    %185 = math.exp %184 : vector<8x1xf32>
    %186 = vector.broadcast %183 : vector<8x1xf32> to vector<8x8xf32>
    %187 = arith.subf %180, %186 : vector<8x8xf32>
    %188 = math.exp %187 : vector<8x8xf32>
    %189 = arith.mulf %185, %178 : vector<8x1xf32>
    %cst_36 = arith.constant dense<0.000000e+00> : vector<8xf32>
    %190 = vector.multi_reduction <add>, %188, %cst_36 [1] : vector<8x8xf32> to vector<8xf32>
    %191 = vector.shape_cast %190 : vector<8xf32> to vector<8x1xf32>
    %192 = arith.addf %189, %191 : vector<8x1xf32>
    %193 = vector.broadcast %185 : vector<8x1xf32> to vector<8x8xf32>
    %194 = arith.mulf %193, %179 : vector<8x8xf32>
    %195 = arith.truncf %188 : vector<8x8xf32> to vector<8x8xbf16>
    %cst_37 = arith.constant dense<0.000000e+00> : vector<8x8xf32>
    %196 = tpu.matmul %195, %156, %cst_37 {dimension_numbers = #tpu.dot_dimension_numbers<[1], [0], [0], [1], [0, 0, 1, 1], [], []>} : vector<8x8xbf16>, vector<8x8xbf16>, vector<8x8xf32> -> vector<8x8xf32>
    %197 = arith.addf %194, %196 : vector<8x8xf32>
    %198 = tpu.reciprocal %192 {approx = true} : vector<8x1xf32> -> vector<8x1xf32>
    %199 = vector.broadcast %198 : vector<8x1xf32> to vector<8x8xf32>
    %200 = arith.mulf %197, %199 : vector<8x8xf32>
    %201 = tpu.concatenate %56, %104, %152, %200 in 1 : vector<8x8xf32>, vector<8x8xf32>, vector<8x8xf32>, vector<8x8xf32> -> vector<8x32xf32>
    %202 = arith.truncf %201 : vector<8x32xf32> to vector<8x32xbf16>
    %c0_38 = arith.constant 0 : index
    %c0_39 = arith.constant 0 : index
    %203 = vector.load %arg4[%c0_38, %c0_39] : memref<32x32xbf16, #tpu.memory_space<vmem>>, vector<32x32xbf16>
    %cst_40 = arith.constant dense<0.000000e+00> : vector<8x32xf32>
    %204 = tpu.matmul %202, %203, %cst_40 {dimension_numbers = #tpu.dot_dimension_numbers<[1], [0], [0], [1], [0, 0, 1, 1], [], []>} : vector<8x32xbf16>, vector<32x32xbf16>, vector<8x32xf32> -> vector<8x32xf32>
    %c0_41 = arith.constant 0 : index
    %c0_42 = arith.constant 0 : index
    %205 = vector.load %arg5[%c0_41, %c0_42] : memref<1x32xf32, #tpu.memory_space<vmem>>, vector<1x32xf32>
    %206 = vector.broadcast %205 : vector<1x32xf32> to vector<8x32xf32>
    %207 = arith.addf %204, %206 : vector<8x32xf32>
    %c0_43 = arith.constant 0 : index
    %c0_44 = arith.constant 0 : index
    %c0_45 = arith.constant 0 : index
    %208 = vector.load %arg8[%c0_43, %c0_44, %c0_45] : memref<1x8x32xf32, #tpu.memory_space<vmem>>, vector<1x8x32xf32>
    %209 = vector.shape_cast %208 : vector<1x8x32xf32> to vector<8x32xf32>
    %210 = vector.shape_cast %207 : vector<8x32xf32> to vector<1x8x32xf32>
    tpu.vector_store %arg8[%c0_43, %c0_44, %c0_45], %210 {strides = array<i32>} : memref<1x8x32xf32, #tpu.memory_space<vmem>>, vector<1x8x32xf32>,
    return
  }
  func.func @transform_0(%arg0: i32) -> (i32, i32, i32) {
    %c0_i32 = arith.constant 0 : i32
    %c0_i32_0 = arith.constant 0 : i32
    %c0_i32_1 = arith.constant 0 : i32
    return %arg0, %c0_i32, %c0_i32_0 : i32, i32, i32
  }
  func.func @transform_1(%arg0: i32) -> (i32, i32) {
    %c0_i32 = arith.constant 0 : i32
    %c0_i32_0 = arith.constant 0 : i32
    %c0_i32_1 = arith.constant 0 : i32
    return %c0_i32, %c0_i32_0 : i32, i32
  }
  func.func @transform_2(%arg0: i32) -> (i32, i32) {
    %c0_i32 = arith.constant 0 : i32
    %c0_i32_0 = arith.constant 0 : i32
    %c0_i32_1 = arith.constant 0 : i32
    return %c0_i32, %c0_i32_0 : i32, i32
  }
  func.func @transform_3(%arg0: i32) -> (i32, i32) {
    %c0_i32 = arith.constant 0 : i32
    %c0_i32_0 = arith.constant 0 : i32
    %c0_i32_1 = arith.constant 0 : i32
    return %c0_i32, %c0_i32_0 : i32, i32
  }
  func.func @transform_4(%arg0: i32) -> (i32, i32) {
    %c0_i32 = arith.constant 0 : i32
    %c0_i32_0 = arith.constant 0 : i32
    %c0_i32_1 = arith.constant 0 : i32
    return %c0_i32, %c0_i32_0 : i32, i32
  }
  func.func @transform_5(%arg0: i32) -> (i32, i32) {
    %c0_i32 = arith.constant 0 : i32
    %c0_i32_0 = arith.constant 0 : i32
    %c0_i32_1 = arith.constant 0 : i32
    return %c0_i32, %c0_i32_0 : i32, i32
  }
  func.func @transform_6(%arg0: i32) -> (i32, i32) {
    %c0_i32 = arith.constant 0 : i32
    %c0_i32_0 = arith.constant 0 : i32
    %c0_i32_1 = arith.constant 0 : i32
    return %c0_i32, %c0_i32_0 : i32, i32
  }
  func.func @transform_7(%arg0: i32) -> (i32, i32, i32) {
    %c0_i32 = arith.constant 0 : i32
    %c0_i32_0 = arith.constant 0 : i32
    %c0_i32_1 = arith.constant 0 : i32
    return %arg0, %c0_i32, %c0_i32_0 : i32, i32, i32
  }
}

</mosaic_0001>

<llo_original>
// kernel: tpu_custom_call.1
$region0: #{tpu_custom_call.1}
  #allocation0 [shape = 'u32[]', space=smem, size = 0x4, offset = 0x4, fixed_abs, tag = 'smem constant byte address 0x4 - core index']
  #allocation1 [shape = 'u32[144,128]{1,0:T(1,128)}', space=vmem, size = 0x12000, scoped, tag = 'internal scratch']
  %s0 = inlined_call_operand.vmem [shape: bf16[2,8,32], index: 0, kind: input, shape index: {}]
  %s1 = inlined_call_operand.vmem [shape: bf16[32,96], index: 1, kind: input, shape index: {}]
  %s2 = inlined_call_operand.vmem [shape: f32[1,96], index: 2, kind: input, shape index: {}]
  %s3 = inlined_call_operand.hbm [shape: bf16[32,32], index: 3, kind: input, shape index: {}]
  %s4 = inlined_call_operand.hbm [shape: f32[1,32], index: 4, kind: input, shape index: {}]
  %s5 = inlined_call_operand.vmem [shape: f32[8,4], index: 5, kind: input, shape index: {}]
  %s6 = inlined_call_operand.vmem [shape: f32[8,4], index: 6, kind: input, shape index: {}]
  %s7 = inlined_call_operand.hbm [shape: f32[2,8,32], index: 7, kind: output, shape index: {}]
  %s8 = sld [smem:[#allocation0]]
  $region69: #{tpu_custom_call.1} parent=0
    _
  %s10 = ssub.s32 1, %s8
  %s11 = scalar_select 0, %s10, %s8
  $region1: #{tpu_custom_call.1} parent=0
    #allocation2 [shape = 'u8[8192]{0}', space=vmem, size = 0x2000, scoped, tag = 'input window, operand 3, single buffered']
    #allocation3 [shape = 's32[2]{0}', space=sflag, size = 0x8, scoped, tag = 'scoped memory for tpu_custom_call.1']
    #allocation4 [shape = 's32[2]{0}', space=sflag, size = 0x8, scoped, tag = 'scoped memory for tpu_custom_call.1']
    #allocation5 [shape = 'u8[512]{0}', space=vmem, size = 0x400, scoped, tag = 'input window, operand 4, single buffered']
    #allocation6 [shape = 's32[1]{0}', space=sflag, size = 0x4, scoped, tag = 'scoped memory for tpu_custom_call.1']
    #allocation7 [shape = 'u8[8192]{0}', space=vmem, size = 0x2000, scoped, tag = 'output window, operand 0']
    %12 = vsyncpa [#allocation3], 0
    %13 = vsyncpa [#allocation6], 0
    %14 = vsyncpa [#allocation4], 0
    %s15 = scalar_lea.sflag [#allocation4], 1
    %16 = vsyncpa %s15, 0
    loop: start=0, step=1, limit=4
    $region2: #{tpu_custom_call.1} parent=1 // loop_pre_header
      _
    $region3: #{tpu_custom_call.1} parent=1 // loop_header
      %s18 = sphi 0, %s22
      %p19 = scmp.ge.s32.totalorder %s18, 4
      %s28 = sphi 0, %s30
      %s31 = sphi 0, %s28
      %s32 = sphi 0, %s31
      %s48 = sphi 0, %s32
      %s52 = sphi 0, %s52
      %s54 = sphi 0, %s52
      %s55 = sphi 0, %s54
      %s69 = sphi 0, %s55
      %s73 = sphi 0, %s73
      %s75 = sphi 0, %s73
      %s76 = sphi 0, %s75
      %s90 = sphi 0, %s76
      %s94 = sphi 0, %s94
      %s96 = sphi 0, %s94
      %s97 = sphi 0, %s96
      %s111 = sphi 0, %s97
      %s115 = sphi 0, %s115
      %s117 = sphi 0, %s115
      %s118 = sphi 0, %s117
      %s132 = sphi 0, %s118
      %s136 = sphi 0, %s136
      %s138 = sphi 0, %s136
      %s139 = sphi 0, %s138
      %s153 = sphi 0, %s139
      %s157 = sphi 0, %s157
      %s159 = sphi 0, %s157
      %s160 = sphi 0, %s159
      %s174 = sphi 0, %s160
      %s180 = sphi 0, %s182
      %s183 = sphi 0, %s180
      %s184 = sphi 0, %s183
      %s200 = sphi 0, %s184
    $region4: #{tpu_custom_call.1} parent=1 // loop_header_branch
      %21 = sbr.rel (%p19) target = $region8
    $region5: #{tpu_custom_call.1} parent=1 // loop_body
      %s23 = ssub.s32 %s18, 1
      %s24 = ssub.s32 %s18, 2
      %s25 = sadd.s32 %s18, 1
      %s26 = ssub.s32 %s18, %s25
      %p27 = scmp.eq.s32.totalorder %s26, 0
      %s29 = sadd.s32 %s28, 1
      %s30 = scalar_select %p27, %s28, %s29
      %p33 = pneg %p27
      %p34 = scmp.eq.s32.totalorder %s18, 1
      %p35 = por %p33, %p34
      %p36 = scmp.ne.s32.totalorder %s28, %s31
      %p37 = scmp.eq.s32.totalorder %s18, 0
      %p38 = por %p36, %p37
      %p39 = scmp.ne.s32.totalorder %s28, %s31
      %p40 = scmp.eq.s32.totalorder %s23, 1
      %p41 = por %p39, %p40
      %p42 = scmp.ne.s32.totalorder %s31, %s32
      %p43 = scmp.eq.s32.totalorder %s23, 0
      %p44 = por %p42, %p43
      %p45 = scmp.ne.s32.totalorder %s31, %s32
      %p46 = scmp.eq.s32.totalorder %s24, 1
      %p47 = por %p45, %p46
      %p49 = scmp.ne.s32.totalorder %s32, %s48
      %p50 = scmp.eq.s32.totalorder %s24, 0
      %p51 = por %p49, %p50
      %s53 = sadd.s32 %s52, 1
      %p56 = scmp.eq.s32.totalorder %s18, 1
      %p57 = scmp.ne.s32.totalorder %s52, %s54
      %p58 = scmp.eq.s32.totalorder %s18, 0
      %p59 = por %p57, %p58
      %p60 = scmp.ne.s32.totalorder %s52, %s54
      %p61 = scmp.eq.s32.totalorder %s23, 1
      %p62 = por %p60, %p61
      %p63 = scmp.ne.s32.totalorder %s54, %s55
      %p64 = scmp.eq.s32.totalorder %s23, 0
      %p65 = por %p63, %p64
      %p66 = scmp.ne.s32.totalorder %s54, %s55
      %p67 = scmp.eq.s32.totalorder %s24, 1
      %p68 = por %p66, %p67
      %p70 = scmp.ne.s32.totalorder %s55, %s69
      %p71 = scmp.eq.s32.totalorder %s24, 0
      %p72 = por %p70, %p71
      %s74 = sadd.s32 %s73, 1
      %p77 = scmp.eq.s32.totalorder %s18, 1
      %p78 = scmp.ne.s32.totalorder %s73, %s75
      %p79 = scmp.eq.s32.totalorder %s18, 0
      %p80 = por %p78, %p79
      %p81 = scmp.ne.s32.totalorder %s73, %s75
      %p82 = scmp.eq.s32.totalorder %s23, 1
      %p83 = por %p81, %p82
      %p84 = scmp.ne.s32.totalorder %s75, %s76
      %p85 = scmp.eq.s32.totalorder %s23, 0
      %p86 = por %p84, %p85
      %p87 = scmp.ne.s32.totalorder %s75, %s76
      %p88 = scmp.eq.s32.totalorder %s24, 1
      %p89 = por %p87, %p88
      %p91 = scmp.ne.s32.totalorder %s76, %s90
      %p92 = scmp.eq.s32.totalorder %s24, 0
      %p93 = por %p91, %p92
      %s95 = sadd.s32 %s94, 1
      %p98 = scmp.eq.s32.totalorder %s18, 1
      %p99 = scmp.ne.s32.totalorder %s94, %s96
      %p100 = scmp.eq.s32.totalorder %s18, 0
      %p101 = por %p99, %p100
      %p102 = scmp.ne.s32.totalorder %s94, %s96
      %p103 = scmp.eq.s32.totalorder %s23, 1
      %p104 = por %p102, %p103
      %p105 = scmp.ne.s32.totalorder %s96, %s97
      %p106 = scmp.eq.s32.totalorder %s23, 0
      %p107 = por %p105, %p106
      %p108 = scmp.ne.s32.totalorder %s96, %s97
      %p109 = scmp.eq.s32.totalorder %s24, 1
      %p110 = por %p108, %p109
      %p112 = scmp.ne.s32.totalorder %s97, %s111
      %p113 = scmp.eq.s32.totalorder %s24, 0
      %p114 = por %p112, %p113
      %s116 = sadd.s32 %s115, 1
      %p119 = scmp.eq.s32.totalorder %s18, 1
      %p120 = scmp.ne.s32.totalorder %s115, %s117
      %p121 = scmp.eq.s32.totalorder %s18, 0
      %p122 = por %p120, %p121
      %p123 = scmp.ne.s32.totalorder %s115, %s117
      %p124 = scmp.eq.s32.totalorder %s23, 1
      %p125 = por %p123, %p124
      %p126 = scmp.ne.s32.totalorder %s117, %s118
      %p127 = scmp.eq.s32.totalorder %s23, 0
      %p128 = por %p126, %p127
      %p129 = scmp.ne.s32.totalorder %s117, %s118
      %p130 = scmp.eq.s32.totalorder %s24, 1
      %p131 = por %p129, %p130
      %p133 = scmp.ne.s32.totalorder %s118, %s132
      %p134 = scmp.eq.s32.totalorder %s24, 0
      %p135 = por %p133, %p134
      %s137 = sadd.s32 %s136, 1
      %p140 = scmp.eq.s32.totalorder %s18, 1
      %p141 = scmp.ne.s32.totalorder %s136, %s138
      %p142 = scmp.eq.s32.totalorder %s18, 0
      %p143 = por %p141, %p142
      %p144 = scmp.ne.s32.totalorder %s136, %s138
      %p145 = scmp.eq.s32.totalorder %s23, 1
      %p146 = por %p144, %p145
      %p147 = scmp.ne.s32.totalorder %s138, %s139
      %p148 = scmp.eq.s32.totalorder %s23, 0
      %p149 = por %p147, %p148
      %p150 = scmp.ne.s32.totalorder %s138, %s139
      %p151 = scmp.eq.s32.totalorder %s24, 1
      %p152 = por %p150, %p151
      %p154 = scmp.ne.s32.totalorder %s139, %s153
      %p155 = scmp.eq.s32.totalorder %s24, 0
      %p156 = por %p154, %p155
      %s158 = sadd.s32 %s157, 1
      %p161 = scmp.eq.s32.totalorder %s18, 1
      %p162 = scmp.ne.s32.totalorder %s157, %s159
      %p163 = scmp.eq.s32.totalorder %s18, 0
      %p164 = por %p162, %p163
      %p165 = scmp.ne.s32.totalorder %s157, %s159
      %p166 = scmp.eq.s32.totalorder %s23, 1
      %p167 = por %p165, %p166
      %p168 = scmp.ne.s32.totalorder %s159, %s160
      %p169 = scmp.eq.s32.totalorder %s23, 0
      %p170 = por %p168, %p169
      %p171 = scmp.ne.s32.totalorder %s159, %s160
      %p172 = scmp.eq.s32.totalorder %s24, 1
      %p173 = por %p171, %p172
      %p175 = scmp.ne.s32.totalorder %s160, %s174
      %p176 = scmp.eq.s32.totalorder %s24, 0
      %p177 = por %p175, %p176
      %s178 = ssub.s32 %s18, %s25
      %p179 = scmp.eq.s32.totalorder %s178, 0
      %s181 = sadd.s32 %s180, 1
      %s182 = scalar_select %p179, %s180, %s181
      %p185 = pneg %p179
      %p186 = scmp.eq.s32.totalorder %s18, 1
      %p187 = por %p185, %p186
      %p188 = scmp.ne.s32.totalorder %s180, %s183
      %p189 = scmp.eq.s32.totalorder %s18, 0
      %p190 = por %p188, %p189
      %p191 = scmp.ne.s32.totalorder %s180, %s183
      %p192 = scmp.eq.s32.totalorder %s23, 1
      %p193 = por %p191, %p192
      %p194 = scmp.ne.s32.totalorder %s183, %s184
      %p195 = scmp.eq.s32.totalorder %s23, 0
      %p196 = por %p194, %p195
      %p197 = scmp.ne.s32.totalorder %s183, %s184
      %p198 = scmp.eq.s32.totalorder %s24, 1
      %p199 = por %p197, %p198
      %p201 = scmp.ne.s32.totalorder %s184, %s200
      %p202 = scmp.eq.s32.totalorder %s24, 0
      %p203 = por %p201, %p202
      %p204 = scmp.le.s32.totalorder 1, %s18
      %p205 = scmp.lt.s32.totalorder %s18, 3
      %p206 = pnand %p204, %p205
      %p207 = pneg %p206
      // Predicated region
      $region9: #{tpu_custom_call.1} parent=5 // pred_check
        _
      $region10: #{tpu_custom_call.1} parent=5 // pred_check_branch
        %209 = sbr.rel (%p206) target = $region12
      $region11: #{tpu_custom_call.1} parent=5 // pred_region
        %s210 = ssub.s32 %s18, 1
        // Predicated region
        $region13: #{tpu_custom_call.1} parent=11 // pred_check
          %p211 = pneg %p65
        $region14: #{tpu_custom_call.1} parent=11 // pred_check_branch
          %213 = sbr.rel (%p211) target = $region16
        $region15: #{tpu_custom_call.1} parent=11 // pred_region
          _
        $region16: #{tpu_custom_call.1} parent=11 // pred_fallthru
          _
        // Predicated region
        $region17: #{tpu_custom_call.1} parent=11 // pred_check
          %p214 = pneg %p86
        $region18: #{tpu_custom_call.1} parent=11 // pred_check_branch
          %216 = sbr.rel (%p214) target = $region20
        $region19: #{tpu_custom_call.1} parent=11 // pred_region
          _
        $region20: #{tpu_custom_call.1} parent=11 // pred_fallthru
          _
        // Predicated region
        $region21: #{tpu_custom_call.1} parent=11 // pred_check
          %p217 = pneg %p107
        $region22: #{tpu_custom_call.1} parent=11 // pred_check_branch
          %219 = sbr.rel (%p217) target = $region24
        $region23: #{tpu_custom_call.1} parent=11 // pred_region
          %s221 = ssub.s32 256, 256
          %222 = vsyncadd [#allocation3], %s221
          %s223 = sshll.u32 [#allocation2], 4
          %s224 = int_to_ptr.vmem [resolvable:$true] %s223
          %229 = dma.hbm_to_vmem [thread:$0]  %s3, 256, %s224, [#allocation3], 64, 64, 4
        $region24: #{tpu_custom_call.1} parent=11 // pred_fallthru
          _
        // Predicated region
        $region25: #{tpu_custom_call.1} parent=11 // pred_check
          %p230 = pneg %p128
        $region26: #{tpu_custom_call.1} parent=11 // pred_check_branch
          %232 = sbr.rel (%p230) target = $region28
        $region27: #{tpu_custom_call.1} parent=11 // pred_region
          %s234 = ssub.s32 16, 16
          %235 = vsyncadd [#allocation6], %s234
          %s237 = sshll.u32 [#allocation5], 4
          %s238 = int_to_ptr.vmem [resolvable:$true] %s237
          %240 = dma.hbm_to_vmem [thread:$0]  %s4, 16, %s238, [#allocation6]
        $region28: #{tpu_custom_call.1} parent=11 // pred_fallthru
          _
        // Predicated region
        $region29: #{tpu_custom_call.1} parent=11 // pred_check
          %p241 = pneg %p149
        $region30: #{tpu_custom_call.1} parent=11 // pred_check_branch
          %243 = sbr.rel (%p241) target = $region32
        $region31: #{tpu_custom_call.1} parent=11 // pred_region
          _
        $region32: #{tpu_custom_call.1} parent=11 // pred_fallthru
          _
        // Predicated region
        $region33: #{tpu_custom_call.1} parent=11 // pred_check
          %p244 = pneg %p170
        $region34: #{tpu_custom_call.1} parent=11 // pred_check_branch
          %246 = sbr.rel (%p244) target = $region36
        $region35: #{tpu_custom_call.1} parent=11 // pred_region
          _
        $region36: #{tpu_custom_call.1} parent=11 // pred_fallthru
          _
      $region12: #{tpu_custom_call.1} parent=5 // pred_fallthru
        _
      %p247 = scmp.lt.s32.totalorder %s18, 2
      // Predicated region
      $region37: #{tpu_custom_call.1} parent=5 // pred_check
        %p248 = pneg %p247
      $region38: #{tpu_custom_call.1} parent=5 // pred_check_branch
        %250 = sbr.rel (%p248) target = $region40
      $region39: #{tpu_custom_call.1} parent=5 // pred_region
        // Predicated region
        $region41: #{tpu_custom_call.1} parent=39 // pred_check
          %p251 = pneg %p38
        $region42: #{tpu_custom_call.1} parent=39 // pred_check_branch
          %253 = sbr.rel (%p251) target = $region44
        $region43: #{tpu_custom_call.1} parent=39 // pred_region
          %p254 = scmp.lt.s32.totalorder %s18, 1
          %s255 = scalar_select %p254, %s18, 1
          %s256 = smul.addr %s255, 4
          %s257 = scalar_lea.vmem %s0, %s256
        $region44: #{tpu_custom_call.1} parent=39 // pred_fallthru
          _
      $region40: #{tpu_custom_call.1} parent=5 // pred_fallthru
        _
      %p258 = scmp.le.s32.totalorder 1, %s18
      %p259 = scmp.lt.s32.totalorder %s18, 3
      %p260 = pnand %p258, %p259
      %p261 = pneg %p260
      // Predicated region
      $region45: #{tpu_custom_call.1} parent=5 // pred_check
        _
      $region46: #{tpu_custom_call.1} parent=5 // pred_check_branch
        %263 = sbr.rel (%p260) target = $region48
      $region47: #{tpu_custom_call.1} parent=5 // pred_region
        %s264 = ssub.s32 %s18, 1
        // Predicated region
        $region49: #{tpu_custom_call.1} parent=47 // pred_check
          %p265 = pneg %p107
        $region50: #{tpu_custom_call.1} parent=47 // pred_check_branch
          %267 = sbr.rel (%p265) target = $region52
        $region51: #{tpu_custom_call.1} parent=47 // pred_region
          %268 = dma.done [#allocation3], 256
        $region52: #{tpu_custom_call.1} parent=47 // pred_fallthru
          _
        // Predicated region
        $region53: #{tpu_custom_call.1} parent=47 // pred_check
          %p269 = pneg %p128
        $region54: #{tpu_custom_call.1} parent=47 // pred_check_branch
          %271 = sbr.rel (%p269) target = $region56
        $region55: #{tpu_custom_call.1} parent=47 // pred_region
          %272 = dma.done [#allocation6], 16
        $region56: #{tpu_custom_call.1} parent=47 // pred_fallthru
          _
        %p273 = scmp.lt.s32.totalorder %s23, 1
        %s274 = scalar_select %p273, %s23, 1
        %s275 = smul.addr %s274, 4
        %s276 = scalar_lea.vmem %s0, %s275
        %p277 = pneg %p44
        %p278 = pneg %p41
        %p279 = pneg %p65
        %p280 = pneg %p62
        %p281 = pneg %p86
        %p282 = pneg %p83
        %p283 = pneg %p107
        %p284 = pneg %p104
        %p285 = pneg %p128
        %p286 = pneg %p125
        %p287 = pneg %p149
        %p288 = pneg %p146
        %p289 = pneg %p170
        %p290 = pneg %p167
        %p291 = pneg %p196
        %p292 = pneg %p193
        %s293 = sand.u32 %s183, 1
        %s294 = scalar_lea.sflag [#allocation4], %s293
        %s295 = sand.u32 %s183, 1
        %s296 = smul.addr %s295, 8
        %s297 = scalar_lea.vmem [#allocation7], %s296
        %p298 = scmp.lt.s32.totalorder %s23, 1
        %s299 = scalar_select %p298, %s23, 1
        %s300 = smul.addr %s299, 4
        %s301 = scalar_lea.vmem %s0, %s300
        %v303 = vld [vmem:[%s301] sm:$0xf]
        %v304 = vld [vmem:[%s1] sm:$0xf]
        %v305 = vld [vmem:[%s1 + $0x4] sm:$0xf]
        %v306 = vld [vmem:[%s1 + $0x8] sm:$0xf]
        %v307 = vld [vmem:[%s1 + $0xc] sm:$0xf]
        %v308 = vld [vmem:[%s2] sm:$0x1]
        %v310 = vlaneseq
        %v311 = vshrl.u32 %v310, 7
        %v312 = vsub.s32 0, %v311
        %v313 = vrot.slane %v308, %v312
        %v319 = vunpack.c.l.b16 %v304
        %v320 = vunpack.c.l.b16 %v305
        %v321 = vunpack.c.l.b16 %v306
        %v322 = vunpack.c.l.b16 %v307
        %v323 = vpack.c.b16 %v320, %v319
        %v324 = vpack.c.b16 %v322, %v321
        %vm327 = vcmask 261120
        %v329 = vsel %vm327, %v303, 0
        %331 = vmatprep.subr.bf16.mxu0 0
        %332 = vmatpush1.bf16.msra.mxu0 0
        %333 = vmatprep.subr.bf16.mxu0 0
        %334 = vmatpush1.bf16.msra.mxu0 0
        %335 = vmatprep.subr.bf16.mxu0 0
        %336 = vmatpush1.bf16.msra.mxu0 0
        %337 = vmatprep.subr.bf16.mxu0 0
        %338 = vmatpush1.bf16.msra.mxu0 0
        %339 = vmatprep.subr.bf16.mxu0 0
        %340 = vmatpush1.bf16.msra.mxu0 0
        %341 = vmatprep.subr.bf16.mxu0 0
        %342 = vmatpush1.bf16.msra.mxu0 0
        %343 = vmatprep.subr.bf16.mxu0 0
        %344 = vmatpush1.bf16.msra.mxu0 %v324
        %345 = vmatprep.subr.bf16.mxu0 0
        %346 = vmatpush1.bf16.msra.mxu0 %v323
        %347 = vmatprep.subr.bf16.mxu0 0
        %348 = vmatpush2.bf16.msra.mxu0 0
        %349 = vmatprep.subr.bf16.mxu0 0
        %350 = vmatpush2.bf16.msra.mxu0 0
        %351 = vmatprep.subr.bf16.mxu0 0
        %352 = vmatpush2.bf16.msra.mxu0 0
        %353 = vmatprep.subr.bf16.mxu0 0
        %354 = vmatpush2.bf16.msra.mxu0 0
        %355 = vmatprep.subr.bf16.mxu0 0
        %356 = vmatpush2.bf16.msra.mxu0 0
        %357 = vmatprep.subr.bf16.mxu0 0
        %358 = vmatpush2.bf16.msra.mxu0 0
        %359 = vmatprep.subr.bf16.mxu0 0
        %360 = vmatpush2.bf16.msra.mxu0 0
        %361 = vmatprep.subr.bf16.mxu0 0
        %362 = vmatpush2.bf16.msra.mxu0 0
        %363 = vmatprep.mubr.bf16.mxu0 0
        %364 = vmatmul.mubr.bf16.gmra.mxu0 %v329
        %v365 = vpop.f32.mrf.mxu0
        %v366 = vadd.f32 %v313, %v365
        %v367 = vpop.f32.mrf.mxu0
        %v368 = vpop.f32.mrf.mxu0
        %v369 = vpop.f32.mrf.mxu0
        %370 = vdwg.mxu0
        %v371 = vld [vmem:[%s5] sm:$0xff]
        %v372 = vld [vmem:[%s6] sm:$0xff]
        %v373 = vpack.c.bf16 %v366, %v366
        %v374 = vmul.f32 %v366, %v371
        %376 = vrot.lane.b32.xlu0 %v372, 4
        %v377 = vpop.permute.xlu0 %376
        %v379 = vmul.f32 %v366, %v377
        %381 = vrot.lane.b32.xlu0 %v379, 124
        %v382 = vpop.permute.xlu0 %381
        %v384 = vsub.f32 %v374, %v382
        %v385 = vmul.f32 %v366, %v372
        %387 = vrot.lane.b32.xlu0 %v371, 4
        %v388 = vpop.permute.xlu0 %387
        %v390 = vmul.f32 %v366, %v388
        %392 = vrot.lane.b32.xlu0 %v390, 124
        %v393 = vpop.permute.xlu0 %392
        %v395 = vadd.f32 %v385, %v393
        %397 = vrot.lane.b32.xlu0 %v395, 4
        %v398 = vpop.permute.xlu0 %397
        %vm400 = vcmask 31744
        %v401 = vsel %vm400, %v384, %v398
        %v402 = vpack.c.bf16 %v401, %v401
        %403 = vrot.lane.b32.xlu0 %v371, 32
        %v404 = vpop.permute.xlu0 %403
        %v406 = vmul.f32 %v366, %v404
        %407 = vrot.lane.b32.xlu0 %v372, 36
        %v408 = vpop.permute.xlu0 %407
        %v410 = vmul.f32 %v366, %v408
        %412 = vrot.lane.b32.xlu0 %v410, 124
        %v413 = vpop.permute.xlu0 %412
        %v415 = vsub.f32 %v406, %v413
        %416 = vrot.lane.b32.xlu0 %v372, 32
        %v417 = vpop.permute.xlu0 %416
        %v419 = vmul.f32 %v366, %v417
        %420 = vrot.lane.b32.xlu0 %v371, 36
        %v421 = vpop.permute.xlu0 %420
        %v423 = vmul.f32 %v366, %v421
        %425 = vrot.lane.b32.xlu0 %v423, 124
        %v426 = vpop.permute.xlu0 %425
        %v428 = vadd.f32 %v419, %v426
        %430 = vrot.lane.b32.xlu0 %v415, 96
        %v431 = vpop.permute.xlu0 %430
        %434 = vrot.lane.b32.xlu0 %v428, 100
        %v435 = vpop.permute.xlu0 %434
        %v437 = vsel %vm400, %v431, %v435
        %v438 = vpack.c.bf16 %v437, %v437
        %vm439 = vcmask 64512
        %v441 = vsel %vm439, %v402, 0
        %v444 = vsel %vm439, %v438, 0
        %446 = vmatprep.subr.bf16.mxu0 0
        %447 = vmatpush1.bf16.xpose.msra.mxu0 0
        %448 = vmatprep.subr.bf16.mxu0 0
        %449 = vmatpush1.bf16.xpose.msra.mxu0 0
        %450 = vmatprep.subr.bf16.mxu0 0
        %451 = vmatpush1.bf16.xpose.msra.mxu0 0
        %452 = vmatprep.subr.bf16.mxu0 0
        %453 = vmatpush1.bf16.xpose.msra.mxu0 0
        %454 = vmatprep.subr.bf16.mxu0 0
        %455 = vmatpush1.bf16.xpose.msra.mxu0 0
        %456 = vmatprep.subr.bf16.mxu0 0
        %457 = vmatpush1.bf16.xpose.msra.mxu0 0
        %458 = vmatprep.subr.bf16.mxu0 0
        %459 = vmatpush1.bf16.xpose.msra.mxu0 0
        %460 = vmatprep.subr.bf16.mxu0 0
        %461 = vmatpush1.bf16.xpose.msra.mxu0 %v444
        %462 = vmatprep.subr.bf16.mxu0 0
        %463 = vmatpush2.bf16.xpose.msra.mxu0 0
        %464 = vmatprep.subr.bf16.mxu0 0
        %465 = vmatpush2.bf16.xpose.msra.mxu0 0
        %466 = vmatprep.subr.bf16.mxu0 0
        %467 = vmatpush2.bf16.xpose.msra.mxu0 0
        %468 = vmatprep.subr.bf16.mxu0 0
        %469 = vmatpush2.bf16.xpose.msra.mxu0 0
        %470 = vmatprep.subr.bf16.mxu0 0
        %471 = vmatpush2.bf16.xpose.msra.mxu0 0
        %472 = vmatprep.subr.bf16.mxu0 0
        %473 = vmatpush2.bf16.xpose.msra.mxu0 0
        %474 = vmatprep.subr.bf16.mxu0 0
        %475 = vmatpush2.bf16.xpose.msra.mxu0 0
        %476 = vmatprep.subr.bf16.mxu0 0
        %477 = vmatpush2.bf16.xpose.msra.mxu0 0
        %478 = vmatprep.mubr.bf16.mxu0 0
        %479 = vmatmul.mubr.bf16.gmra.mxu0 %v441
        %v480 = vpop.f32.mrf.mxu0
        %v481 = vadd.f32 0.0, %v480
        %v482 = vpop.f32.mrf.mxu0
        %v483 = vpop.f32.mrf.mxu0
        %v484 = vpop.f32.mrf.mxu0
        %485 = vdwg.mxu0
        %v486 = vsel %vm439, %v481, -inf
        %487 = vmax.xlane.f32.xlu0 %v486
        %v488 = vpop.xlane.xlu0 %487
        %v489 = vsub.f32 -inf, %v488
        %v490 = vmul.f32 %v489, 1.442695
        %v491 = vpow.pop %v490
        %v492 = vsub.f32 %v481, %v488
        %v493 = vmul.f32 %v492, 1.442695
        %v494 = vpow.pop %v493
        %v495 = vmul.f32 %v491, 0.0
        %v496 = vsel %vm439, %v494, 0.0
        %497 = vadd.xlane.f32.xlu0 %v496
        %v498 = vpop.xlane.xlu0 %497
        %v499 = vadd.f32 %v495, %v498
        %v500 = vpack.c.bf16 %v494, %v494
        %502 = vrot.lane.b32.xlu0 %v373, 64
        %v503 = vpop.permute.xlu0 %502
        %v505 = vsel %vm439, %v500, 0
        %vm507 = vcmask 1043456
        %v509 = vsel %vm507, %v503, 0
        %511 = vmatprep.subr.bf16.mxu0 0
        %512 = vmatpush1.bf16.msra.mxu0 0
        %513 = vmatprep.subr.bf16.mxu0 0
        %514 = vmatpush1.bf16.msra.mxu0 0
        %515 = vmatprep.subr.bf16.mxu0 0
        %516 = vmatpush1.bf16.msra.mxu0 0
        %517 = vmatprep.subr.bf16.mxu0 0
        %518 = vmatpush1.bf16.msra.mxu0 0
        %519 = vmatprep.subr.bf16.mxu0 0
        %520 = vmatpush1.bf16.msra.mxu0 0
        %521 = vmatprep.subr.bf16.mxu0 0
        %522 = vmatpush1.bf16.msra.mxu0 0
        %523 = vmatprep.subr.bf16.mxu0 0
        %524 = vmatpush1.bf16.msra.mxu0 0
        %525 = vmatprep.subr.bf16.mxu0 0
        %526 = vmatpush1.bf16.msra.mxu0 %v509
        %527 = vmatprep.subr.bf16.mxu0 0
        %528 = vmatpush2.bf16.msra.mxu0 0
        %529 = vmatprep.subr.bf16.mxu0 0
        %530 = vmatpush2.bf16.msra.mxu0 0
        %531 = vmatprep.subr.bf16.mxu0 0
        %532 = vmatpush2.bf16.msra.mxu0 0
        %533 = vmatprep.subr.bf16.mxu0 0
        %534 = vmatpush2.bf16.msra.mxu0 0
        %535 = vmatprep.subr.bf16.mxu0 0
        %536 = vmatpush2.bf16.msra.mxu0 0
        %537 = vmatprep.subr.bf16.mxu0 0
        %538 = vmatpush2.bf16.msra.mxu0 0
        %539 = vmatprep.subr.bf16.mxu0 0
        %540 = vmatpush2.bf16.msra.mxu0 0
        %541 = vmatprep.subr.bf16.mxu0 0
        %542 = vmatpush2.bf16.msra.mxu0 0
        %543 = vmatprep.mubr.bf16.mxu0 0
        %544 = vmatmul.mubr.bf16.gmra.mxu0 %v505
        %v545 = vpop.f32.mrf.mxu0
        %v546 = vadd.f32 0.0, %v545
        %v547 = vpop.f32.mrf.mxu0
        %v548 = vpop.f32.mrf.mxu0
        %v549 = vpop.f32.mrf.mxu0
        %550 = vdwg.mxu0
        %v551 = vadd.f32 %v495, %v546
        %v552 = vrcp.pop %v499
        %v553 = vmul.f32 %v551, %v552
        %554 = vrot.lane.b32.xlu0 %v371, 8
        %v555 = vpop.permute.xlu0 %554
        %v557 = vmul.f32 %v366, %v555
        %558 = vrot.lane.b32.xlu0 %v372, 12
        %v559 = vpop.permute.xlu0 %558
        %v561 = vmul.f32 %v366, %v559
        %563 = vrot.lane.b32.xlu0 %v561, 124
        %v564 = vpop.permute.xlu0 %563
        %v566 = vsub.f32 %v557, %v564
        %567 = vrot.lane.b32.xlu0 %v372, 8
        %v568 = vpop.permute.xlu0 %567
        %v570 = vmul.f32 %v366, %v568
        %571 = vrot.lane.b32.xlu0 %v371, 12
        %v572 = vpop.permute.xlu0 %571
        %v574 = vmul.f32 %v366, %v572
        %576 = vrot.lane.b32.xlu0 %v574, 124
        %v577 = vpop.permute.xlu0 %576
        %v579 = vadd.f32 %v570, %v577
        %581 = vrot.lane.b32.xlu0 %v566, 120
        %v582 = vpop.permute.xlu0 %581
        %585 = vrot.lane.b32.xlu0 %v579, 124
        %v586 = vpop.permute.xlu0 %585
        %v588 = vsel %vm400, %v582, %v586
        %v589 = vpack.c.bf16 %v588, %v588
        %590 = vrot.lane.b32.xlu0 %v371, 40
        %v591 = vpop.permute.xlu0 %590
        %v593 = vmul.f32 %v366, %v591
        %594 = vrot.lane.b32.xlu0 %v372, 44
        %v595 = vpop.permute.xlu0 %594
        %v597 = vmul.f32 %v366, %v595
        %599 = vrot.lane.b32.xlu0 %v597, 124
        %v600 = vpop.permute.xlu0 %599
        %v602 = vsub.f32 %v593, %v600
        %603 = vrot.lane.b32.xlu0 %v372, 40
        %v604 = vpop.permute.xlu0 %603
        %v606 = vmul.f32 %v366, %v604
        %607 = vrot.lane.b32.xlu0 %v371, 44
        %v608 = vpop.permute.xlu0 %607
        %v610 = vmul.f32 %v366, %v608
        %612 = vrot.lane.b32.xlu0 %v610, 124
        %v613 = vpop.permute.xlu0 %612
        %v615 = vadd.f32 %v606, %v613
        %617 = vrot.lane.b32.xlu0 %v602, 88
        %v618 = vpop.permute.xlu0 %617
        %621 = vrot.lane.b32.xlu0 %v615, 92
        %v622 = vpop.permute.xlu0 %621
        %v624 = vsel %vm400, %v618, %v622
        %v625 = vpack.c.bf16 %v624, %v624
        %v627 = vsel %vm439, %v589, 0
        %v630 = vsel %vm439, %v625, 0
        %632 = vmatprep.subr.bf16.mxu0 0
        %633 = vmatpush1.bf16.xpose.msra.mxu0 0
        %634 = vmatprep.subr.bf16.mxu0 0
        %635 = vmatpush1.bf16.xpose.msra.mxu0 0
        %636 = vmatprep.subr.bf16.mxu0 0
        %637 = vmatpush1.bf16.xpose.msra.mxu0 0
        %638 = vmatprep.subr.bf16.mxu0 0
        %639 = vmatpush1.bf16.xpose.msra.mxu0 0
        %640 = vmatprep.subr.bf16.mxu0 0
        %641 = vmatpush1.bf16.xpose.msra.mxu0 0
        %642 = vmatprep.subr.bf16.mxu0 0
        %643 = vmatpush1.bf16.xpose.msra.mxu0 0
        %644 = vmatprep.subr.bf16.mxu0 0
        %645 = vmatpush1.bf16.xpose.msra.mxu0 0
        %646 = vmatprep.subr.bf16.mxu0 0
        %647 = vmatpush1.bf16.xpose.msra.mxu0 %v630
        %648 = vmatprep.subr.bf16.mxu0 0
        %649 = vmatpush2.bf16.xpose.msra.mxu0 0
        %650 = vmatprep.subr.bf16.mxu0 0
        %651 = vmatpush2.bf16.xpose.msra.mxu0 0
        %652 = vmatprep.subr.bf16.mxu0 0
        %653 = vmatpush2.bf16.xpose.msra.mxu0 0
        %654 = vmatprep.subr.bf16.mxu0 0
        %655 = vmatpush2.bf16.xpose.msra.mxu0 0
        %656 = vmatprep.subr.bf16.mxu0 0
        %657 = vmatpush2.bf16.xpose.msra.mxu0 0
        %658 = vmatprep.subr.bf16.mxu0 0
        %659 = vmatpush2.bf16.xpose.msra.mxu0 0
        %660 = vmatprep.subr.bf16.mxu0 0
        %661 = vmatpush2.bf16.xpose.msra.mxu0 0
        %662 = vmatprep.subr.bf16.mxu0 0
        %663 = vmatpush2.bf16.xpose.msra.mxu0 0
        %664 = vmatprep.mubr.bf16.mxu0 0
        %665 = vmatmul.mubr.bf16.gmra.mxu0 %v627
        %v666 = vpop.f32.mrf.mxu0
        %v667 = vadd.f32 0.0, %v666
        %v668 = vpop.f32.mrf.mxu0
        %v669 = vpop.f32.mrf.mxu0
        %v670 = vpop.f32.mrf.mxu0
        %671 = vdwg.mxu0
        %v672 = vsel %vm439, %v667, -inf
        %673 = vmax.xlane.f32.xlu0 %v672
        %v674 = vpop.xlane.xlu0 %673
        %v675 = vsub.f32 -inf, %v674
        %v676 = vmul.f32 %v675, 1.442695
        %v677 = vpow.pop %v676
        %v678 = vsub.f32 %v667, %v674
        %v679 = vmul.f32 %v678, 1.442695
        %v680 = vpow.pop %v679
        %v681 = vmul.f32 %v677, 0.0
        %v682 = vsel %vm439, %v680, 0.0
        %683 = vadd.xlane.f32.xlu0 %v682
        %v684 = vpop.xlane.xlu0 %683
        %v685 = vadd.f32 %v681, %v684
        %v686 = vpack.c.bf16 %v680, %v680
        %687 = vrot.lane.b32.xlu0 %v373, 56
        %v688 = vpop.permute.xlu0 %687
        %v690 = vsel %vm439, %v686, 0
        %v693 = vsel %vm507, %v688, 0
        %695 = vmatprep.subr.bf16.mxu0 0
        %696 = vmatpush1.bf16.msra.mxu0 0
        %697 = vmatprep.subr.bf16.mxu0 0
        %698 = vmatpush1.bf16.msra.mxu0 0
        %699 = vmatprep.subr.bf16.mxu0 0
        %700 = vmatpush1.bf16.msra.mxu0 0
        %701 = vmatprep.subr.bf16.mxu0 0
        %702 = vmatpush1.bf16.msra.mxu0 0
        %703 = vmatprep.subr.bf16.mxu0 0
        %704 = vmatpush1.bf16.msra.mxu0 0
        %705 = vmatprep.subr.bf16.mxu0 0
        %706 = vmatpush1.bf16.msra.mxu0 0
        %707 = vmatprep.subr.bf16.mxu0 0
        %708 = vmatpush1.bf16.msra.mxu0 0
        %709 = vmatprep.subr.bf16.mxu0 0
        %710 = vmatpush1.bf16.msra.mxu0 %v693
        %711 = vmatprep.subr.bf16.mxu0 0
        %712 = vmatpush2.bf16.msra.mxu0 0
        %713 = vmatprep.subr.bf16.mxu0 0
        %714 = vmatpush2.bf16.msra.mxu0 0
        %715 = vmatprep.subr.bf16.mxu0 0
        %716 = vmatpush2.bf16.msra.mxu0 0
        %717 = vmatprep.subr.bf16.mxu0 0
        %718 = vmatpush2.bf16.msra.mxu0 0
        %719 = vmatprep.subr.bf16.mxu0 0
        %720 = vmatpush2.bf16.msra.mxu0 0
        %721 = vmatprep.subr.bf16.mxu0 0
        %722 = vmatpush2.bf16.msra.mxu0 0
        %723 = vmatprep.subr.bf16.mxu0 0
        %724 = vmatpush2.bf16.msra.mxu0 0
        %725 = vmatprep.subr.bf16.mxu0 0
        %726 = vmatpush2.bf16.msra.mxu0 0
        %727 = vmatprep.mubr.bf16.mxu0 0
        %728 = vmatmul.mubr.bf16.gmra.mxu0 %v690
        %v729 = vpop.f32.mrf.mxu0
        %v730 = vadd.f32 0.0, %v729
        %v731 = vpop.f32.mrf.mxu0
        %v732 = vpop.f32.mrf.mxu0
        %v733 = vpop.f32.mrf.mxu0
        %734 = vdwg.mxu0
        %v735 = vadd.f32 %v681, %v730
        %v736 = vrcp.pop %v685
        %v737 = vmul.f32 %v735, %v736
        %738 = vrot.lane.b32.xlu0 %v371, 16
        %v739 = vpop.permute.xlu0 %738
        %v741 = vmul.f32 %v366, %v739
        %742 = vrot.lane.b32.xlu0 %v372, 20
        %v743 = vpop.permute.xlu0 %742
        %v745 = vmul.f32 %v366, %v743
        %747 = vrot.lane.b32.xlu0 %v745, 124
        %v748 = vpop.permute.xlu0 %747
        %v750 = vsub.f32 %v741, %v748
        %751 = vrot.lane.b32.xlu0 %v372, 16
        %v752 = vpop.permute.xlu0 %751
        %v754 = vmul.f32 %v366, %v752
        %755 = vrot.lane.b32.xlu0 %v371, 20
        %v756 = vpop.permute.xlu0 %755
        %v758 = vmul.f32 %v366, %v756
        %760 = vrot.lane.b32.xlu0 %v758, 124
        %v761 = vpop.permute.xlu0 %760
        %v763 = vadd.f32 %v754, %v761
        %765 = vrot.lane.b32.xlu0 %v750, 112
        %v766 = vpop.permute.xlu0 %765
        %769 = vrot.lane.b32.xlu0 %v763, 116
        %v770 = vpop.permute.xlu0 %769
        %v772 = vsel %vm400, %v766, %v770
        %v773 = vpack.c.bf16 %v772, %v772
        %774 = vrot.lane.b32.xlu0 %v371, 48
        %v775 = vpop.permute.xlu0 %774
        %v777 = vmul.f32 %v366, %v775
        %778 = vrot.lane.b32.xlu0 %v372, 52
        %v779 = vpop.permute.xlu0 %778
        %v781 = vmul.f32 %v366, %v779
        %783 = vrot.lane.b32.xlu0 %v781, 124
        %v784 = vpop.permute.xlu0 %783
        %v786 = vsub.f32 %v777, %v784
        %787 = vrot.lane.b32.xlu0 %v372, 48
        %v788 = vpop.permute.xlu0 %787
        %v790 = vmul.f32 %v366, %v788
        %791 = vrot.lane.b32.xlu0 %v371, 52
        %v792 = vpop.permute.xlu0 %791
        %v794 = vmul.f32 %v366, %v792
        %796 = vrot.lane.b32.xlu0 %v794, 124
        %v797 = vpop.permute.xlu0 %796
        %v799 = vadd.f32 %v790, %v797
        %801 = vrot.lane.b32.xlu0 %v786, 80
        %v802 = vpop.permute.xlu0 %801
        %805 = vrot.lane.b32.xlu0 %v799, 84
        %v806 = vpop.permute.xlu0 %805
        %v808 = vsel %vm400, %v802, %v806
        %v809 = vpack.c.bf16 %v808, %v808
        %v811 = vsel %vm439, %v773, 0
        %v814 = vsel %vm439, %v809, 0
        %816 = vmatprep.subr.bf16.mxu0 0
        %817 = vmatpush1.bf16.xpose.msra.mxu0 0
        %818 = vmatprep.subr.bf16.mxu0 0
        %819 = vmatpush1.bf16.xpose.msra.mxu0 0
        %820 = vmatprep.subr.bf16.mxu0 0
        %821 = vmatpush1.bf16.xpose.msra.mxu0 0
        %822 = vmatprep.subr.bf16.mxu0 0
        %823 = vmatpush1.bf16.xpose.msra.mxu0 0
        %824 = vmatprep.subr.bf16.mxu0 0
        %825 = vmatpush1.bf16.xpose.msra.mxu0 0
        %826 = vmatprep.subr.bf16.mxu0 0
        %827 = vmatpush1.bf16.xpose.msra.mxu0 0
        %828 = vmatprep.subr.bf16.mxu0 0
        %829 = vmatpush1.bf16.xpose.msra.mxu0 0
        %830 = vmatprep.subr.bf16.mxu0 0
        %831 = vmatpush1.bf16.xpose.msra.mxu0 %v814
        %832 = vmatprep.subr.bf16.mxu0 0
        %833 = vmatpush2.bf16.xpose.msra.mxu0 0
        %834 = vmatprep.subr.bf16.mxu0 0
        %835 = vmatpush2.bf16.xpose.msra.mxu0 0
        %836 = vmatprep.subr.bf16.mxu0 0
        %837 = vmatpush2.bf16.xpose.msra.mxu0 0
        %838 = vmatprep.subr.bf16.mxu0 0
        %839 = vmatpush2.bf16.xpose.msra.mxu0 0
        %840 = vmatprep.subr.bf16.mxu0 0
        %841 = vmatpush2.bf16.xpose.msra.mxu0 0
        %842 = vmatprep.subr.bf16.mxu0 0
        %843 = vmatpush2.bf16.xpose.msra.mxu0 0
        %844 = vmatprep.subr.bf16.mxu0 0
        %845 = vmatpush2.bf16.xpose.msra.mxu0 0
        %846 = vmatprep.subr.bf16.mxu0 0
        %847 = vmatpush2.bf16.xpose.msra.mxu0 0
        %848 = vmatprep.mubr.bf16.mxu0 0
        %849 = vmatmul.mubr.bf16.gmra.mxu0 %v811
        %v850 = vpop.f32.mrf.mxu0
        %v851 = vadd.f32 0.0, %v850
        %v852 = vpop.f32.mrf.mxu0
        %v853 = vpop.f32.mrf.mxu0
        %v854 = vpop.f32.mrf.mxu0
        %855 = vdwg.mxu0
        %v856 = vsel %vm439, %v851, -inf
        %857 = vmax.xlane.f32.xlu0 %v856
        %v858 = vpop.xlane.xlu0 %857
        %v859 = vsub.f32 -inf, %v858
        %v860 = vmul.f32 %v859, 1.442695
        %v861 = vpow.pop %v860
        %v862 = vsub.f32 %v851, %v858
        %v863 = vmul.f32 %v862, 1.442695
        %v864 = vpow.pop %v863
        %v865 = vmul.f32 %v861, 0.0
        %v866 = vsel %vm439, %v864, 0.0
        %867 = vadd.xlane.f32.xlu0 %v866
        %v868 = vpop.xlane.xlu0 %867
        %v869 = vadd.f32 %v865, %v868
        %v870 = vpack.c.bf16 %v864, %v864
        %871 = vrot.lane.b32.xlu0 %v373, 48
        %v872 = vpop.permute.xlu0 %871
        %v874 = vsel %vm439, %v870, 0
        %v877 = vsel %vm507, %v872, 0
        %879 = vmatprep.subr.bf16.mxu0 0
        %880 = vmatpush1.bf16.msra.mxu0 0
        %881 = vmatprep.subr.bf16.mxu0 0
        %882 = vmatpush1.bf16.msra.mxu0 0
        %883 = vmatprep.subr.bf16.mxu0 0
        %884 = vmatpush1.bf16.msra.mxu0 0
        %885 = vmatprep.subr.bf16.mxu0 0
        %886 = vmatpush1.bf16.msra.mxu0 0
        %887 = vmatprep.subr.bf16.mxu0 0
        %888 = vmatpush1.bf16.msra.mxu0 0
        %889 = vmatprep.subr.bf16.mxu0 0
        %890 = vmatpush1.bf16.msra.mxu0 0
        %891 = vmatprep.subr.bf16.mxu0 0
        %892 = vmatpush1.bf16.msra.mxu0 0
        %893 = vmatprep.subr.bf16.mxu0 0
        %894 = vmatpush1.bf16.msra.mxu0 %v877
        %895 = vmatprep.subr.bf16.mxu0 0
        %896 = vmatpush2.bf16.msra.mxu0 0
        %897 = vmatprep.subr.bf16.mxu0 0
        %898 = vmatpush2.bf16.msra.mxu0 0
        %899 = vmatprep.subr.bf16.mxu0 0
        %900 = vmatpush2.bf16.msra.mxu0 0
        %901 = vmatprep.subr.bf16.mxu0 0
        %902 = vmatpush2.bf16.msra.mxu0 0
        %903 = vmatprep.subr.bf16.mxu0 0
        %904 = vmatpush2.bf16.msra.mxu0 0
        %905 = vmatprep.subr.bf16.mxu0 0
        %906 = vmatpush2.bf16.msra.mxu0 0
        %907 = vmatprep.subr.bf16.mxu0 0
        %908 = vmatpush2.bf16.msra.mxu0 0
        %909 = vmatprep.subr.bf16.mxu0 0
        %910 = vmatpush2.bf16.msra.mxu0 0
        %911 = vmatprep.mubr.bf16.mxu0 0
        %912 = vmatmul.mubr.bf16.gmra.mxu0 %v874
        %v913 = vpop.f32.mrf.mxu0
        %v914 = vadd.f32 0.0, %v913
        %v915 = vpop.f32.mrf.mxu0
        %v916 = vpop.f32.mrf.mxu0
        %v917 = vpop.f32.mrf.mxu0
        %918 = vdwg.mxu0
        %v919 = vadd.f32 %v865, %v914
        %v920 = vrcp.pop %v869
        %v921 = vmul.f32 %v919, %v920
        %922 = vrot.lane.b32.xlu0 %v371, 24
        %v923 = vpop.permute.xlu0 %922
        %v925 = vmul.f32 %v366, %v923
        %926 = vrot.lane.b32.xlu0 %v372, 28
        %v927 = vpop.permute.xlu0 %926
        %v929 = vmul.f32 %v366, %v927
        %931 = vrot.lane.b32.xlu0 %v929, 124
        %v932 = vpop.permute.xlu0 %931
        %v934 = vsub.f32 %v925, %v932
        %935 = vrot.lane.b32.xlu0 %v372, 24
        %v936 = vpop.permute.xlu0 %935
        %v938 = vmul.f32 %v366, %v936
        %939 = vrot.lane.b32.xlu0 %v371, 28
        %v940 = vpop.permute.xlu0 %939
        %v942 = vmul.f32 %v366, %v940
        %944 = vrot.lane.b32.xlu0 %v942, 124
        %v945 = vpop.permute.xlu0 %944
        %v947 = vadd.f32 %v938, %v945
        %949 = vrot.lane.b32.xlu0 %v934, 104
        %v950 = vpop.permute.xlu0 %949
        %953 = vrot.lane.b32.xlu0 %v947, 108
        %v954 = vpop.permute.xlu0 %953
        %v956 = vsel %vm400, %v950, %v954
        %v957 = vpack.c.bf16 %v956, %v956
        %958 = vrot.lane.b32.xlu0 %v371, 56
        %v959 = vpop.permute.xlu0 %958
        %v961 = vmul.f32 %v366, %v959
        %962 = vrot.lane.b32.xlu0 %v372, 60
        %v963 = vpop.permute.xlu0 %962
        %v965 = vmul.f32 %v366, %v963
        %967 = vrot.lane.b32.xlu0 %v965, 124
        %v968 = vpop.permute.xlu0 %967
        %v970 = vsub.f32 %v961, %v968
        %971 = vrot.lane.b32.xlu0 %v372, 56
        %v972 = vpop.permute.xlu0 %971
        %v974 = vmul.f32 %v366, %v972
        %975 = vrot.lane.b32.xlu0 %v371, 60
        %v976 = vpop.permute.xlu0 %975
        %v978 = vmul.f32 %v366, %v976
        %980 = vrot.lane.b32.xlu0 %v978, 124
        %v981 = vpop.permute.xlu0 %980
        %v983 = vadd.f32 %v974, %v981
        %985 = vrot.lane.b32.xlu0 %v970, 72
        %v986 = vpop.permute.xlu0 %985
        %989 = vrot.lane.b32.xlu0 %v983, 76
        %v990 = vpop.permute.xlu0 %989
        %v992 = vsel %vm400, %v986, %v990
        %v993 = vpack.c.bf16 %v992, %v992
        %v995 = vsel %vm439, %v957, 0
        %v998 = vsel %vm439, %v993, 0
        %1000 = vmatprep.subr.bf16.mxu0 0
        %1001 = vmatpush1.bf16.xpose.msra.mxu0 0
        %1002 = vmatprep.subr.bf16.mxu0 0
        %1003 = vmatpush1.bf16.xpose.msra.mxu0 0
        %1004 = vmatprep.subr.bf16.mxu0 0
        %1005 = vmatpush1.bf16.xpose.msra.mxu0 0
        %1006 = vmatprep.subr.bf16.mxu0 0
        %1007 = vmatpush1.bf16.xpose.msra.mxu0 0
        %1008 = vmatprep.subr.bf16.mxu0 0
        %1009 = vmatpush1.bf16.xpose.msra.mxu0 0
        %1010 = vmatprep.subr.bf16.mxu0 0
        %1011 = vmatpush1.bf16.xpose.msra.mxu0 0
        %1012 = vmatprep.subr.bf16.mxu0 0
        %1013 = vmatpush1.bf16.xpose.msra.mxu0 0
        %1014 = vmatprep.subr.bf16.mxu0 0
        %1015 = vmatpush1.bf16.xpose.msra.mxu0 %v998
        %1016 = vmatprep.subr.bf16.mxu0 0
        %1017 = vmatpush2.bf16.xpose.msra.mxu0 0
        %1018 = vmatprep.subr.bf16.mxu0 0
        %1019 = vmatpush2.bf16.xpose.msra.mxu0 0
        %1020 = vmatprep.subr.bf16.mxu0 0
        %1021 = vmatpush2.bf16.xpose.msra.mxu0 0
        %1022 = vmatprep.subr.bf16.mxu0 0
        %1023 = vmatpush2.bf16.xpose.msra.mxu0 0
        %1024 = vmatprep.subr.bf16.mxu0 0
        %1025 = vmatpush2.bf16.xpose.msra.mxu0 0
        %1026 = vmatprep.subr.bf16.mxu0 0
        %1027 = vmatpush2.bf16.xpose.msra.mxu0 0
        %1028 = vmatprep.subr.bf16.mxu0 0
        %1029 = vmatpush2.bf16.xpose.msra.mxu0 0
        %1030 = vmatprep.subr.bf16.mxu0 0
        %1031 = vmatpush2.bf16.xpose.msra.mxu0 0
        %1032 = vmatprep.mubr.bf16.mxu0 0
        %1033 = vmatmul.mubr.bf16.gmra.mxu0 %v995
        %v1034 = vpop.f32.mrf.mxu0
        %v1035 = vadd.f32 0.0, %v1034
        %v1036 = vpop.f32.mrf.mxu0
        %v1037 = vpop.f32.mrf.mxu0
        %v1038 = vpop.f32.mrf.mxu0
        %1039 = vdwg.mxu0
        %v1040 = vsel %vm439, %v1035, -inf
        %1041 = vmax.xlane.f32.xlu0 %v1040
        %v1042 = vpop.xlane.xlu0 %1041
        %v1043 = vsub.f32 -inf, %v1042
        %v1044 = vmul.f32 %v1043, 1.442695
        %v1045 = vpow.pop %v1044
        %v1046 = vsub.f32 %v1035, %v1042
        %v1047 = vmul.f32 %v1046, 1.442695
        %v1048 = vpow.pop %v1047
        %v1049 = vmul.f32 %v1045, 0.0
        %v1050 = vsel %vm439, %v1048, 0.0
        %1051 = vadd.xlane.f32.xlu0 %v1050
        %v1052 = vpop.xlane.xlu0 %1051
        %v1053 = vadd.f32 %v1049, %v1052
        %v1054 = vpack.c.bf16 %v1048, %v1048
        %1055 = vrot.lane.b32.xlu0 %v373, 40
        %v1056 = vpop.permute.xlu0 %1055
        %v1058 = vsel %vm439, %v1054, 0
        %v1061 = vsel %vm507, %v1056, 0
        %1063 = vmatprep.subr.bf16.mxu0 0
        %1064 = vmatpush1.bf16.msra.mxu0 0
        %1065 = vmatprep.subr.bf16.mxu0 0
        %1066 = vmatpush1.bf16.msra.mxu0 0
        %1067 = vmatprep.subr.bf16.mxu0 0
        %1068 = vmatpush1.bf16.msra.mxu0 0
        %1069 = vmatprep.subr.bf16.mxu0 0
        %1070 = vmatpush1.bf16.msra.mxu0 0
        %1071 = vmatprep.subr.bf16.mxu0 0
        %1072 = vmatpush1.bf16.msra.mxu0 0
        %1073 = vmatprep.subr.bf16.mxu0 0
        %1074 = vmatpush1.bf16.msra.mxu0 0
        %1075 = vmatprep.subr.bf16.mxu0 0
        %1076 = vmatpush1.bf16.msra.mxu0 0
        %1077 = vmatprep.subr.bf16.mxu0 0
        %1078 = vmatpush1.bf16.msra.mxu0 %v1061
        %1079 = vmatprep.subr.bf16.mxu0 0
        %1080 = vmatpush2.bf16.msra.mxu0 0
        %1081 = vmatprep.subr.bf16.mxu0 0
        %1082 = vmatpush2.bf16.msra.mxu0 0
        %1083 = vmatprep.subr.bf16.mxu0 0
        %1084 = vmatpush2.bf16.msra.mxu0 0
        %1085 = vmatprep.subr.bf16.mxu0 0
        %1086 = vmatpush2.bf16.msra.mxu0 0
        %1087 = vmatprep.subr.bf16.mxu0 0
        %1088 = vmatpush2.bf16.msra.mxu0 0
        %1089 = vmatprep.subr.bf16.mxu0 0
        %1090 = vmatpush2.bf16.msra.mxu0 0
        %1091 = vmatprep.subr.bf16.mxu0 0
        %1092 = vmatpush2.bf16.msra.mxu0 0
        %1093 = vmatprep.subr.bf16.mxu0 0
        %1094 = vmatpush2.bf16.msra.mxu0 0
        %1095 = vmatprep.mubr.bf16.mxu0 0
        %1096 = vmatmul.mubr.bf16.gmra.mxu0 %v1058
        %v1097 = vpop.f32.mrf.mxu0
        %v1098 = vadd.f32 0.0, %v1097
        %v1099 = vpop.f32.mrf.mxu0
        %v1100 = vpop.f32.mrf.mxu0
        %v1101 = vpop.f32.mrf.mxu0
        %1102 = vdwg.mxu0
        %v1103 = vadd.f32 %v1049, %v1098
        %v1104 = vrcp.pop %v1053
        %v1105 = vmul.f32 %v1103, %v1104
        %1107 = vrot.lane.b32.xlu0 %v737, 8
        %v1108 = vpop.permute.xlu0 %1107
        %1111 = vrot.lane.b32.xlu0 %v921, 16
        %v1112 = vpop.permute.xlu0 %1111
        %1115 = vrot.lane.b32.xlu0 %v1105, 24
        %v1116 = vpop.permute.xlu0 %1115
        %v1118 = vsel %vm439, %v553, %v1108
        %vm1119 = vcmask 130048
        %v1120 = vsel %vm1119, %v1118, %v1112
        %vm1121 = vcmask 195584
        %v1122 = vsel %vm1121, %v1120, %v1116
        %v1123 = vpack.c.bf16 %v1122, %v1122
        %v1124 = vld [vmem:[#allocation2] sm:$0xf]
        %v1125 = vld [vmem:[#allocation2 + $0x4] sm:$0xf]
        %v1126 = vld [vmem:[#allocation2 + $0x8] sm:$0xf]
        %v1127 = vld [vmem:[#allocation2 + $0xc] sm:$0xf]
        %v1128 = vld [vmem:[#allocation5] sm:$0x1]
        %v1130 = vlaneseq
        %v1131 = vshrl.u32 %v1130, 7
        %v1132 = vsub.s32 0, %v1131
        %v1133 = vrot.slane %v1128, %v1132
        %v1139 = vunpack.c.l.b16 %v1124
        %v1140 = vunpack.c.l.b16 %v1125
        %v1141 = vunpack.c.l.b16 %v1126
        %v1142 = vunpack.c.l.b16 %v1127
        %v1143 = vpack.c.b16 %v1140, %v1139
        %v1144 = vpack.c.b16 %v1142, %v1141
        %v1148 = vsel %vm327, %v1123, 0
        %1150 = vmatprep.subr.bf16.mxu0 0
        %1151 = vmatpush1.bf16.msra.mxu0 0
        %1152 = vmatprep.subr.bf16.mxu0 0
        %1153 = vmatpush1.bf16.msra.mxu0 0
        %1154 = vmatprep.subr.bf16.mxu0 0
        %1155 = vmatpush1.bf16.msra.mxu0 0
        %1156 = vmatprep.subr.bf16.mxu0 0
        %1157 = vmatpush1.bf16.msra.mxu0 0
        %1158 = vmatprep.subr.bf16.mxu0 0
        %1159 = vmatpush1.bf16.msra.mxu0 0
        %1160 = vmatprep.subr.bf16.mxu0 0
        %1161 = vmatpush1.bf16.msra.mxu0 0
        %1162 = vmatprep.subr.bf16.mxu0 0
        %1163 = vmatpush1.bf16.msra.mxu0 %v1144
        %1164 = vmatprep.subr.bf16.mxu0 0
        %1165 = vmatpush1.bf16.msra.mxu0 %v1143
        %1166 = vmatprep.subr.bf16.mxu0 0
        %1167 = vmatpush2.bf16.msra.mxu0 0
        %1168 = vmatprep.subr.bf16.mxu0 0
        %1169 = vmatpush2.bf16.msra.mxu0 0
        %1170 = vmatprep.subr.bf16.mxu0 0
        %1171 = vmatpush2.bf16.msra.mxu0 0
        %1172 = vmatprep.subr.bf16.mxu0 0
        %1173 = vmatpush2.bf16.msra.mxu0 0
        %1174 = vmatprep.subr.bf16.mxu0 0
        %1175 = vmatpush2.bf16.msra.mxu0 0
        %1176 = vmatprep.subr.bf16.mxu0 0
        %1177 = vmatpush2.bf16.msra.mxu0 0
        %1178 = vmatprep.subr.bf16.mxu0 0
        %1179 = vmatpush2.bf16.msra.mxu0 0
        %1180 = vmatprep.subr.bf16.mxu0 0
        %1181 = vmatpush2.bf16.msra.mxu0 0
        %1182 = vmatprep.mubr.bf16.mxu0 0
        %1183 = vmatmul.mubr.bf16.gmra.mxu0 %v1148
        %v1184 = vpop.f32.mrf.mxu0
        %v1185 = vadd.f32 %v1133, %v1184
        %v1186 = vpop.f32.mrf.mxu0
        %v1187 = vpop.f32.mrf.mxu0
        %v1188 = vpop.f32.mrf.mxu0
        %1189 = vdwg.mxu0
        %1190 = vst.msk [vmem:[%s297] sm:$0xff] %vm327, %v1185
        %s1191 = sand.u32 %s183, 1
        %s1192 = scalar_lea.sflag [#allocation4], %s1191
        %s1193 = sand.u32 %s183, 1
        %s1194 = smul.addr %s1193, 8
        %s1195 = scalar_lea.vmem [#allocation7], %s1194
        // Predicated region
        $region57: #{tpu_custom_call.1} parent=47 // pred_check
          %p1196 = pneg %p193
        $region58: #{tpu_custom_call.1} parent=47 // pred_check_branch
          %1198 = sbr.rel (%p1196) target = $region60
        $region59: #{tpu_custom_call.1} parent=47 // pred_region
          %s1200 = ssub.s32 128, 128
          %1201 = vsyncadd %s1192, %s1200
          %s1202 = smul.addr %s23, 128
          %s1203 = scalar_lea.hbm %s7, %s1202
          %s1205 = sshll.u32 %s1195, 4
          %s1206 = int_to_ptr.vmem [resolvable:$true] %s1205
          %1208 = dma.vmem_to_hbm [thread:$0]  %s1206, 128, %s1203, %s1192
        $region60: #{tpu_custom_call.1} parent=47 // pred_fallthru
          _
      $region48: #{tpu_custom_call.1} parent=5 // pred_fallthru
        _
      %p1209 = scmp.le.s32.totalorder 2, %s18
      // Predicated region
      $region61: #{tpu_custom_call.1} parent=5 // pred_check
        %p1210 = pneg %p1209
      $region62: #{tpu_custom_call.1} parent=5 // pred_check_branch
        %1212 = sbr.rel (%p1210) target = $region64
      $region63: #{tpu_custom_call.1} parent=5 // pred_region
        %s1213 = ssub.s32 %s18, 2
        // Predicated region
        $region65: #{tpu_custom_call.1} parent=63 // pred_check
          %p1214 = pneg %p199
        $region66: #{tpu_custom_call.1} parent=63 // pred_check_branch
          %1216 = sbr.rel (%p1214) target = $region68
        $region67: #{tpu_custom_call.1} parent=63 // pred_region
          %s1217 = sand.u32 %s184, 1
          %s1218 = scalar_lea.sflag [#allocation4], %s1217
          %s1219 = sand.u32 %s184, 1
          %s1220 = smul.addr %s1219, 8
          %s1221 = scalar_lea.vmem [#allocation7], %s1220
          %1222 = dma.done %s1218, 128
        $region68: #{tpu_custom_call.1} parent=63 // pred_fallthru
          _
      $region64: #{tpu_custom_call.1} parent=5 // pred_fallthru
        _
    $region6: #{tpu_custom_call.1} parent=1 // loop_footer
      %s22 = sadd.s32 1, %s18
    $region7: #{tpu_custom_call.1} parent=1 // loop_footer_branch
      %17 = sbr.rel target = $region3
    $region8: #{tpu_custom_call.1} parent=1 // loop_exit
      _
    %1223 = vsyncpa [#allocation3], 1
    %s1224 = scalar_lea.sflag [#allocation3], 1
    %1225 = vsyncpa %s1224, 1
    %1226 = vsyncpa [#allocation6], 1
    %1227 = vsyncpa [#allocation4], 1
    %s1228 = scalar_lea.sflag [#allocation4], 1
    %1229 = vsyncpa %s1228, 1

// kernel: tpu_custom_call.1
$region0: #{tpu_custom_call.1}
  #allocation0 [shape = 'u32[]', space=smem, size = 0x4, offset = 0x4, fixed_abs, tag = 'smem constant byte address 0x4 - core index']
  #allocation1 [shape = 'u32[144,128]{1,0:T(1,128)}', space=vmem, size = 0x12000, scoped, tag = 'internal scratch']
  %s0 = inlined_call_operand.vmem [shape: bf16[2,8,32], index: 0, kind: input, shape index: {}]
  %s1 = inlined_call_operand.vmem [shape: bf16[32,96], index: 1, kind: input, shape index: {}]
  %s2 = inlined_call_operand.vmem [shape: f32[1,96], index: 2, kind: input, shape index: {}]
  %s3 = inlined_call_operand.hbm [shape: bf16[32,32], index: 3, kind: input, shape index: {}]
  %s4 = inlined_call_operand.hbm [shape: f32[1,32], index: 4, kind: input, shape index: {}]
  %s5 = inlined_call_operand.vmem [shape: f32[8,4], index: 5, kind: input, shape index: {}]
  %s6 = inlined_call_operand.vmem [shape: f32[8,4], index: 6, kind: input, shape index: {}]
  %s7 = inlined_call_operand.hbm [shape: f32[2,8,32], index: 7, kind: output, shape index: {}]
  %s8 = sld [smem:[#allocation0]]
  $region69: #{tpu_custom_call.1} parent=0
    _
  %s10 = ssub.s32 1, %s8
  %s11 = scalar_select 0, %s10, %s8
  $region1: #{tpu_custom_call.1} parent=0
    #allocation2 [shape = 'u8[8192]{0}', space=vmem, size = 0x2000, scoped, tag = 'input window, operand 3, single buffered']
    #allocation3 [shape = 's32[2]{0}', space=sflag, size = 0x8, scoped, tag = 'scoped memory for tpu_custom_call.1']
    #allocation4 [shape = 's32[2]{0}', space=sflag, size = 0x8, scoped, tag = 'scoped memory for tpu_custom_call.1']
    #allocation5 [shape = 'u8[512]{0}', space=vmem, size = 0x400, scoped, tag = 'input window, operand 4, single buffered']
    #allocation6 [shape = 's32[1]{0}', space=sflag, size = 0x4, scoped, tag = 'scoped memory for tpu_custom_call.1']
    #allocation7 [shape = 'u8[8192]{0}', space=vmem, size = 0x2000, scoped, tag = 'output window, operand 0']
    %12 = vsyncpa [#allocation3], 0
    %13 = vsyncpa [#allocation6], 0
    %14 = vsyncpa [#allocation4], 0
    %s15 = scalar_lea.sflag [#allocation4], 1
    %16 = vsyncpa %s15, 0
    loop: start=0, step=1, limit=4
    $region2: #{tpu_custom_call.1} parent=1 // loop_pre_header
      _
    $region3: #{tpu_custom_call.1} parent=1 // loop_header
      %s18 = sphi 0, %s22
      %p19 = scmp.ge.s32.totalorder %s18, 4
      %s28 = sphi 0, %s30
      %s31 = sphi 0, %s28
      %s32 = sphi 0, %s31
      %s48 = sphi 0, %s32
      %s52 = sphi 0, %s52
      %s54 = sphi 0, %s52
      %s55 = sphi 0, %s54
      %s69 = sphi 0, %s55
      %s73 = sphi 0, %s73
      %s75 = sphi 0, %s73
      %s76 = sphi 0, %s75
      %s90 = sphi 0, %s76
      %s94 = sphi 0, %s94
      %s96 = sphi 0, %s94
      %s97 = sphi 0, %s96
      %s111 = sphi 0, %s97
      %s115 = sphi 0, %s115
      %s117 = sphi 0, %s115
      %s118 = sphi 0, %s117
      %s132 = sphi 0, %s118
      %s136 = sphi 0, %s136
      %s138 = sphi 0, %s136
      %s139 = sphi 0, %s138
      %s153 = sphi 0, %s139
      %s157 = sphi 0, %s157
      %s159 = sphi 0, %s157
      %s160 = sphi 0, %s159
      %s174 = sphi 0, %s160
      %s180 = sphi 0, %s182
      %s183 = sphi 0, %s180
      %s184 = sphi 0, %s183
      %s200 = sphi 0, %s184
    $region4: #{tpu_custom_call.1} parent=1 // loop_header_branch
      %21 = sbr.rel (%p19) target = $region8
    $region5: #{tpu_custom_call.1} parent=1 // loop_body
      %s23 = ssub.s32 %s18, 1
      %s24 = ssub.s32 %s18, 2
      %s25 = sadd.s32 %s18, 1
      %s26 = ssub.s32 %s18, %s25
      %p27 = scmp.eq.s32.totalorder %s26, 0
      %s29 = sadd.s32 %s28, 1
      %s30 = scalar_select %p27, %s28, %s29
      %p33 = pneg %p27
      %p34 = scmp.eq.s32.totalorder %s18, 1
      %p35 = por %p33, %p34
      %p36 = scmp.ne.s32.totalorder %s28, %s31
      %p37 = scmp.eq.s32.totalorder %s18, 0
      %p38 = por %p36, %p37
      %p39 = scmp.ne.s32.totalorder %s28, %s31
      %p40 = scmp.eq.s32.totalorder %s23, 1
      %p41 = por %p39, %p40
      %p42 = scmp.ne.s32.totalorder %s31, %s32
      %p43 = scmp.eq.s32.totalorder %s23, 0
      %p44 = por %p42, %p43
      %p45 = scmp.ne.s32.totalorder %s31, %s32
      %p46 = scmp.eq.s32.totalorder %s24, 1
      %p47 = por %p45, %p46
      %p49 = scmp.ne.s32.totalorder %s32, %s48
      %p50 = scmp.eq.s32.totalorder %s24, 0
      %p51 = por %p49, %p50
      %s53 = sadd.s32 %s52, 1
      %p56 = scmp.eq.s32.totalorder %s18, 1
      %p57 = scmp.ne.s32.totalorder %s52, %s54
      %p58 = scmp.eq.s32.totalorder %s18, 0
      %p59 = por %p57, %p58
      %p60 = scmp.ne.s32.totalorder %s52, %s54
      %p61 = scmp.eq.s32.totalorder %s23, 1
      %p62 = por %p60, %p61
      %p63 = scmp.ne.s32.totalorder %s54, %s55
      %p64 = scmp.eq.s32.totalorder %s23, 0
      %p65 = por %p63, %p64
      %p66 = scmp.ne.s32.totalorder %s54, %s55
      %p67 = scmp.eq.s32.totalorder %s24, 1
      %p68 = por %p66, %p67
      %p70 = scmp.ne.s32.totalorder %s55, %s69
      %p71 = scmp.eq.s32.totalorder %s24, 0
      %p72 = por %p70, %p71
      %s74 = sadd.s32 %s73, 1
      %p77 = scmp.eq.s32.totalorder %s18, 1
      %p78 = scmp.ne.s32.totalorder %s73, %s75
      %p79 = scmp.eq.s32.totalorder %s18, 0
      %p80 = por %p78, %p79
      %p81 = scmp.ne.s32.totalorder %s73, %s75
      %p82 = scmp.eq.s32.totalorder %s23, 1
      %p83 = por %p81, %p82
      %p84 = scmp.ne.s32.totalorder %s75, %s76
      %p85 = scmp.eq.s32.totalorder %s23, 0
      %p86 = por %p84, %p85
      %p87 = scmp.ne.s32.totalorder %s75, %s76
      %p88 = scmp.eq.s32.totalorder %s24, 1
      %p89 = por %p87, %p88
      %p91 = scmp.ne.s32.totalorder %s76, %s90
      %p92 = scmp.eq.s32.totalorder %s24, 0
      %p93 = por %p91, %p92
      %s95 = sadd.s32 %s94, 1
      %p98 = scmp.eq.s32.totalorder %s18, 1
      %p99 = scmp.ne.s32.totalorder %s94, %s96
      %p100 = scmp.eq.s32.totalorder %s18, 0
      %p101 = por %p99, %p100
      %p102 = scmp.ne.s32.totalorder %s94, %s96
      %p103 = scmp.eq.s32.totalorder %s23, 1
      %p104 = por %p102, %p103
      %p105 = scmp.ne.s32.totalorder %s96, %s97
      %p106 = scmp.eq.s32.totalorder %s23, 0
      %p107 = por %p105, %p106
      %p108 = scmp.ne.s32.totalorder %s96, %s97
      %p109 = scmp.eq.s32.totalorder %s24, 1
      %p110 = por %p108, %p109
      %p112 = scmp.ne.s32.totalorder %s97, %s111
      %p113 = scmp.eq.s32.totalorder %s24, 0
      %p114 = por %p112, %p113
      %s116 = sadd.s32 %s115, 1
      %p119 = scmp.eq.s32.totalorder %s18, 1
      %p120 = scmp.ne.s32.totalorder %s115, %s117
      %p121 = scmp.eq.s32.totalorder %s18, 0
      %p122 = por %p120, %p121
      %p123 = scmp.ne.s32.totalorder %s115, %s117
      %p124 = scmp.eq.s32.totalorder %s23, 1
      %p125 = por %p123, %p124
      %p126 = scmp.ne.s32.totalorder %s117, %s118
      %p127 = scmp.eq.s32.totalorder %s23, 0
      %p128 = por %p126, %p127
      %p129 = scmp.ne.s32.totalorder %s117, %s118
      %p130 = scmp.eq.s32.totalorder %s24, 1
      %p131 = por %p129, %p130
      %p133 = scmp.ne.s32.totalorder %s118, %s132
      %p134 = scmp.eq.s32.totalorder %s24, 0
      %p135 = por %p133, %p134
      %s137 = sadd.s32 %s136, 1
      %p140 = scmp.eq.s32.totalorder %s18, 1
      %p141 = scmp.ne.s32.totalorder %s136, %s138
      %p142 = scmp.eq.s32.totalorder %s18, 0
      %p143 = por %p141, %p142
      %p144 = scmp.ne.s32.totalorder %s136, %s138
      %p145 = scmp.eq.s32.totalorder %s23, 1
      %p146 = por %p144, %p145
      %p147 = scmp.ne.s32.totalorder %s138, %s139
      %p148 = scmp.eq.s32.totalorder %s23, 0
      %p149 = por %p147, %p148
      %p150 = scmp.ne.s32.totalorder %s138, %s139
      %p151 = scmp.eq.s32.totalorder %s24, 1
      %p152 = por %p150, %p151
      %p154 = scmp.ne.s32.totalorder %s139, %s153
      %p155 = scmp.eq.s32.totalorder %s24, 0
      %p156 = por %p154, %p155
      %s158 = sadd.s32 %s157, 1
      %p161 = scmp.eq.s32.totalorder %s18, 1
      %p162 = scmp.ne.s32.totalorder %s157, %s159
      %p163 = scmp.eq.s32.totalorder %s18, 0
      %p164 = por %p162, %p163
      %p165 = scmp.ne.s32.totalorder %s157, %s159
      %p166 = scmp.eq.s32.totalorder %s23, 1
      %p167 = por %p165, %p166
      %p168 = scmp.ne.s32.totalorder %s159, %s160
      %p169 = scmp.eq.s32.totalorder %s23, 0
      %p170 = por %p168, %p169
      %p171 = scmp.ne.s32.totalorder %s159, %s160
      %p172 = scmp.eq.s32.totalorder %s24, 1
      %p173 = por %p171, %p172
      %p175 = scmp.ne.s32.totalorder %s160, %s174
      %p176 = scmp.eq.s32.totalorder %s24, 0
      %p177 = por %p175, %p176
      %s178 = ssub.s32 %s18, %s25
      %p179 = scmp.eq.s32.totalorder %s178, 0
      %s181 = sadd.s32 %s180, 1
      %s182 = scalar_select %p179, %s180, %s181
      %p185 = pneg %p179
      %p186 = scmp.eq.s32.totalorder %s18, 1
      %p187 = por %p185, %p186
      %p188 = scmp.ne.s32.totalorder %s180, %s183
      %p189 = scmp.eq.s32.totalorder %s18, 0
      %p190 = por %p188, %p189
      %p191 = scmp.ne.s32.totalorder %s180, %s183
      %p192 = scmp.eq.s32.totalorder %s23, 1
      %p193 = por %p191, %p192
      %p194 = scmp.ne.s32.totalorder %s183, %s184
      %p195 = scmp.eq.s32.totalorder %s23, 0
      %p196 = por %p194, %p195
      %p197 = scmp.ne.s32.totalorder %s183, %s184
      %p198 = scmp.eq.s32.totalorder %s24, 1
      %p199 = por %p197, %p198
      %p201 = scmp.ne.s32.totalorder %s184, %s200
      %p202 = scmp.eq.s32.totalorder %s24, 0
      %p203 = por %p201, %p202
      %p204 = scmp.le.s32.totalorder 1, %s18
      %p205 = scmp.lt.s32.totalorder %s18, 3
      %p206 = pnand %p204, %p205
      %p207 = pneg %p206
      // Predicated region
      $region9: #{tpu_custom_call.1} parent=5 // pred_check
        _
      $region10: #{tpu_custom_call.1} parent=5 // pred_check_branch
        %209 = sbr.rel (%p206) target = $region12
      $region11: #{tpu_custom_call.1} parent=5 // pred_region
        %s210 = ssub.s32 %s18, 1
        // Predicated region
        $region13: #{tpu_custom_call.1} parent=11 // pred_check
          %p211 = pneg %p65
        $region14: #{tpu_custom_call.1} parent=11 // pred_check_branch
          %213 = sbr.rel (%p211) target = $region16
        $region15: #{tpu_custom_call.1} parent=11 // pred_region
          _
        $region16: #{tpu_custom_call.1} parent=11 // pred_fallthru
          _
        // Predicated region
        $region17: #{tpu_custom_call.1} parent=11 // pred_check
          %p214 = pneg %p86
        $region18: #{tpu_custom_call.1} parent=11 // pred_check_branch
          %216 = sbr.rel (%p214) target = $region20
        $region19: #{tpu_custom_call.1} parent=11 // pred_region
          _
        $region20: #{tpu_custom_call.1} parent=11 // pred_fallthru
          _
        // Predicated region
        $region21: #{tpu_custom_call.1} parent=11 // pred_check
          %p217 = pneg %p107
        $region22: #{tpu_custom_call.1} parent=11 // pred_check_branch
          %219 = sbr.rel (%p217) target = $region24
        $region23: #{tpu_custom_call.1} parent=11 // pred_region
          %s221 = ssub.s32 256, 256
          %222 = vsyncadd [#allocation3], %s221
          %s223 = sshll.u32 [#allocation2], 4
          %s224 = int_to_ptr.vmem [resolvable:$true] %s223
          %229 = dma.hbm_to_vmem [thread:$0]  %s3, 256, %s224, [#allocation3], 64, 64, 4
        $region24: #{tpu_custom_call.1} parent=11 // pred_fallthru
          _
        // Predicated region
        $region25: #{tpu_custom_call.1} parent=11 // pred_check
          %p230 = pneg %p128
        $region26: #{tpu_custom_call.1} parent=11 // pred_check_branch
          %232 = sbr.rel (%p230) target = $region28
        $region27: #{tpu_custom_call.1} parent=11 // pred_region
          %s234 = ssub.s32 16, 16
          %235 = vsyncadd [#allocation6], %s234
          %s237 = sshll.u32 [#allocation5], 4
          %s238 = int_to_ptr.vmem [resolvable:$true] %s237
          %240 = dma.hbm_to_vmem [thread:$0]  %s4, 16, %s238, [#allocation6]
        $region28: #{tpu_custom_call.1} parent=11 // pred_fallthru
          _
        // Predicated region
        $region29: #{tpu_custom_call.1} parent=11 // pred_check
          %p241 = pneg %p149
        $region30: #{tpu_custom_call.1} parent=11 // pred_check_branch
          %243 = sbr.rel (%p241) target = $region32
        $region31: #{tpu_custom_call.1} parent=11 // pred_region
          _
        $region32: #{tpu_custom_call.1} parent=11 // pred_fallthru
          _
        // Predicated region
        $region33: #{tpu_custom_call.1} parent=11 // pred_check
          %p244 = pneg %p170
        $region34: #{tpu_custom_call.1} parent=11 // pred_check_branch
          %246 = sbr.rel (%p244) target = $region36
        $region35: #{tpu_custom_call.1} parent=11 // pred_region
          _
        $region36: #{tpu_custom_call.1} parent=11 // pred_fallthru
          _
      $region12: #{tpu_custom_call.1} parent=5 // pred_fallthru
        _
      %p247 = scmp.lt.s32.totalorder %s18, 2
      // Predicated region
      $region37: #{tpu_custom_call.1} parent=5 // pred_check
        %p248 = pneg %p247
      $region38: #{tpu_custom_call.1} parent=5 // pred_check_branch
        %250 = sbr.rel (%p248) target = $region40
      $region39: #{tpu_custom_call.1} parent=5 // pred_region
        // Predicated region
        $region41: #{tpu_custom_call.1} parent=39 // pred_check
          %p251 = pneg %p38
        $region42: #{tpu_custom_call.1} parent=39 // pred_check_branch
          %253 = sbr.rel (%p251) target = $region44
        $region43: #{tpu_custom_call.1} parent=39 // pred_region
          %p254 = scmp.lt.s32.totalorder %s18, 1
          %s255 = scalar_select %p254, %s18, 1
          %s256 = smul.addr %s255, 4
          %s257 = scalar_lea.vmem %s0, %s256
        $region44: #{tpu_custom_call.1} parent=39 // pred_fallthru
          _
      $region40: #{tpu_custom_call.1} parent=5 // pred_fallthru
        _
      %p258 = scmp.le.s32.totalorder 1, %s18
      %p259 = scmp.lt.s32.totalorder %s18, 3
      %p260 = pnand %p258, %p259
      %p261 = pneg %p260
      // Predicated region
      $region45: #{tpu_custom_call.1} parent=5 // pred_check
        _
      $region46: #{tpu_custom_call.1} parent=5 // pred_check_branch
        %263 = sbr.rel (%p260) target = $region48
      $region47: #{tpu_custom_call.1} parent=5 // pred_region
        %s264 = ssub.s32 %s18, 1
        // Predicated region
        $region49: #{tpu_custom_call.1} parent=47 // pred_check
          %p265 = pneg %p107
        $region50: #{tpu_custom_call.1} parent=47 // pred_check_branch
          %267 = sbr.rel (%p265) target = $region52
        $region51: #{tpu_custom_call.1} parent=47 // pred_region
          %268 = dma.done [#allocation3], 256
        $region52: #{tpu_custom_call.1} parent=47 // pred_fallthru
          _
        // Predicated region
        $region53: #{tpu_custom_call.1} parent=47 // pred_check
          %p269 = pneg %p128
        $region54: #{tpu_custom_call.1} parent=47 // pred_check_branch
          %271 = sbr.rel (%p269) target = $region56
        $region55: #{tpu_custom_call.1} parent=47 // pred_region
          %272 = dma.done [#allocation6], 16
        $region56: #{tpu_custom_call.1} parent=47 // pred_fallthru
          _
        %p273 = scmp.lt.s32.totalorder %s23, 1
        %s274 = scalar_select %p273, %s23, 1
        %s275 = smul.addr %s274, 4
        %s276 = scalar_lea.vmem %s0, %s275
        %p277 = pneg %p44
        %p278 = pneg %p41
        %p279 = pneg %p65
        %p280 = pneg %p62
        %p281 = pneg %p86
        %p282 = pneg %p83
        %p283 = pneg %p107
        %p284 = pneg %p104
        %p285 = pneg %p128
        %p286 = pneg %p125
        %p287 = pneg %p149
        %p288 = pneg %p146
        %p289 = pneg %p170
        %p290 = pneg %p167
        %p291 = pneg %p196
        %p292 = pneg %p193
        %s293 = sand.u32 %s183, 1
        %s294 = scalar_lea.sflag [#allocation4], %s293
        %s295 = sand.u32 %s183, 1
        %s296 = smul.addr %s295, 8
        %s297 = scalar_lea.vmem [#allocation7], %s296
        %p298 = scmp.lt.s32.totalorder %s23, 1
        %s299 = scalar_select %p298, %s23, 1
        %s300 = smul.addr %s299, 4
        %s301 = scalar_lea.vmem %s0, %s300
        %v303 = vld [vmem:[%s301] sm:$0xf]
        %v304 = vld [vmem:[%s1] sm:$0xf]
        %v305 = vld [vmem:[%s1 + $0x4] sm:$0xf]
        %v306 = vld [vmem:[%s1 + $0x8] sm:$0xf]
        %v307 = vld [vmem:[%s1 + $0xc] sm:$0xf]
        %v308 = vld [vmem:[%s2] sm:$0x1]
        %v310 = vlaneseq
        %v311 = vshrl.u32 %v310, 7
        %v312 = vsub.s32 0, %v311
        %v313 = vrot.slane %v308, %v312
        %v319 = vunpack.c.l.b16 %v304
        %v320 = vunpack.c.l.b16 %v305
        %v321 = vunpack.c.l.b16 %v306
        %v322 = vunpack.c.l.b16 %v307
        %v323 = vpack.c.b16 %v320, %v319
        %v324 = vpack.c.b16 %v322, %v321
        %vm327 = vcmask 261120
        %v329 = vsel %vm327, %v303, 0
        %331 = vmatprep.subr.bf16.mxu0 0
        %332 = vmatpush1.bf16.msra.mxu0 0
        %333 = vmatprep.subr.bf16.mxu0 0
        %334 = vmatpush1.bf16.msra.mxu0 0
        %335 = vmatprep.subr.bf16.mxu0 0
        %336 = vmatpush1.bf16.msra.mxu0 0
        %337 = vmatprep.subr.bf16.mxu0 0
        %338 = vmatpush1.bf16.msra.mxu0 0
        %339 = vmatprep.subr.bf16.mxu0 0
        %340 = vmatpush1.bf16.msra.mxu0 0
        %341 = vmatprep.subr.bf16.mxu0 0
        %342 = vmatpush1.bf16.msra.mxu0 0
        %343 = vmatprep.subr.bf16.mxu0 0
        %344 = vmatpush1.bf16.msra.mxu0 %v324
        %345 = vmatprep.subr.bf16.mxu0 0
        %346 = vmatpush1.bf16.msra.mxu0 %v323
        %347 = vmatprep.subr.bf16.mxu0 0
        %348 = vmatpush2.bf16.msra.mxu0 0
        %349 = vmatprep.subr.bf16.mxu0 0
        %350 = vmatpush2.bf16.msra.mxu0 0
        %351 = vmatprep.subr.bf16.mxu0 0
        %352 = vmatpush2.bf16.msra.mxu0 0
        %353 = vmatprep.subr.bf16.mxu0 0
        %354 = vmatpush2.bf16.msra.mxu0 0
        %355 = vmatprep.subr.bf16.mxu0 0
        %356 = vmatpush2.bf16.msra.mxu0 0
        %357 = vmatprep.subr.bf16.mxu0 0
        %358 = vmatpush2.bf16.msra.mxu0 0
        %359 = vmatprep.subr.bf16.mxu0 0
        %360 = vmatpush2.bf16.msra.mxu0 0
        %361 = vmatprep.subr.bf16.mxu0 0
        %362 = vmatpush2.bf16.msra.mxu0 0
        %363 = vmatprep.mubr.bf16.mxu0 0
        %364 = vmatmul.mubr.bf16.gmra.mxu0 %v329
        %v365 = vpop.f32.mrf.mxu0
        %v366 = vadd.f32 %v313, %v365
        %v367 = vpop.f32.mrf.mxu0
        %v368 = vpop.f32.mrf.mxu0
        %v369 = vpop.f32.mrf.mxu0
        %370 = vdwg.mxu0
        %v371 = vld [vmem:[%s5] sm:$0xff]
        %v372 = vld [vmem:[%s6] sm:$0xff]
        %v373 = vpack.c.bf16 %v366, %v366
        %v374 = vmul.f32 %v366, %v371
        %376 = vrot.lane.b32.xlu0 %v372, 4
        %v377 = vpop.permute.xlu0 %376
        %v379 = vmul.f32 %v366, %v377
        %381 = vrot.lane.b32.xlu0 %v379, 124
        %v382 = vpop.permute.xlu0 %381
        %v384 = vsub.f32 %v374, %v382
        %v385 = vmul.f32 %v366, %v372
        %387 = vrot.lane.b32.xlu0 %v371, 4
        %v388 = vpop.permute.xlu0 %387
        %v390 = vmul.f32 %v366, %v388
        %392 = vrot.lane.b32.xlu0 %v390, 124
        %v393 = vpop.permute.xlu0 %392
        %v395 = vadd.f32 %v385, %v393
        %397 = vrot.lane.b32.xlu0 %v395, 4
        %v398 = vpop.permute.xlu0 %397
        %vm400 = vcmask 31744
        %v401 = vsel %vm400, %v384, %v398
        %v402 = vpack.c.bf16 %v401, %v401
        %403 = vrot.lane.b32.xlu0 %v371, 32
        %v404 = vpop.permute.xlu0 %403
        %v406 = vmul.f32 %v366, %v404
        %407 = vrot.lane.b32.xlu0 %v372, 36
        %v408 = vpop.permute.xlu0 %407
        %v410 = vmul.f32 %v366, %v408
        %412 = vrot.lane.b32.xlu0 %v410, 124
        %v413 = vpop.permute.xlu0 %412
        %v415 = vsub.f32 %v406, %v413
        %416 = vrot.lane.b32.xlu0 %v372, 32
        %v417 = vpop.permute.xlu0 %416
        %v419 = vmul.f32 %v366, %v417
        %420 = vrot.lane.b32.xlu0 %v371, 36
        %v421 = vpop.permute.xlu0 %420
        %v423 = vmul.f32 %v366, %v421
        %425 = vrot.lane.b32.xlu0 %v423, 124
        %v426 = vpop.permute.xlu0 %425
        %v428 = vadd.f32 %v419, %v426
        %430 = vrot.lane.b32.xlu0 %v415, 96
        %v431 = vpop.permute.xlu0 %430
        %434 = vrot.lane.b32.xlu0 %v428, 100
        %v435 = vpop.permute.xlu0 %434
        %v437 = vsel %vm400, %v431, %v435
        %v438 = vpack.c.bf16 %v437, %v437
        %vm439 = vcmask 64512
        %v441 = vsel %vm439, %v402, 0
        %v444 = vsel %vm439, %v438, 0
        %446 = vmatprep.subr.bf16.mxu0 0
        %447 = vmatpush1.bf16.xpose.msra.mxu0 0
        %448 = vmatprep.subr.bf16.mxu0 0
        %449 = vmatpush1.bf16.xpose.msra.mxu0 0
        %450 = vmatprep.subr.bf16.mxu0 0
        %451 = vmatpush1.bf16.xpose.msra.mxu0 0
        %452 = vmatprep.subr.bf16.mxu0 0
        %453 = vmatpush1.bf16.xpose.msra.mxu0 0
        %454 = vmatprep.subr.bf16.mxu0 0
        %455 = vmatpush1.bf16.xpose.msra.mxu0 0
        %456 = vmatprep.subr.bf16.mxu0 0
        %457 = vmatpush1.bf16.xpose.msra.mxu0 0
        %458 = vmatprep.subr.bf16.mxu0 0
        %459 = vmatpush1.bf16.xpose.msra.mxu0 0
        %460 = vmatprep.subr.bf16.mxu0 0
        %461 = vmatpush1.bf16.xpose.msra.mxu0 %v444
        %462 = vmatprep.subr.bf16.mxu0 0
        %463 = vmatpush2.bf16.xpose.msra.mxu0 0
        %464 = vmatprep.subr.bf16.mxu0 0
        %465 = vmatpush2.bf16.xpose.msra.mxu0 0
        %466 = vmatprep.subr.bf16.mxu0 0
        %467 = vmatpush2.bf16.xpose.msra.mxu0 0
        %468 = vmatprep.subr.bf16.mxu0 0
        %469 = vmatpush2.bf16.xpose.msra.mxu0 0
        %470 = vmatprep.subr.bf16.mxu0 0
        %471 = vmatpush2.bf16.xpose.msra.mxu0 0
        %472 = vmatprep.subr.bf16.mxu0 0
        %473 = vmatpush2.bf16.xpose.msra.mxu0 0
        %474 = vmatprep.subr.bf16.mxu0 0
        %475 = vmatpush2.bf16.xpose.msra.mxu0 0
        %476 = vmatprep.subr.bf16.mxu0 0
        %477 = vmatpush2.bf16.xpose.msra.mxu0 0
        %478 = vmatprep.mubr.bf16.mxu0 0
        %479 = vmatmul.mubr.bf16.gmra.mxu0 %v441
        %v480 = vpop.f32.mrf.mxu0
        %v481 = vadd.f32 0.0, %v480
        %v482 = vpop.f32.mrf.mxu0
        %v483 = vpop.f32.mrf.mxu0
        %v484 = vpop.f32.mrf.mxu0
        %485 = vdwg.mxu0
        %v486 = vsel %vm439, %v481, -inf
        %487 = vmax.xlane.f32.xlu0 %v486
        %v488 = vpop.xlane.xlu0 %487
        %v489 = vsub.f32 -inf, %v488
        %v490 = vmul.f32 %v489, 1.442695
        %v491 = vpow.pop %v490
        %v492 = vsub.f32 %v481, %v488
        %v493 = vmul.f32 %v492, 1.442695
        %v494 = vpow.pop %v493
        %v495 = vmul.f32 %v491, 0.0
        %v496 = vsel %vm439, %v494, 0.0
        %497 = vadd.xlane.f32.xlu0 %v496
        %v498 = vpop.xlane.xlu0 %497
        %v499 = vadd.f32 %v495, %v498
        %v500 = vpack.c.bf16 %v494, %v494
        %502 = vrot.lane.b32.xlu0 %v373, 64
        %v503 = vpop.permute.xlu0 %502
        %v505 = vsel %vm439, %v500, 0
        %vm507 = vcmask 1043456
        %v509 = vsel %vm507, %v503, 0
        %511 = vmatprep.subr.bf16.mxu0 0
        %512 = vmatpush1.bf16.msra.mxu0 0
        %513 = vmatprep.subr.bf16.mxu0 0
        %514 = vmatpush1.bf16.msra.mxu0 0
        %515 = vmatprep.subr.bf16.mxu0 0
        %516 = vmatpush1.bf16.msra.mxu0 0
        %517 = vmatprep.subr.bf16.mxu0 0
        %518 = vmatpush1.bf16.msra.mxu0 0
        %519 = vmatprep.subr.bf16.mxu0 0
        %520 = vmatpush1.bf16.msra.mxu0 0
        %521 = vmatprep.subr.bf16.mxu0 0
        %522 = vmatpush1.bf16.msra.mxu0 0
        %523 = vmatprep.subr.bf16.mxu0 0
        %524 = vmatpush1.bf16.msra.mxu0 0
        %525 = vmatprep.subr.bf16.mxu0 0
        %526 = vmatpush1.bf16.msra.mxu0 %v509
        %527 = vmatprep.subr.bf16.mxu0 0
        %528 = vmatpush2.bf16.msra.mxu0 0
        %529 = vmatprep.subr.bf16.mxu0 0
        %530 = vmatpush2.bf16.msra.mxu0 0
        %531 = vmatprep.subr.bf16.mxu0 0
        %532 = vmatpush2.bf16.msra.mxu0 0
        %533 = vmatprep.subr.bf16.mxu0 0
        %534 = vmatpush2.bf16.msra.mxu0 0
        %535 = vmatprep.subr.bf16.mxu0 0
        %536 = vmatpush2.bf16.msra.mxu0 0
        %537 = vmatprep.subr.bf16.mxu0 0
        %538 = vmatpush2.bf16.msra.mxu0 0
        %539 = vmatprep.subr.bf16.mxu0 0
        %540 = vmatpush2.bf16.msra.mxu0 0
        %541 = vmatprep.subr.bf16.mxu0 0
        %542 = vmatpush2.bf16.msra.mxu0 0
        %543 = vmatprep.mubr.bf16.mxu0 0
        %544 = vmatmul.mubr.bf16.gmra.mxu0 %v505
        %v545 = vpop.f32.mrf.mxu0
        %v546 = vadd.f32 0.0, %v545
        %v547 = vpop.f32.mrf.mxu0
        %v548 = vpop.f32.mrf.mxu0
        %v549 = vpop.f32.mrf.mxu0
        %550 = vdwg.mxu0
        %v551 = vadd.f32 %v495, %v546
        %v552 = vrcp.pop %v499
        %v553 = vmul.f32 %v551, %v552
        %554 = vrot.lane.b32.xlu0 %v371, 8
        %v555 = vpop.permute.xlu0 %554
        %v557 = vmul.f32 %v366, %v555
        %558 = vrot.lane.b32.xlu0 %v372, 12
        %v559 = vpop.permute.xlu0 %558
        %v561 = vmul.f32 %v366, %v559
        %563 = vrot.lane.b32.xlu0 %v561, 124
        %v564 = vpop.permute.xlu0 %563
        %v566 = vsub.f32 %v557, %v564
        %567 = vrot.lane.b32.xlu0 %v372, 8
        %v568 = vpop.permute.xlu0 %567
        %v570 = vmul.f32 %v366, %v568
        %571 = vrot.lane.b32.xlu0 %v371, 12
        %v572 = vpop.permute.xlu0 %571
        %v574 = vmul.f32 %v366, %v572
        %576 = vrot.lane.b32.xlu0 %v574, 124
        %v577 = vpop.permute.xlu0 %576
        %v579 = vadd.f32 %v570, %v577
        %581 = vrot.lane.b32.xlu0 %v566, 120
        %v582 = vpop.permute.xlu0 %581
        %585 = vrot.lane.b32.xlu0 %v579, 124
        %v586 = vpop.permute.xlu0 %585
        %v588 = vsel %vm400, %v582, %v586
        %v589 = vpack.c.bf16 %v588, %v588
        %590 = vrot.lane.b32.xlu0 %v371, 40
        %v591 = vpop.permute.xlu0 %590
        %v593 = vmul.f32 %v366, %v591
        %594 = vrot.lane.b32.xlu0 %v372, 44
        %v595 = vpop.permute.xlu0 %594
        %v597 = vmul.f32 %v366, %v595
        %599 = vrot.lane.b32.xlu0 %v597, 124
        %v600 = vpop.permute.xlu0 %599
        %v602 = vsub.f32 %v593, %v600
        %603 = vrot.lane.b32.xlu0 %v372, 40
        %v604 = vpop.permute.xlu0 %603
        %v606 = vmul.f32 %v366, %v604
        %607 = vrot.lane.b32.xlu0 %v371, 44
        %v608 = vpop.permute.xlu0 %607
        %v610 = vmul.f32 %v366, %v608
        %612 = vrot.lane.b32.xlu0 %v610, 124
        %v613 = vpop.permute.xlu0 %612
        %v615 = vadd.f32 %v606, %v613
        %617 = vrot.lane.b32.xlu0 %v602, 88
        %v618 = vpop.permute.xlu0 %617
        %621 = vrot.lane.b32.xlu0 %v615, 92
        %v622 = vpop.permute.xlu0 %621
        %v624 = vsel %vm400, %v618, %v622
        %v625 = vpack.c.bf16 %v624, %v624
        %v627 = vsel %vm439, %v589, 0
        %v630 = vsel %vm439, %v625, 0
        %632 = vmatprep.subr.bf16.mxu0 0
        %633 = vmatpush1.bf16.xpose.msra.mxu0 0
        %634 = vmatprep.subr.bf16.mxu0 0
        %635 = vmatpush1.bf16.xpose.msra.mxu0 0
        %636 = vmatprep.subr.bf16.mxu0 0
        %637 = vmatpush1.bf16.xpose.msra.mxu0 0
        %638 = vmatprep.subr.bf16.mxu0 0
        %639 = vmatpush1.bf16.xpose.msra.mxu0 0
        %640 = vmatprep.subr.bf16.mxu0 0
        %641 = vmatpush1.bf16.xpose.msra.mxu0 0
        %642 = vmatprep.subr.bf16.mxu0 0
        %643 = vmatpush1.bf16.xpose.msra.mxu0 0
        %644 = vmatprep.subr.bf16.mxu0 0
        %645 = vmatpush1.bf16.xpose.msra.mxu0 0
        %646 = vmatprep.subr.bf16.mxu0 0
        %647 = vmatpush1.bf16.xpose.msra.mxu0 %v630
        %648 = vmatprep.subr.bf16.mxu0 0
        %649 = vmatpush2.bf16.xpose.msra.mxu0 0
        %650 = vmatprep.subr.bf16.mxu0 0
        %651 = vmatpush2.bf16.xpose.msra.mxu0 0
        %652 = vmatprep.subr.bf16.mxu0 0
        %653 = vmatpush2.bf16.xpose.msra.mxu0 0
        %654 = vmatprep.subr.bf16.mxu0 0
        %655 = vmatpush2.bf16.xpose.msra.mxu0 0
        %656 = vmatprep.subr.bf16.mxu0 0
        %657 = vmatpush2.bf16.xpose.msra.mxu0 0
        %658 = vmatprep.subr.bf16.mxu0 0
        %659 = vmatpush2.bf16.xpose.msra.mxu0 0
        %660 = vmatprep.subr.bf16.mxu0 0
        %661 = vmatpush2.bf16.xpose.msra.mxu0 0
        %662 = vmatprep.subr.bf16.mxu0 0
        %663 = vmatpush2.bf16.xpose.msra.mxu0 0
        %664 = vmatprep.mubr.bf16.mxu0 0
        %665 = vmatmul.mubr.bf16.gmra.mxu0 %v627
        %v666 = vpop.f32.mrf.mxu0
        %v667 = vadd.f32 0.0, %v666
        %v668 = vpop.f32.mrf.mxu0
        %v669 = vpop.f32.mrf.mxu0
        %v670 = vpop.f32.mrf.mxu0
        %671 = vdwg.mxu0
        %v672 = vsel %vm439, %v667, -inf
        %673 = vmax.xlane.f32.xlu0 %v672
        %v674 = vpop.xlane.xlu0 %673
        %v675 = vsub.f32 -inf, %v674
        %v676 = vmul.f32 %v675, 1.442695
        %v677 = vpow.pop %v676
        %v678 = vsub.f32 %v667, %v674
        %v679 = vmul.f32 %v678, 1.442695
        %v680 = vpow.pop %v679
        %v681 = vmul.f32 %v677, 0.0
        %v682 = vsel %vm439, %v680, 0.0
        %683 = vadd.xlane.f32.xlu0 %v682
        %v684 = vpop.xlane.xlu0 %683
        %v685 = vadd.f32 %v681, %v684
        %v686 = vpack.c.bf16 %v680, %v680
        %687 = vrot.lane.b32.xlu0 %v373, 56
        %v688 = vpop.permute.xlu0 %687
        %v690 = vsel %vm439, %v686, 0
        %v693 = vsel %vm507, %v688, 0
        %695 = vmatprep.subr.bf16.mxu0 0
        %696 = vmatpush1.bf16.msra.mxu0 0
        %697 = vmatprep.subr.bf16.mxu0 0
        %698 = vmatpush1.bf16.msra.mxu0 0
        %699 = vmatprep.subr.bf16.mxu0 0
        %700 = vmatpush1.bf16.msra.mxu0 0
        %701 = vmatprep.subr.bf16.mxu0 0
        %702 = vmatpush1.bf16.msra.mxu0 0
        %703 = vmatprep.subr.bf16.mxu0 0
        %704 = vmatpush1.bf16.msra.mxu0 0
        %705 = vmatprep.subr.bf16.mxu0 0
        %706 = vmatpush1.bf16.msra.mxu0 0
        %707 = vmatprep.subr.bf16.mxu0 0
        %708 = vmatpush1.bf16.msra.mxu0 0
        %709 = vmatprep.subr.bf16.mxu0 0
        %710 = vmatpush1.bf16.msra.mxu0 %v693
        %711 = vmatprep.subr.bf16.mxu0 0
        %712 = vmatpush2.bf16.msra.mxu0 0
        %713 = vmatprep.subr.bf16.mxu0 0
        %714 = vmatpush2.bf16.msra.mxu0 0
        %715 = vmatprep.subr.bf16.mxu0 0
        %716 = vmatpush2.bf16.msra.mxu0 0
        %717 = vmatprep.subr.bf16.mxu0 0
        %718 = vmatpush2.bf16.msra.mxu0 0
        %719 = vmatprep.subr.bf16.mxu0 0
        %720 = vmatpush2.bf16.msra.mxu0 0
        %721 = vmatprep.subr.bf16.mxu0 0
        %722 = vmatpush2.bf16.msra.mxu0 0
        %723 = vmatprep.subr.bf16.mxu0 0
        %724 = vmatpush2.bf16.msra.mxu0 0
        %725 = vmatprep.subr.bf16.mxu0 0
        %726 = vmatpush2.bf16.msra.mxu0 0
        %727 = vmatprep.mubr.bf16.mxu0 0
        %728 = vmatmul.mubr.bf16.gmra.mxu0 %v690
        %v729 = vpop.f32.mrf.mxu0
        %v730 = vadd.f32 0.0, %v729
        %v731 = vpop.f32.mrf.mxu0
        %v732 = vpop.f32.mrf.mxu0
        %v733 = vpop.f32.mrf.mxu0
        %734 = vdwg.mxu0
        %v735 = vadd.f32 %v681, %v730
        %v736 = vrcp.pop %v685
        %v737 = vmul.f32 %v735, %v736
        %738 = vrot.lane.b32.xlu0 %v371, 16
        %v739 = vpop.permute.xlu0 %738
        %v741 = vmul.f32 %v366, %v739
        %742 = vrot.lane.b32.xlu0 %v372, 20
        %v743 = vpop.permute.xlu0 %742
        %v745 = vmul.f32 %v366, %v743
        %747 = vrot.lane.b32.xlu0 %v745, 124
        %v748 = vpop.permute.xlu0 %747
        %v750 = vsub.f32 %v741, %v748
        %751 = vrot.lane.b32.xlu0 %v372, 16
        %v752 = vpop.permute.xlu0 %751
        %v754 = vmul.f32 %v366, %v752
        %755 = vrot.lane.b32.xlu0 %v371, 20
        %v756 = vpop.permute.xlu0 %755
        %v758 = vmul.f32 %v366, %v756
        %760 = vrot.lane.b32.xlu0 %v758, 124
        %v761 = vpop.permute.xlu0 %760
        %v763 = vadd.f32 %v754, %v761
        %765 = vrot.lane.b32.xlu0 %v750, 112
        %v766 = vpop.permute.xlu0 %765
        %769 = vrot.lane.b32.xlu0 %v763, 116
        %v770 = vpop.permute.xlu0 %769
        %v772 = vsel %vm400, %v766, %v770
        %v773 = vpack.c.bf16 %v772, %v772
        %774 = vrot.lane.b32.xlu0 %v371, 48
        %v775 = vpop.permute.xlu0 %774
        %v777 = vmul.f32 %v366, %v775
        %778 = vrot.lane.b32.xlu0 %v372, 52
        %v779 = vpop.permute.xlu0 %778
        %v781 = vmul.f32 %v366, %v779
        %783 = vrot.lane.b32.xlu0 %v781, 124
        %v784 = vpop.permute.xlu0 %783
        %v786 = vsub.f32 %v777, %v784
        %787 = vrot.lane.b32.xlu0 %v372, 48
        %v788 = vpop.permute.xlu0 %787
        %v790 = vmul.f32 %v366, %v788
        %791 = vrot.lane.b32.xlu0 %v371, 52
        %v792 = vpop.permute.xlu0 %791
        %v794 = vmul.f32 %v366, %v792
        %796 = vrot.lane.b32.xlu0 %v794, 124
        %v797 = vpop.permute.xlu0 %796
        %v799 = vadd.f32 %v790, %v797
        %801 = vrot.lane.b32.xlu0 %v786, 80
        %v802 = vpop.permute.xlu0 %801
        %805 = vrot.lane.b32.xlu0 %v799, 84
        %v806 = vpop.permute.xlu0 %805
        %v808 = vsel %vm400, %v802, %v806
        %v809 = vpack.c.bf16 %v808, %v808
        %v811 = vsel %vm439, %v773, 0
        %v814 = vsel %vm439, %v809, 0
        %816 = vmatprep.subr.bf16.mxu0 0
        %817 = vmatpush1.bf16.xpose.msra.mxu0 0
        %818 = vmatprep.subr.bf16.mxu0 0
        %819 = vmatpush1.bf16.xpose.msra.mxu0 0
        %820 = vmatprep.subr.bf16.mxu0 0
        %821 = vmatpush1.bf16.xpose.msra.mxu0 0
        %822 = vmatprep.subr.bf16.mxu0 0
        %823 = vmatpush1.bf16.xpose.msra.mxu0 0
        %824 = vmatprep.subr.bf16.mxu0 0
        %825 = vmatpush1.bf16.xpose.msra.mxu0 0
        %826 = vmatprep.subr.bf16.mxu0 0
        %827 = vmatpush1.bf16.xpose.msra.mxu0 0
        %828 = vmatprep.subr.bf16.mxu0 0
        %829 = vmatpush1.bf16.xpose.msra.mxu0 0
        %830 = vmatprep.subr.bf16.mxu0 0
        %831 = vmatpush1.bf16.xpose.msra.mxu0 %v814
        %832 = vmatprep.subr.bf16.mxu0 0
        %833 = vmatpush2.bf16.xpose.msra.mxu0 0
        %834 = vmatprep.subr.bf16.mxu0 0
        %835 = vmatpush2.bf16.xpose.msra.mxu0 0
        %836 = vmatprep.subr.bf16.mxu0 0
        %837 = vmatpush2.bf16.xpose.msra.mxu0 0
        %838 = vmatprep.subr.bf16.mxu0 0
        %839 = vmatpush2.bf16.xpose.msra.mxu0 0
        %840 = vmatprep.subr.bf16.mxu0 0
        %841 = vmatpush2.bf16.xpose.msra.mxu0 0
        %842 = vmatprep.subr.bf16.mxu0 0
        %843 = vmatpush2.bf16.xpose.msra.mxu0 0
        %844 = vmatprep.subr.bf16.mxu0 0
        %845 = vmatpush2.bf16.xpose.msra.mxu0 0
        %846 = vmatprep.subr.bf16.mxu0 0
        %847 = vmatpush2.bf16.xpose.msra.mxu0 0
        %848 = vmatprep.mubr.bf16.mxu0 0
        %849 = vmatmul.mubr.bf16.gmra.mxu0 %v811
        %v850 = vpop.f32.mrf.mxu0
        %v851 = vadd.f32 0.0, %v850
        %v852 = vpop.f32.mrf.mxu0
        %v853 = vpop.f32.mrf.mxu0
        %v854 = vpop.f32.mrf.mxu0
        %855 = vdwg.mxu0
        %v856 = vsel %vm439, %v851, -inf
        %857 = vmax.xlane.f32.xlu0 %v856
        %v858 = vpop.xlane.xlu0 %857
        %v859 = vsub.f32 -inf, %v858
        %v860 = vmul.f32 %v859, 1.442695
        %v861 = vpow.pop %v860
        %v862 = vsub.f32 %v851, %v858
        %v863 = vmul.f32 %v862, 1.442695
        %v864 = vpow.pop %v863
        %v865 = vmul.f32 %v861, 0.0
        %v866 = vsel %vm439, %v864, 0.0
        %867 = vadd.xlane.f32.xlu0 %v866
        %v868 = vpop.xlane.xlu0 %867
        %v869 = vadd.f32 %v865, %v868
        %v870 = vpack.c.bf16 %v864, %v864
        %871 = vrot.lane.b32.xlu0 %v373, 48
        %v872 = vpop.permute.xlu0 %871
        %v874 = vsel %vm439, %v870, 0
        %v877 = vsel %vm507, %v872, 0
        %879 = vmatprep.subr.bf16.mxu0 0
        %880 = vmatpush1.bf16.msra.mxu0 0
        %881 = vmatprep.subr.bf16.mxu0 0
        %882 = vmatpush1.bf16.msra.mxu0 0
        %883 = vmatprep.subr.bf16.mxu0 0
        %884 = vmatpush1.bf16.msra.mxu0 0
        %885 = vmatprep.subr.bf16.mxu0 0
        %886 = vmatpush1.bf16.msra.mxu0 0
        %887 = vmatprep.subr.bf16.mxu0 0
        %888 = vmatpush1.bf16.msra.mxu0 0
        %889 = vmatprep.subr.bf16.mxu0 0
        %890 = vmatpush1.bf16.msra.mxu0 0
        %891 = vmatprep.subr.bf16.mxu0 0
        %892 = vmatpush1.bf16.msra.mxu0 0
        %893 = vmatprep.subr.bf16.mxu0 0
        %894 = vmatpush1.bf16.msra.mxu0 %v877
        %895 = vmatprep.subr.bf16.mxu0 0
        %896 = vmatpush2.bf16.msra.mxu0 0
        %897 = vmatprep.subr.bf16.mxu0 0
        %898 = vmatpush2.bf16.msra.mxu0 0
        %899 = vmatprep.subr.bf16.mxu0 0
        %900 = vmatpush2.bf16.msra.mxu0 0
        %901 = vmatprep.subr.bf16.mxu0 0
        %902 = vmatpush2.bf16.msra.mxu0 0
        %903 = vmatprep.subr.bf16.mxu0 0
        %904 = vmatpush2.bf16.msra.mxu0 0
        %905 = vmatprep.subr.bf16.mxu0 0
        %906 = vmatpush2.bf16.msra.mxu0 0
        %907 = vmatprep.subr.bf16.mxu0 0
        %908 = vmatpush2.bf16.msra.mxu0 0
        %909 = vmatprep.subr.bf16.mxu0 0
        %910 = vmatpush2.bf16.msra.mxu0 0
        %911 = vmatprep.mubr.bf16.mxu0 0
        %912 = vmatmul.mubr.bf16.gmra.mxu0 %v874
        %v913 = vpop.f32.mrf.mxu0
        %v914 = vadd.f32 0.0, %v913
        %v915 = vpop.f32.mrf.mxu0
        %v916 = vpop.f32.mrf.mxu0
        %v917 = vpop.f32.mrf.mxu0
        %918 = vdwg.mxu0
        %v919 = vadd.f32 %v865, %v914
        %v920 = vrcp.pop %v869
        %v921 = vmul.f32 %v919, %v920
        %922 = vrot.lane.b32.xlu0 %v371, 24
        %v923 = vpop.permute.xlu0 %922
        %v925 = vmul.f32 %v366, %v923
        %926 = vrot.lane.b32.xlu0 %v372, 28
        %v927 = vpop.permute.xlu0 %926
        %v929 = vmul.f32 %v366, %v927
        %931 = vrot.lane.b32.xlu0 %v929, 124
        %v932 = vpop.permute.xlu0 %931
        %v934 = vsub.f32 %v925, %v932
        %935 = vrot.lane.b32.xlu0 %v372, 24
        %v936 = vpop.permute.xlu0 %935
        %v938 = vmul.f32 %v366, %v936
        %939 = vrot.lane.b32.xlu0 %v371, 28
        %v940 = vpop.permute.xlu0 %939
        %v942 = vmul.f32 %v366, %v940
        %944 = vrot.lane.b32.xlu0 %v942, 124
        %v945 = vpop.permute.xlu0 %944
        %v947 = vadd.f32 %v938, %v945
        %949 = vrot.lane.b32.xlu0 %v934, 104
        %v950 = vpop.permute.xlu0 %949
        %953 = vrot.lane.b32.xlu0 %v947, 108
        %v954 = vpop.permute.xlu0 %953
        %v956 = vsel %vm400, %v950, %v954
        %v957 = vpack.c.bf16 %v956, %v956
        %958 = vrot.lane.b32.xlu0 %v371, 56
        %v959 = vpop.permute.xlu0 %958
        %v961 = vmul.f32 %v366, %v959
        %962 = vrot.lane.b32.xlu0 %v372, 60
        %v963 = vpop.permute.xlu0 %962
        %v965 = vmul.f32 %v366, %v963
        %967 = vrot.lane.b32.xlu0 %v965, 124
        %v968 = vpop.permute.xlu0 %967
        %v970 = vsub.f32 %v961, %v968
        %971 = vrot.lane.b32.xlu0 %v372, 56
        %v972 = vpop.permute.xlu0 %971
        %v974 = vmul.f32 %v366, %v972
        %975 = vrot.lane.b32.xlu0 %v371, 60
        %v976 = vpop.permute.xlu0 %975
        %v978 = vmul.f32 %v366, %v976
        %980 = vrot.lane.b32.xlu0 %v978, 124
        %v981 = vpop.permute.xlu0 %980
        %v983 = vadd.f32 %v974, %v981
        %985 = vrot.lane.b32.xlu0 %v970, 72
        %v986 = vpop.permute.xlu0 %985
        %989 = vrot.lane.b32.xlu0 %v983, 76
        %v990 = vpop.permute.xlu0 %989
        %v992 = vsel %vm400, %v986, %v990
        %v993 = vpack.c.bf16 %v992, %v992
        %v995 = vsel %vm439, %v957, 0
        %v998 = vsel %vm439, %v993, 0
        %1000 = vmatprep.subr.bf16.mxu0 0
        %1001 = vmatpush1.bf16.xpose.msra.mxu0 0
        %1002 = vmatprep.subr.bf16.mxu0 0
        %1003 = vmatpush1.bf16.xpose.msra.mxu0 0
        %1004 = vmatprep.subr.bf16.mxu0 0
        %1005 = vmatpush1.bf16.xpose.msra.mxu0 0
        %1006 = vmatprep.subr.bf16.mxu0 0
        %1007 = vmatpush1.bf16.xpose.msra.mxu0 0
        %1008 = vmatprep.subr.bf16.mxu0 0
        %1009 = vmatpush1.bf16.xpose.msra.mxu0 0
        %1010 = vmatprep.subr.bf16.mxu0 0
        %1011 = vmatpush1.bf16.xpose.msra.mxu0 0
        %1012 = vmatprep.subr.bf16.mxu0 0
        %1013 = vmatpush1.bf16.xpose.msra.mxu0 0
        %1014 = vmatprep.subr.bf16.mxu0 0
        %1015 = vmatpush1.bf16.xpose.msra.mxu0 %v998
        %1016 = vmatprep.subr.bf16.mxu0 0
        %1017 = vmatpush2.bf16.xpose.msra.mxu0 0
        %1018 = vmatprep.subr.bf16.mxu0 0
        %1019 = vmatpush2.bf16.xpose.msra.mxu0 0
        %1020 = vmatprep.subr.bf16.mxu0 0
        %1021 = vmatpush2.bf16.xpose.msra.mxu0 0
        %1022 = vmatprep.subr.bf16.mxu0 0
        %1023 = vmatpush2.bf16.xpose.msra.mxu0 0
        %1024 = vmatprep.subr.bf16.mxu0 0
        %1025 = vmatpush2.bf16.xpose.msra.mxu0 0
        %1026 = vmatprep.subr.bf16.mxu0 0
        %1027 = vmatpush2.bf16.xpose.msra.mxu0 0
        %1028 = vmatprep.subr.bf16.mxu0 0
        %1029 = vmatpush2.bf16.xpose.msra.mxu0 0
        %1030 = vmatprep.subr.bf16.mxu0 0
        %1031 = vmatpush2.bf16.xpose.msra.mxu0 0
        %1032 = vmatprep.mubr.bf16.mxu0 0
        %1033 = vmatmul.mubr.bf16.gmra.mxu0 %v995
        %v1034 = vpop.f32.mrf.mxu0
        %v1035 = vadd.f32 0.0, %v1034
        %v1036 = vpop.f32.mrf.mxu0
        %v1037 = vpop.f32.mrf.mxu0
        %v1038 = vpop.f32.mrf.mxu0
        %1039 = vdwg.mxu0
        %v1040 = vsel %vm439, %v1035, -inf
        %1041 = vmax.xlane.f32.xlu0 %v1040
        %v1042 = vpop.xlane.xlu0 %1041
        %v1043 = vsub.f32 -inf, %v1042
        %v1044 = vmul.f32 %v1043, 1.442695
        %v1045 = vpow.pop %v1044
        %v1046 = vsub.f32 %v1035, %v1042
        %v1047 = vmul.f32 %v1046, 1.442695
        %v1048 = vpow.pop %v1047
        %v1049 = vmul.f32 %v1045, 0.0
        %v1050 = vsel %vm439, %v1048, 0.0
        %1051 = vadd.xlane.f32.xlu0 %v1050
        %v1052 = vpop.xlane.xlu0 %1051
        %v1053 = vadd.f32 %v1049, %v1052
        %v1054 = vpack.c.bf16 %v1048, %v1048
        %1055 = vrot.lane.b32.xlu0 %v373, 40
        %v1056 = vpop.permute.xlu0 %1055
        %v1058 = vsel %vm439, %v1054, 0
        %v1061 = vsel %vm507, %v1056, 0
        %1063 = vmatprep.subr.bf16.mxu0 0
        %1064 = vmatpush1.bf16.msra.mxu0 0
        %1065 = vmatprep.subr.bf16.mxu0 0
        %1066 = vmatpush1.bf16.msra.mxu0 0
        %1067 = vmatprep.subr.bf16.mxu0 0
        %1068 = vmatpush1.bf16.msra.mxu0 0
        %1069 = vmatprep.subr.bf16.mxu0 0
        %1070 = vmatpush1.bf16.msra.mxu0 0
        %1071 = vmatprep.subr.bf16.mxu0 0
        %1072 = vmatpush1.bf16.msra.mxu0 0
        %1073 = vmatprep.subr.bf16.mxu0 0
        %1074 = vmatpush1.bf16.msra.mxu0 0
        %1075 = vmatprep.subr.bf16.mxu0 0
        %1076 = vmatpush1.bf16.msra.mxu0 0
        %1077 = vmatprep.subr.bf16.mxu0 0
        %1078 = vmatpush1.bf16.msra.mxu0 %v1061
        %1079 = vmatprep.subr.bf16.mxu0 0
        %1080 = vmatpush2.bf16.msra.mxu0 0
        %1081 = vmatprep.subr.bf16.mxu0 0
        %1082 = vmatpush2.bf16.msra.mxu0 0
        %1083 = vmatprep.subr.bf16.mxu0 0
        %1084 = vmatpush2.bf16.msra.mxu0 0
        %1085 = vmatprep.subr.bf16.mxu0 0
        %1086 = vmatpush2.bf16.msra.mxu0 0
        %1087 = vmatprep.subr.bf16.mxu0 0
        %1088 = vmatpush2.bf16.msra.mxu0 0
        %1089 = vmatprep.subr.bf16.mxu0 0
        %1090 = vmatpush2.bf16.msra.mxu0 0
        %1091 = vmatprep.subr.bf16.mxu0 0
        %1092 = vmatpush2.bf16.msra.mxu0 0
        %1093 = vmatprep.subr.bf16.mxu0 0
        %1094 = vmatpush2.bf16.msra.mxu0 0
        %1095 = vmatprep.mubr.bf16.mxu0 0
        %1096 = vmatmul.mubr.bf16.gmra.mxu0 %v1058
        %v1097 = vpop.f32.mrf.mxu0
        %v1098 = vadd.f32 0.0, %v1097
        %v1099 = vpop.f32.mrf.mxu0
        %v1100 = vpop.f32.mrf.mxu0
        %v1101 = vpop.f32.mrf.mxu0
        %1102 = vdwg.mxu0
        %v1103 = vadd.f32 %v1049, %v1098
        %v1104 = vrcp.pop %v1053
        %v1105 = vmul.f32 %v1103, %v1104
        %1107 = vrot.lane.b32.xlu0 %v737, 8
        %v1108 = vpop.permute.xlu0 %1107
        %1111 = vrot.lane.b32.xlu0 %v921, 16
        %v1112 = vpop.permute.xlu0 %1111
        %1115 = vrot.lane.b32.xlu0 %v1105, 24
        %v1116 = vpop.permute.xlu0 %1115
        %v1118 = vsel %vm439, %v553, %v1108
        %vm1119 = vcmask 130048
        %v1120 = vsel %vm1119, %v1118, %v1112
        %vm1121 = vcmask 195584
        %v1122 = vsel %vm1121, %v1120, %v1116
        %v1123 = vpack.c.bf16 %v1122, %v1122
        %v1124 = vld [vmem:[#allocation2] sm:$0xf]
        %v1125 = vld [vmem:[#allocation2 + $0x4] sm:$0xf]
        %v1126 = vld [vmem:[#allocation2 + $0x8] sm:$0xf]
        %v1127 = vld [vmem:[#allocation2 + $0xc] sm:$0xf]
        %v1128 = vld [vmem:[#allocation5] sm:$0x1]
        %v1130 = vlaneseq
        %v1131 = vshrl.u32 %v1130, 7
        %v1132 = vsub.s32 0, %v1131
        %v1133 = vrot.slane %v1128, %v1132
        %v1139 = vunpack.c.l.b16 %v1124
        %v1140 = vunpack.c.l.b16 %v1125
        %v1141 = vunpack.c.l.b16 %v1126
        %v1142 = vunpack.c.l.b16 %v1127
        %v1143 = vpack.c.b16 %v1140, %v1139
        %v1144 = vpack.c.b16 %v1142, %v1141
        %v1148 = vsel %vm327, %v1123, 0
        %1150 = vmatprep.subr.bf16.mxu0 0
        %1151 = vmatpush1.bf16.msra.mxu0 0
        %1152 = vmatprep.subr.bf16.mxu0 0
        %1153 = vmatpush1.bf16.msra.mxu0 0
        %1154 = vmatprep.subr.bf16.mxu0 0
        %1155 = vmatpush1.bf16.msra.mxu0 0
        %1156 = vmatprep.subr.bf16.mxu0 0
        %1157 = vmatpush1.bf16.msra.mxu0 0
        %1158 = vmatprep.subr.bf16.mxu0 0
        %1159 = vmatpush1.bf16.msra.mxu0 0
        %1160 = vmatprep.subr.bf16.mxu0 0
        %1161 = vmatpush1.bf16.msra.mxu0 0
        %1162 = vmatprep.subr.bf16.mxu0 0
        %1163 = vmatpush1.bf16.msra.mxu0 %v1144
        %1164 = vmatprep.subr.bf16.mxu0 0
        %1165 = vmatpush1.bf16.msra.mxu0 %v1143
        %1166 = vmatprep.subr.bf16.mxu0 0
        %1167 = vmatpush2.bf16.msra.mxu0 0
        %1168 = vmatprep.subr.bf16.mxu0 0
        %1169 = vmatpush2.bf16.msra.mxu0 0
        %1170 = vmatprep.subr.bf16.mxu0 0
        %1171 = vmatpush2.bf16.msra.mxu0 0
        %1172 = vmatprep.subr.bf16.mxu0 0
        %1173 = vmatpush2.bf16.msra.mxu0 0
        %1174 = vmatprep.subr.bf16.mxu0 0
        %1175 = vmatpush2.bf16.msra.mxu0 0
        %1176 = vmatprep.subr.bf16.mxu0 0
        %1177 = vmatpush2.bf16.msra.mxu0 0
        %1178 = vmatprep.subr.bf16.mxu0 0
        %1179 = vmatpush2.bf16.msra.mxu0 0
        %1180 = vmatprep.subr.bf16.mxu0 0
        %1181 = vmatpush2.bf16.msra.mxu0 0
        %1182 = vmatprep.mubr.bf16.mxu0 0
        %1183 = vmatmul.mubr.bf16.gmra.mxu0 %v1148
        %v1184 = vpop.f32.mrf.mxu0
        %v1185 = vadd.f32 %v1133, %v1184
        %v1186 = vpop.f32.mrf.mxu0
        %v1187 = vpop.f32.mrf.mxu0
        %v1188 = vpop.f32.mrf.mxu0
        %1189 = vdwg.mxu0
        %1190 = vst.msk [vmem:[%s297] sm:$0xff] %vm327, %v1185
        %s1191 = sand.u32 %s183, 1
        %s1192 = scalar_lea.sflag [#allocation4], %s1191
        %s1193 = sand.u32 %s183, 1
        %s1194 = smul.addr %s1193, 8
        %s1195 = scalar_lea.vmem [#allocation7], %s1194
        // Predicated region
        $region57: #{tpu_custom_call.1} parent=47 // pred_check
          %p1196 = pneg %p193
        $region58: #{tpu_custom_call.1} parent=47 // pred_check_branch
          %1198 = sbr.rel (%p1196) target = $region60
        $region59: #{tpu_custom_call.1} parent=47 // pred_region
          %s1200 = ssub.s32 128, 128
          %1201 = vsyncadd %s1192, %s1200
          %s1202 = smul.addr %s23, 128
          %s1203 = scalar_lea.hbm %s7, %s1202
          %s1205 = sshll.u32 %s1195, 4
          %s1206 = int_to_ptr.vmem [resolvable:$true] %s1205
          %1208 = dma.vmem_to_hbm [thread:$0]  %s1206, 128, %s1203, %s1192
        $region60: #{tpu_custom_call.1} parent=47 // pred_fallthru
          _
      $region48: #{tpu_custom_call.1} parent=5 // pred_fallthru
        _
      %p1209 = scmp.le.s32.totalorder 2, %s18
      // Predicated region
      $region61: #{tpu_custom_call.1} parent=5 // pred_check
        %p1210 = pneg %p1209
      $region62: #{tpu_custom_call.1} parent=5 // pred_check_branch
        %1212 = sbr.rel (%p1210) target = $region64
      $region63: #{tpu_custom_call.1} parent=5 // pred_region
        %s1213 = ssub.s32 %s18, 2
        // Predicated region
        $region65: #{tpu_custom_call.1} parent=63 // pred_check
          %p1214 = pneg %p199
        $region66: #{tpu_custom_call.1} parent=63 // pred_check_branch
          %1216 = sbr.rel (%p1214) target = $region68
        $region67: #{tpu_custom_call.1} parent=63 // pred_region
          %s1217 = sand.u32 %s184, 1
          %s1218 = scalar_lea.sflag [#allocation4], %s1217
          %s1219 = sand.u32 %s184, 1
          %s1220 = smul.addr %s1219, 8
          %s1221 = scalar_lea.vmem [#allocation7], %s1220
          %1222 = dma.done %s1218, 128
        $region68: #{tpu_custom_call.1} parent=63 // pred_fallthru
          _
      $region64: #{tpu_custom_call.1} parent=5 // pred_fallthru
        _
    $region6: #{tpu_custom_call.1} parent=1 // loop_footer
      %s22 = sadd.s32 1, %s18
    $region7: #{tpu_custom_call.1} parent=1 // loop_footer_branch
      %17 = sbr.rel target = $region3
    $region8: #{tpu_custom_call.1} parent=1 // loop_exit
      _
    %1223 = vsyncpa [#allocation3], 1
    %s1224 = scalar_lea.sflag [#allocation3], 1
    %1225 = vsyncpa %s1224, 1
    %1226 = vsyncpa [#allocation6], 1
    %1227 = vsyncpa [#allocation4], 1
    %s1228 = scalar_lea.sflag [#allocation4], 1
    %1229 = vsyncpa %s1228, 1

</llo_original>
